<compile_context>
chip_gen: v5e
topology: v5e:2x2
jax: 0.10.0
libtpu: 0.0.40
codegen_flags: <defaults>
</compile_context>

<pallas_src>
import functools
import math

import jax
import jax.numpy as jnp
from jax import lax
from jax.experimental import pallas as pl
from jax.experimental.pallas import tpu as pltpu

EPS = 1e-6


# ------------------------------ in-kernel helpers -----------------------------
def _layernorm(x, gamma, beta, eps=EPS):
    # torch: a_2 * (x - mean) / (std + eps) + b_2, std unbiased (N-1). f32 math.
    mean = jnp.mean(x, axis=-1, keepdims=True)
    d = x - mean
    var = jnp.sum(d * d, axis=-1, keepdims=True) * (1.0 / (x.shape[-1] - 1))
    return gamma * d / (jnp.sqrt(var) + eps) + beta


def _mha(q_in, kv_in, bias, ctx_ref, n_heads, wq, bq, wk, bk, wv, bv, wo, bo):
    """Multi-head attention. q_in (tq,D), kv_in (Tk,D), bias (tq,Tk) all f32.

    Weights are bf16 (cast at the wrapper); accumulation / softmax math is f32.
    Per-head context is written into the (tq, D) VMEM scratch `ctx_ref` so the
    output projection is a single full-K matmul.
    """
    cdt = wq.dtype  # bf16 compute dtype for MXU operands
    q = jnp.dot(q_in.astype(cdt), wq, preferred_element_type=jnp.float32) + bq
    k = jnp.dot(kv_in.astype(cdt), wk, preferred_element_type=jnp.float32) + bk
    v = jnp.dot(kv_in.astype(cdt), wv, preferred_element_type=jnp.float32) + bv

    d_model = q.shape[-1]
    dk = d_model // n_heads
    scale = 1.0 / math.sqrt(dk)
    qc, kc, vc = q.astype(cdt), k.astype(cdt), v.astype(cdt)

    for h in range(n_heads):
        sl = slice(h * dk, (h + 1) * dk)
        # q @ k^T without an explicit transpose: contract both last dims on the MXU.
        s = lax.dot_general(qc[:, sl], kc[:, sl], (((1,), (1,)), ((), ())),
                            preferred_element_type=jnp.float32)
        s = s * scale + bias                      # additive mask bias (f32)
        m = jnp.max(s, axis=-1, keepdims=True)
        e = jnp.exp(s - m)
        p = e * pl.reciprocal(jnp.sum(e, axis=-1, keepdims=True), approx=True)
        ctx_ref[:, sl] = jnp.dot(p.astype(cdt), vc[:, sl],
                                 preferred_element_type=jnp.float32)

    # Heads are already concatenated in the scratch: one (tq,D)@(D,D) matmul.
    return jnp.dot(ctx_ref[...].astype(cdt), wo,
                   preferred_element_type=jnp.float32) + bo


# ----------------------- fused decoder-layer kernel --------------------------
def _decoder_layer_kernel(
    # inputs
    x_ref, mem_ref, tmask_ref, smask_ref,
    g0_ref, bt0_ref, wq0_ref, bq0_ref, wk0_ref, bk0_ref, wv0_ref, bv0_ref,
    wo0_ref, bo0_ref,
    g1_ref, bt1_ref, wq1_ref, bq1_ref, wk1_ref, bk1_ref, wv1_ref, bv1_ref,
    wo1_ref, bo1_ref,
    g2_ref, bt2_ref, w1_ref, bf1_ref, w2_ref, bf2_ref,
    gf_ref, btf_ref,
    # outputs
    out_ref,
    # scratch
    ctx_ref,
    *, n_heads, tq, final_norm):
    q0 = pl.multiple_of(pl.program_id(1) * tq, tq)
    x_full = x_ref[0]                             # (T, D)  full seq (self-attn K/V)
    x_tile = x_ref[0, pl.ds(q0, tq), :]           # (tq, D) rows owned by this program

    # int8 masks -> additive f32 bias, computed once (not per head).
    tbias = jnp.where(tmask_ref[0].astype(jnp.float32) == 0.0, -1e9, 0.0)  # (tq, T)
    sbias = jnp.where(smask_ref[0].astype(jnp.float32) == 0.0, -1e9, 0.0)  # (tq, S)

    # ---- sublayer 0: x + SelfAttn(LN0(x)); K/V from LN0 of the full sequence.
    ln_kv = _layernorm(x_full, g0_ref[...], bt0_ref[...])
    ln_q = _layernorm(x_tile, g0_ref[...], bt0_ref[...])
    attn = _mha(ln_q, ln_kv, tbias, ctx_ref, n_heads,
                wq0_ref[...], bq0_ref[...], wk0_ref[...], bk0_ref[...],
                wv0_ref[...], bv0_ref[...], wo0_ref[...], bo0_ref[...])
    x1 = x_tile + attn

    # ---- sublayer 1: x + SrcAttn(LN1(x), memory); K/V from raw memory.
    ln1 = _layernorm(x1, g1_ref[...], bt1_ref[...])
    attn = _mha(ln1, mem_ref[0], sbias, ctx_ref, n_heads,
                wq1_ref[...], bq1_ref[...], wk1_ref[...], bk1_ref[...],
                wv1_ref[...], bv1_ref[...], wo1_ref[...], bo1_ref[...])
    x2 = x1 + attn

    # ---- sublayer 2: x + FFN(LN2(x)).
    ln2 = _layernorm(x2, g2_ref[...], bt2_ref[...])
    cdt = w1_ref.dtype
    h = jnp.dot(ln2.astype(cdt), w1_ref[...],
                preferred_element_type=jnp.float32) + bf1_ref[...]
    h = jnp.maximum(h, 0.0)
    y = jnp.dot(h.astype(cdt), w2_ref[...],
                preferred_element_type=jnp.float32) + bf2_ref[...]
    x3 = x2 + y

    if final_norm:  # Decoder's trailing LayerNorm, fused into the last layer.
        x3 = _layernorm(x3, gf_ref[...], btf_ref[...])

    out_ref[0] = x3.astype(out_ref.dtype)


# --------------------------------- wrappers ----------------------------------
def _rep_spec(a):
    zeros = (0,) * a.ndim
    return pl.BlockSpec(a.shape, lambda b, q, _z=zeros: _z)


def _flatten_layer_params(p, final_ln, mm_dtype):
    g0, b0 = p["ln0"]
    g1, b1 = p["ln1"]
    g2, b2 = p["ln2"]
    wq0, bq0, wk0, bk0, wv0, bv0, wo0, bo0 = p["self_attn"]
    wq1, bq1, wk1, bk1, wv1, bv1, wo1, bo1 = p["src_attn"]
    w1, bf1, w2, bf2 = p["ff"]
    gf, bf = final_ln
    cw = lambda w: w.astype(mm_dtype)  # weight matrices -> bf16; biases/LN stay f32
    return (
        g0, b0, cw(wq0), bq0, cw(wk0), bk0, cw(wv0), bv0, cw(wo0), bo0,
        g1, b1, cw(wq1), bq1, cw(wk1), bk1, cw(wv1), bv1, cw(wo1), bo1,
        g2, b2, cw(w1), bf1, cw(w2), bf2,
        gf, bf,
    )


def _decoder_layer(x, memory, tmask, smask, params, final_ln, n_heads, *,
                   tq, mm_dtype, final_norm):
    B, T, D = x.shape
    S = memory.shape[1]
    nq = T // tq
    flat = _flatten_layer_params(params, final_ln, mm_dtype)
    kernel = functools.partial(_decoder_layer_kernel, n_heads=n_heads, tq=tq,
                               final_norm=final_norm)
    in_specs = [
        pl.BlockSpec((1, T, D), lambda b, q: (b, 0, 0)),    # x: full seq (K/V + q-tile)
        pl.BlockSpec((1, S, D), lambda b, q: (b, 0, 0)),    # memory
        pl.BlockSpec((1, tq, T), lambda b, q: (b, q, 0)),   # tgt mask rows (int8)
        pl.BlockSpec((1, tq, S), lambda b, q: (b, q, 0)),   # src mask rows (int8)
    ] + [_rep_spec(a) for a in flat]
    return pl.pallas_call(
        kernel,
        out_shape=jax.ShapeDtypeStruct((B, T, D), x.dtype),
        grid_spec=pltpu.PrefetchScalarGridSpec(
            num_scalar_prefetch=0,
            grid=(B, nq),
            in_specs=in_specs,
            out_specs=pl.BlockSpec((1, tq, D), lambda b, q: (b, q, 0)),
            scratch_shapes=[pltpu.VMEM((tq, D), jnp.float32)],
        ),
        compiler_params=pltpu.CompilerParams(
            dimension_semantics=("parallel", "parallel")),
    )(x, memory, tmask, smask, *flat)


def decoder_forward(x, memory, src_mask, tgt_mask, layer_params, final_ln, n_heads,
                    *, q_block=128, mm_dtype=jnp.bfloat16):
    """Pallas Decoder forward: N fused decoder layers + final LayerNorm."""
    B, T, D = x.shape
    tq = min(q_block, T)
    assert T % tq == 0, "seq length must divide the q tile size"
    # Masks as int8 (nonzero = keep): 4x less mask DMA than f32.
    tmask = (tgt_mask != 0).astype(jnp.int8)
    smask = (src_mask != 0).astype(jnp.int8)
    n_layers = len(layer_params)
    for li, p in enumerate(layer_params):
        x = _decoder_layer(x, memory, tmask, smask, p, final_ln, n_heads,
                           tq=tq, mm_dtype=mm_dtype,
                           final_norm=(li == n_layers - 1))
    return x


# --------------------------- pure-JAX references ------------------------------
def _layernorm_ref(x, gamma, beta, eps=EPS):
    mean = x.mean(-1, keepdims=True)
    var = ((x - mean) ** 2).sum(-1, keepdims=True) / (x.shape[-1] - 1)
    return gamma * (x - mean) / (jnp.sqrt(var) + eps) + beta


def _attn_ref(q_in, kv_in, mask, p, n_heads, mm_dtype):
    wq, bq, wk, bk, wv, bv, wo, bo = p
    B, Tq, D = q_in.shape
    Tk = kv_in.shape[1]
    dk = D // n_heads
    c = lambda a: a.astype(mm_dtype)
    mm = lambda a, b: jnp.dot(c(a), c(b), preferred_element_type=jnp.float32)
    q = (mm(q_in, wq) + bq).reshape(B, Tq, n_heads, dk).transpose(0, 2, 1, 3)
    k = (mm(kv_in, wk) + bk).reshape(B, Tk, n_heads, dk).transpose(0, 2, 1, 3)
    v = (mm(kv_in, wv) + bv).reshape(B, Tk, n_heads, dk).transpose(0, 2, 1, 3)
    scores = jnp.einsum("bhtd,bhsd->bhts", c(q), c(k),
                        preferred_element_type=jnp.float32) / math.sqrt(dk)
    scores = jnp.where(mask[:, None, :, :] == 0, -1e9, scores)
    pa = jax.nn.softmax(scores, axis=-1)
    ctx = jnp.einsum("bhts,bhsd->bhtd", c(pa), c(v),
                     preferred_element_type=jnp.float32)
    ctx = ctx.transpose(0, 2, 1, 3).reshape(B, Tq, D)
    return mm(ctx, wo) + bo


def _decoder_layer_ref(x, m, src_mask, tgt_mask, params, n_heads, mm_dtype):
    c = lambda a: a.astype(mm_dtype)
    mm = lambda a, b: jnp.dot(c(a), c(b), preferred_element_type=jnp.float32)
    ln = _layernorm_ref(x, *params["ln0"])
    x = x + _attn_ref(ln, ln, tgt_mask, params["self_attn"], n_heads, mm_dtype)
    ln = _layernorm_ref(x, *params["ln1"])
    x = x + _attn_ref(ln, m, src_mask, params["src_attn"], n_heads, mm_dtype)
    ln = _layernorm_ref(x, *params["ln2"])
    w1, b1, w2, b2 = params["ff"]
    h = jnp.maximum(mm(ln, w1) + b1, 0.0)
    return x + (mm(h, w2) + b2)


def decoder_ref(x, memory, src_mask, tgt_mask, layer_params, final_ln, n_heads,
                mm_dtype=jnp.float32):
    for p in layer_params:
        x = _decoder_layer_ref(x, memory, src_mask, tgt_mask, p, n_heads, mm_dtype)
    return _layernorm_ref(x, *final_ln)


# ----------------------------------- setup ------------------------------------
def init_layer_params(key, d_model, d_ff):
    def lin(k, din, dout):
        kw, kb = jax.random.split(k)
        w = jax.random.normal(kw, (din, dout), jnp.float32) / math.sqrt(din)
        b = 0.01 * jax.random.normal(kb, (1, dout), jnp.float32)
        return w, b

    ks = jax.random.split(key, 4)
    ln = (jnp.ones((1, d_model), jnp.float32), jnp.zeros((1, d_model), jnp.float32))

    def attn_params(k):
        k0, k1, k2, k3 = jax.random.split(k, 4)
        return (*lin(k0, d_model, d_model), *lin(k1, d_model, d_model),
                *lin(k2, d_model, d_model), *lin(k3, d_model, d_model))

    w1, b1 = lin(ks[2], d_model, d_ff)
    w2, b2 = lin(ks[3], d_ff, d_model)
    return {"ln0": ln, "ln1": ln, "ln2": ln,
            "self_attn": attn_params(ks[0]),
            "src_attn": attn_params(ks[1]),
            "ff": (w1, b1, w2, b2)}


if __name__ == "__main__":
    # tgt seq T, src seq S, d_model D, heads H, ffn DFF, decoder layers NL
    B, T, S, D, H, DFF, NL = 2, 8, 8, 32, 4, 64, 2

    key = jax.random.PRNGKey(0)
    kx, km, kp = jax.random.split(key, 3)
    x = jax.random.normal(kx, (B, T, D), jnp.float32)
    memory = jax.random.normal(km, (B, S, D), jnp.float32)

    # Masks pre-broadcast to [B, Tq, Tk]; nonzero = keep, 0 = masked.
    tgt_mask = jnp.broadcast_to(jnp.tril(jnp.ones((T, T), jnp.float32)), (B, T, T))
    src_mask = jnp.ones((B, T, S), jnp.float32).at[1, :, S - 1].set(0.0)

    layer_keys = jax.random.split(kp, NL)
    layer_params = [init_layer_params(k, D, DFF) for k in layer_keys]
    final_ln = (jnp.ones((1, D), jnp.float32), jnp.zeros((1, D), jnp.float32))

    out = decoder_forward(x, memory, src_mask, tgt_mask, layer_params, final_ln, H)
    out = jax.block_until_ready(out)

    # Reference with identical bf16 operand casts (kernel-logic check) and the
    # pure-f32 reference (mixed-precision sanity check).
    ref_mix = decoder_ref(x, memory, src_mask, tgt_mask, layer_params, final_ln, H,
                          mm_dtype=jnp.bfloat16)
    ref_f32 = decoder_ref(x, memory, src_mask, tgt_mask, layer_params, final_ln, H,
                          mm_dtype=jnp.float32)
    ref_mix, ref_f32 = jax.block_until_ready((ref_mix, ref_f32))

    assert out.shape == (B, T, D) and out.dtype == jnp.float32
    assert bool(jnp.all(jnp.isfinite(out)))
    err_mix = float(jnp.max(jnp.abs(out - ref_mix)))
    err_f32 = float(jnp.max(jnp.abs(out - ref_f32)))
    # Logic check vs a reference with the same bf16 MXU-operand casts.
    assert err_mix < 2.5e-2, f"mismatch vs mixed-precision reference: {err_mix}"
    # Mixed precision (bf16 MXU operands, f32 accum) vs pure-f32 reference.
    assert err_f32 < 1.0e-1, f"mismatch vs f32 reference: {err_f32}"

    print("KERNEL_OK")
</pallas_src>

<mosaic_0001>
module attributes {stable_mosaic.version = 11 : i64} {
  func.func @_decoder_layer_kernel(%arg0: i32, %arg1: i32, %arg2: memref<1x8x32xf32, #tpu.memory_space<vmem>>, %arg3: memref<1x8x32xf32, #tpu.memory_space<vmem>>, %arg4: memref<1x8x8xi8, #tpu.memory_space<vmem>>, %arg5: memref<1x8x8xi8, #tpu.memory_space<vmem>>, %arg6: memref<1x32xf32, #tpu.memory_space<vmem>>, %arg7: memref<1x32xf32, #tpu.memory_space<vmem>>, %arg8: memref<32x32xbf16, #tpu.memory_space<vmem>>, %arg9: memref<1x32xf32, #tpu.memory_space<vmem>>, %arg10: memref<32x32xbf16, #tpu.memory_space<vmem>>, %arg11: memref<1x32xf32, #tpu.memory_space<vmem>>, %arg12: memref<32x32xbf16, #tpu.memory_space<vmem>>, %arg13: memref<1x32xf32, #tpu.memory_space<vmem>>, %arg14: memref<32x32xbf16, #tpu.memory_space<vmem>>, %arg15: memref<1x32xf32, #tpu.memory_space<vmem>>, %arg16: memref<1x32xf32, #tpu.memory_space<vmem>>, %arg17: memref<1x32xf32, #tpu.memory_space<vmem>>, %arg18: memref<32x32xbf16, #tpu.memory_space<vmem>>, %arg19: memref<1x32xf32, #tpu.memory_space<vmem>>, %arg20: memref<32x32xbf16, #tpu.memory_space<vmem>>, %arg21: memref<1x32xf32, #tpu.memory_space<vmem>>, %arg22: memref<32x32xbf16, #tpu.memory_space<vmem>>, %arg23: memref<1x32xf32, #tpu.memory_space<vmem>>, %arg24: memref<32x32xbf16, #tpu.memory_space<vmem>>, %arg25: memref<1x32xf32, #tpu.memory_space<vmem>>, %arg26: memref<1x32xf32, #tpu.memory_space<vmem>>, %arg27: memref<1x32xf32, #tpu.memory_space<vmem>>, %arg28: memref<32x64xbf16, #tpu.memory_space<vmem>>, %arg29: memref<1x64xf32, #tpu.memory_space<vmem>>, %arg30: memref<64x32xbf16, #tpu.memory_space<vmem>>, %arg31: memref<1x32xf32, #tpu.memory_space<vmem>>, %arg32: memref<1x32xf32, #tpu.memory_space<vmem>>, %arg33: memref<1x32xf32, #tpu.memory_space<vmem>>, %arg34: memref<1x8x32xf32, #tpu.memory_space<vmem>>, %arg35: memref<8x32xf32, #tpu.memory_space<vmem>>) attributes {dimension_semantics = [#tpu.dimension_semantics<parallel>, #tpu.dimension_semantics<parallel>], iteration_bounds = array<i64: 2, 1>, scalar_prefetch = 0 : i64, scratch_operands = 1 : i64, tpu.core_type = #tpu.core_type<tc>, window_params = [{transform_indices = @transform_0, window_bounds = array<i64: 1, 8, 32>}, {transform_indices = @transform_1, window_bounds = array<i64: 1, 8, 32>}, {transform_indices = @transform_2, window_bounds = array<i64: 1, 8, 8>}, {transform_indices = @transform_3, window_bounds = array<i64: 1, 8, 8>}, {pipeline_mode = #tpu.pipeline_mode<synchronous>, transform_indices = @transform_4, window_bounds = array<i64: 1, 32>}, {pipeline_mode = #tpu.pipeline_mode<synchronous>, transform_indices = @transform_5, window_bounds = array<i64: 1, 32>}, {pipeline_mode = #tpu.pipeline_mode<synchronous>, transform_indices = @transform_6, window_bounds = array<i64: 32, 32>}, {pipeline_mode = #tpu.pipeline_mode<synchronous>, transform_indices = @transform_7, window_bounds = array<i64: 1, 32>}, {pipeline_mode = #tpu.pipeline_mode<synchronous>, transform_indices = @transform_8, window_bounds = array<i64: 32, 32>}, {pipeline_mode = #tpu.pipeline_mode<synchronous>, transform_indices = @transform_9, window_bounds = array<i64: 1, 32>}, {pipeline_mode = #tpu.pipeline_mode<synchronous>, transform_indices = @transform_10, window_bounds = array<i64: 32, 32>}, {pipeline_mode = #tpu.pipeline_mode<synchronous>, transform_indices = @transform_11, window_bounds = array<i64: 1, 32>}, {pipeline_mode = #tpu.pipeline_mode<synchronous>, transform_indices = @transform_12, window_bounds = array<i64: 32, 32>}, {pipeline_mode = #tpu.pipeline_mode<synchronous>, transform_indices = @transform_13, window_bounds = array<i64: 1, 32>}, {pipeline_mode = #tpu.pipeline_mode<synchronous>, transform_indices = @transform_14, window_bounds = array<i64: 1, 32>}, {pipeline_mode = #tpu.pipeline_mode<synchronous>, transform_indices = @transform_15, window_bounds = array<i64: 1, 32>}, {pipeline_mode = #tpu.pipeline_mode<synchronous>, transform_indices = @transform_16, window_bounds = array<i64: 32, 32>}, {pipeline_mode = #tpu.pipeline_mode<synchronous>, transform_indices = @transform_17, window_bounds = array<i64: 1, 32>}, {pipeline_mode = #tpu.pipeline_mode<synchronous>, transform_indices = @transform_18, window_bounds = array<i64: 32, 32>}, {pipeline_mode = #tpu.pipeline_mode<synchronous>, transform_indices = @transform_19, window_bounds = array<i64: 1, 32>}, {pipeline_mode = #tpu.pipeline_mode<synchronous>, transform_indices = @transform_20, window_bounds = array<i64: 32, 32>}, {pipeline_mode = #tpu.pipeline_mode<synchronous>, transform_indices = @transform_21, window_bounds = array<i64: 1, 32>}, {pipeline_mode = #tpu.pipeline_mode<synchronous>, transform_indices = @transform_22, window_bounds = array<i64: 32, 32>}, {pipeline_mode = #tpu.pipeline_mode<synchronous>, transform_indices = @transform_23, window_bounds = array<i64: 1, 32>}, {pipeline_mode = #tpu.pipeline_mode<synchronous>, transform_indices = @transform_24, window_bounds = array<i64: 1, 32>}, {pipeline_mode = #tpu.pipeline_mode<synchronous>, transform_indices = @transform_25, window_bounds = array<i64: 1, 32>}, {pipeline_mode = #tpu.pipeline_mode<synchronous>, transform_indices = @transform_26, window_bounds = array<i64: 32, 64>}, {pipeline_mode = #tpu.pipeline_mode<synchronous>, transform_indices = @transform_27, window_bounds = array<i64: 1, 64>}, {pipeline_mode = #tpu.pipeline_mode<synchronous>, transform_indices = @transform_28, window_bounds = array<i64: 64, 32>}, {pipeline_mode = #tpu.pipeline_mode<synchronous>, transform_indices = @transform_29, window_bounds = array<i64: 1, 32>}, {pipeline_mode = #tpu.pipeline_mode<synchronous>, transform_indices = @transform_30, window_bounds = array<i64: 1, 32>}, {pipeline_mode = #tpu.pipeline_mode<synchronous>, transform_indices = @transform_31, window_bounds = array<i64: 1, 32>}, {transform_indices = @transform_32, window_bounds = array<i64: 1, 8, 32>}]} {
    %c8_i32 = arith.constant 8 : i32
    %0 = arith.muli %arg1, %c8_i32 : i32
    %1 = tpu.assume_multiple %0, 8 : i32
    %c0 = arith.constant 0 : index
    %c0_0 = arith.constant 0 : index
    %c0_1 = arith.constant 0 : index
    %2 = vector.load %arg2[%c0, %c0_0, %c0_1] : memref<1x8x32xf32, #tpu.memory_space<vmem>>, vector<1x8x32xf32>
    %3 = vector.shape_cast %2 : vector<1x8x32xf32> to vector<8x32xf32>
    %c0_2 = arith.constant 0 : index
    %4 = arith.index_cast %1 : i32 to index
    %c0_3 = arith.constant 0 : index
    %5 = vector.load %arg2[%c0_2, %4, %c0_3] : memref<1x8x32xf32, #tpu.memory_space<vmem>>, vector<1x8x32xf32>
    %6 = vector.shape_cast %5 : vector<1x8x32xf32> to vector<8x32xf32>
    %c0_4 = arith.constant 0 : index
    %c0_5 = arith.constant 0 : index
    %c0_6 = arith.constant 0 : index
    %7 = vector.load %arg4[%c0_4, %c0_5, %c0_6] : memref<1x8x8xi8, #tpu.memory_space<vmem>>, vector<1x8x8xi8>
    %8 = vector.shape_cast %7 : vector<1x8x8xi8> to vector<8x8xi8>
    %9 = arith.sitofp %8 : vector<8x8xi8> to vector<8x8xf32>
    %cst = arith.constant 0.000000e+00 : f32
    %10 = vector.broadcast %cst : f32 to vector<8x8xf32>
    %11 = arith.cmpf oeq, %9, %10 : vector<8x8xf32>
    %cst_7 = arith.constant -1.000000e+09 : f32
    %cst_8 = arith.constant 0.000000e+00 : f32
    %12 = vector.broadcast %cst_7 : f32 to vector<8x8xf32>
    %13 = vector.broadcast %cst_8 : f32 to vector<8x8xf32>
    %14 = arith.select %11, %12, %13 : vector<8x8xi1>, vector<8x8xf32>
    %c0_9 = arith.constant 0 : index
    %c0_10 = arith.constant 0 : index
    %c0_11 = arith.constant 0 : index
    %15 = vector.load %arg5[%c0_9, %c0_10, %c0_11] : memref<1x8x8xi8, #tpu.memory_space<vmem>>, vector<1x8x8xi8>
    %16 = vector.shape_cast %15 : vector<1x8x8xi8> to vector<8x8xi8>
    %17 = arith.sitofp %16 : vector<8x8xi8> to vector<8x8xf32>
    %cst_12 = arith.constant 0.000000e+00 : f32
    %18 = vector.broadcast %cst_12 : f32 to vector<8x8xf32>
    %19 = arith.cmpf oeq, %17, %18 : vector<8x8xf32>
    %cst_13 = arith.constant -1.000000e+09 : f32
    %cst_14 = arith.constant 0.000000e+00 : f32
    %20 = vector.broadcast %cst_13 : f32 to vector<8x8xf32>
    %21 = vector.broadcast %cst_14 : f32 to vector<8x8xf32>
    %22 = arith.select %19, %20, %21 : vector<8x8xi1>, vector<8x8xf32>
    %c0_15 = arith.constant 0 : index
    %c0_16 = arith.constant 0 : index
    %23 = vector.load %arg6[%c0_15, %c0_16] : memref<1x32xf32, #tpu.memory_space<vmem>>, vector<1x32xf32>
    %c0_17 = arith.constant 0 : index
    %c0_18 = arith.constant 0 : index
    %24 = vector.load %arg7[%c0_17, %c0_18] : memref<1x32xf32, #tpu.memory_space<vmem>>, vector<1x32xf32>
    %cst_19 = arith.constant dense<0.000000e+00> : vector<8xf32>
    %25 = vector.multi_reduction <add>, %3, %cst_19 [1] : vector<8x32xf32> to vector<8xf32>
    %26 = vector.shape_cast %25 : vector<8xf32> to vector<8x1xf32>
    %cst_20 = arith.constant 3.200000e+01 : f32
    %27 = vector.broadcast %cst_20 : f32 to vector<8x1xf32>
    %28 = arith.divf %26, %27 : vector<8x1xf32>
    %29 = vector.broadcast %28 : vector<8x1xf32> to vector<8x32xf32>
    %30 = arith.subf %3, %29 : vector<8x32xf32>
    %31 = arith.mulf %30, %30 : vector<8x32xf32>
    %cst_21 = arith.constant dense<0.000000e+00> : vector<8xf32>
    %32 = vector.multi_reduction <add>, %31, %cst_21 [1] : vector<8x32xf32> to vector<8xf32>
    %33 = vector.shape_cast %32 : vector<8xf32> to vector<8x1xf32>
    %cst_22 = arith.constant 0.0322580636 : f32
    %34 = vector.broadcast %cst_22 : f32 to vector<8x1xf32>
    %35 = arith.mulf %33, %34 : vector<8x1xf32>
    %36 = vector.broadcast %23 : vector<1x32xf32> to vector<8x32xf32>
    %37 = arith.mulf %36, %30 : vector<8x32xf32>
    %38 = math.sqrt %35 : vector<8x1xf32>
    %cst_23 = arith.constant 9.99999997E-7 : f32
    %39 = vector.broadcast %cst_23 : f32 to vector<8x1xf32>
    %40 = arith.addf %38, %39 : vector<8x1xf32>
    %41 = vector.broadcast %40 : vector<8x1xf32> to vector<8x32xf32>
    %42 = arith.divf %37, %41 : vector<8x32xf32>
    %43 = vector.broadcast %24 : vector<1x32xf32> to vector<8x32xf32>
    %44 = arith.addf %42, %43 : vector<8x32xf32>
    %c0_24 = arith.constant 0 : index
    %c0_25 = arith.constant 0 : index
    %45 = vector.load %arg6[%c0_24, %c0_25] : memref<1x32xf32, #tpu.memory_space<vmem>>, vector<1x32xf32>
    %c0_26 = arith.constant 0 : index
    %c0_27 = arith.constant 0 : index
    %46 = vector.load %arg7[%c0_26, %c0_27] : memref<1x32xf32, #tpu.memory_space<vmem>>, vector<1x32xf32>
    %cst_28 = arith.constant dense<0.000000e+00> : vector<8xf32>
    %47 = vector.multi_reduction <add>, %6, %cst_28 [1] : vector<8x32xf32> to vector<8xf32>
    %48 = vector.shape_cast %47 : vector<8xf32> to vector<8x1xf32>
    %cst_29 = arith.constant 3.200000e+01 : f32
    %49 = vector.broadcast %cst_29 : f32 to vector<8x1xf32>
    %50 = arith.divf %48, %49 : vector<8x1xf32>
    %51 = vector.broadcast %50 : vector<8x1xf32> to vector<8x32xf32>
    %52 = arith.subf %6, %51 : vector<8x32xf32>
    %53 = arith.mulf %52, %52 : vector<8x32xf32>
    %cst_30 = arith.constant dense<0.000000e+00> : vector<8xf32>
    %54 = vector.multi_reduction <add>, %53, %cst_30 [1] : vector<8x32xf32> to vector<8xf32>
    %55 = vector.shape_cast %54 : vector<8xf32> to vector<8x1xf32>
    %cst_31 = arith.constant 0.0322580636 : f32
    %56 = vector.broadcast %cst_31 : f32 to vector<8x1xf32>
    %57 = arith.mulf %55, %56 : vector<8x1xf32>
    %58 = vector.broadcast %45 : vector<1x32xf32> to vector<8x32xf32>
    %59 = arith.mulf %58, %52 : vector<8x32xf32>
    %60 = math.sqrt %57 : vector<8x1xf32>
    %cst_32 = arith.constant 9.99999997E-7 : f32
    %61 = vector.broadcast %cst_32 : f32 to vector<8x1xf32>
    %62 = arith.addf %60, %61 : vector<8x1xf32>
    %63 = vector.broadcast %62 : vector<8x1xf32> to vector<8x32xf32>
    %64 = arith.divf %59, %63 : vector<8x32xf32>
    %65 = vector.broadcast %46 : vector<1x32xf32> to vector<8x32xf32>
    %66 = arith.addf %64, %65 : vector<8x32xf32>
    %c0_33 = arith.constant 0 : index
    %c0_34 = arith.constant 0 : index
    %67 = vector.load %arg8[%c0_33, %c0_34] : memref<32x32xbf16, #tpu.memory_space<vmem>>, vector<32x32xbf16>
    %c0_35 = arith.constant 0 : index
    %c0_36 = arith.constant 0 : index
    %68 = vector.load %arg9[%c0_35, %c0_36] : memref<1x32xf32, #tpu.memory_space<vmem>>, vector<1x32xf32>
    %c0_37 = arith.constant 0 : index
    %c0_38 = arith.constant 0 : index
    %69 = vector.load %arg10[%c0_37, %c0_38] : memref<32x32xbf16, #tpu.memory_space<vmem>>, vector<32x32xbf16>
    %c0_39 = arith.constant 0 : index
    %c0_40 = arith.constant 0 : index
    %70 = vector.load %arg11[%c0_39, %c0_40] : memref<1x32xf32, #tpu.memory_space<vmem>>, vector<1x32xf32>
    %c0_41 = arith.constant 0 : index
    %c0_42 = arith.constant 0 : index
    %71 = vector.load %arg12[%c0_41, %c0_42] : memref<32x32xbf16, #tpu.memory_space<vmem>>, vector<32x32xbf16>
    %c0_43 = arith.constant 0 : index
    %c0_44 = arith.constant 0 : index
    %72 = vector.load %arg13[%c0_43, %c0_44] : memref<1x32xf32, #tpu.memory_space<vmem>>, vector<1x32xf32>
    %c0_45 = arith.constant 0 : index
    %c0_46 = arith.constant 0 : index
    %73 = vector.load %arg14[%c0_45, %c0_46] : memref<32x32xbf16, #tpu.memory_space<vmem>>, vector<32x32xbf16>
    %c0_47 = arith.constant 0 : index
    %c0_48 = arith.constant 0 : index
    %74 = vector.load %arg15[%c0_47, %c0_48] : memref<1x32xf32, #tpu.memory_space<vmem>>, vector<1x32xf32>
    %75 = arith.truncf %66 : vector<8x32xf32> to vector<8x32xbf16>
    %cst_49 = arith.constant dense<0.000000e+00> : vector<8x32xf32>
    %76 = tpu.matmul %75, %67, %cst_49 {dimension_numbers = #tpu.dot_dimension_numbers<[1], [0], [0], [1], [0, 0, 1, 1], [], []>} : vector<8x32xbf16>, vector<32x32xbf16>, vector<8x32xf32> -> vector<8x32xf32>
    %77 = vector.broadcast %68 : vector<1x32xf32> to vector<8x32xf32>
    %78 = arith.addf %76, %77 : vector<8x32xf32>
    %79 = arith.truncf %44 : vector<8x32xf32> to vector<8x32xbf16>
    %cst_50 = arith.constant dense<0.000000e+00> : vector<8x32xf32>
    %80 = tpu.matmul %79, %69, %cst_50 {dimension_numbers = #tpu.dot_dimension_numbers<[1], [0], [0], [1], [0, 0, 1, 1], [], []>} : vector<8x32xbf16>, vector<32x32xbf16>, vector<8x32xf32> -> vector<8x32xf32>
    %81 = vector.broadcast %70 : vector<1x32xf32> to vector<8x32xf32>
    %82 = arith.addf %80, %81 : vector<8x32xf32>
    %83 = arith.truncf %44 : vector<8x32xf32> to vector<8x32xbf16>
    %cst_51 = arith.constant dense<0.000000e+00> : vector<8x32xf32>
    %84 = tpu.matmul %83, %71, %cst_51 {dimension_numbers = #tpu.dot_dimension_numbers<[1], [0], [0], [1], [0, 0, 1, 1], [], []>} : vector<8x32xbf16>, vector<32x32xbf16>, vector<8x32xf32> -> vector<8x32xf32>
    %85 = vector.broadcast %72 : vector<1x32xf32> to vector<8x32xf32>
    %86 = arith.addf %84, %85 : vector<8x32xf32>
    %87 = arith.truncf %78 : vector<8x32xf32> to vector<8x32xbf16>
    %88 = arith.truncf %82 : vector<8x32xf32> to vector<8x32xbf16>
    %89 = arith.truncf %86 : vector<8x32xf32> to vector<8x32xbf16>
    %90 = vector.extract_strided_slice %87 {offsets = [0, 0], sizes = [8, 8], strides = [1, 1]} : vector<8x32xbf16> to vector<8x8xbf16>
    %91 = vector.extract_strided_slice %88 {offsets = [0, 0], sizes = [8, 8], strides = [1, 1]} : vector<8x32xbf16> to vector<8x8xbf16>
    %cst_52 = arith.constant dense<0.000000e+00> : vector<8x8xf32>
    %92 = tpu.matmul %90, %91, %cst_52 {dimension_numbers = #tpu.dot_dimension_numbers<[1], [1], [0], [0], [0, 0, 1, 0], [], []>} : vector<8x8xbf16>, vector<8x8xbf16>, vector<8x8xf32> -> vector<8x8xf32>
    %cst_53 = arith.constant 0.353553385 : f32
    %93 = vector.broadcast %cst_53 : f32 to vector<8x8xf32>
    %94 = arith.mulf %92, %93 : vector<8x8xf32>
    %95 = arith.addf %94, %14 : vector<8x8xf32>
    %cst_54 = arith.constant dense<0xFF800000> : vector<8xf32>
    %96 = vector.multi_reduction <maximumf>, %95, %cst_54 [1] : vector<8x8xf32> to vector<8xf32>
    %97 = vector.shape_cast %96 : vector<8xf32> to vector<8x1xf32>
    %98 = vector.broadcast %97 : vector<8x1xf32> to vector<8x8xf32>
    %99 = arith.subf %95, %98 : vector<8x8xf32>
    %100 = math.exp %99 : vector<8x8xf32>
    %cst_55 = arith.constant dense<0.000000e+00> : vector<8xf32>
    %101 = vector.multi_reduction <add>, %100, %cst_55 [1] : vector<8x8xf32> to vector<8xf32>
    %102 = vector.shape_cast %101 : vector<8xf32> to vector<8x1xf32>
    %103 = tpu.reciprocal %102 {approx = true} : vector<8x1xf32> -> vector<8x1xf32>
    %104 = vector.broadcast %103 : vector<8x1xf32> to vector<8x8xf32>
    %105 = arith.mulf %100, %104 : vector<8x8xf32>
    %106 = arith.truncf %105 : vector<8x8xf32> to vector<8x8xbf16>
    %107 = vector.extract_strided_slice %89 {offsets = [0, 0], sizes = [8, 8], strides = [1, 1]} : vector<8x32xbf16> to vector<8x8xbf16>
    %cst_56 = arith.constant dense<0.000000e+00> : vector<8x8xf32>
    %108 = tpu.matmul %106, %107, %cst_56 {dimension_numbers = #tpu.dot_dimension_numbers<[1], [0], [0], [1], [0, 0, 1, 1], [], []>} : vector<8x8xbf16>, vector<8x8xbf16>, vector<8x8xf32> -> vector<8x8xf32>
    %c0_57 = arith.constant 0 : index
    %c0_58 = arith.constant 0 : index
    %109 = vector.load %arg35[%c0_57, %c0_58] : memref<8x32xf32, #tpu.memory_space<vmem>>, vector<8x8xf32>
    tpu.vector_store %arg35[%c0_57, %c0_58], %108 {strides = array<i32>} : memref<8x32xf32, #tpu.memory_space<vmem>>, vector<8x8xf32>,
    %110 = vector.extract_strided_slice %87 {offsets = [0, 8], sizes = [8, 8], strides = [1, 1]} : vector<8x32xbf16> to vector<8x8xbf16>
    %111 = vector.extract_strided_slice %88 {offsets = [0, 8], sizes = [8, 8], strides = [1, 1]} : vector<8x32xbf16> to vector<8x8xbf16>
    %cst_59 = arith.constant dense<0.000000e+00> : vector<8x8xf32>
    %112 = tpu.matmul %110, %111, %cst_59 {dimension_numbers = #tpu.dot_dimension_numbers<[1], [1], [0], [0], [0, 0, 1, 0], [], []>} : vector<8x8xbf16>, vector<8x8xbf16>, vector<8x8xf32> -> vector<8x8xf32>
    %cst_60 = arith.constant 0.353553385 : f32
    %113 = vector.broadcast %cst_60 : f32 to vector<8x8xf32>
    %114 = arith.mulf %112, %113 : vector<8x8xf32>
    %115 = arith.addf %114, %14 : vector<8x8xf32>
    %cst_61 = arith.constant dense<0xFF800000> : vector<8xf32>
    %116 = vector.multi_reduction <maximumf>, %115, %cst_61 [1] : vector<8x8xf32> to vector<8xf32>
    %117 = vector.shape_cast %116 : vector<8xf32> to vector<8x1xf32>
    %118 = vector.broadcast %117 : vector<8x1xf32> to vector<8x8xf32>
    %119 = arith.subf %115, %118 : vector<8x8xf32>
    %120 = math.exp %119 : vector<8x8xf32>
    %cst_62 = arith.constant dense<0.000000e+00> : vector<8xf32>
    %121 = vector.multi_reduction <add>, %120, %cst_62 [1] : vector<8x8xf32> to vector<8xf32>
    %122 = vector.shape_cast %121 : vector<8xf32> to vector<8x1xf32>
    %123 = tpu.reciprocal %122 {approx = true} : vector<8x1xf32> -> vector<8x1xf32>
    %124 = vector.broadcast %123 : vector<8x1xf32> to vector<8x8xf32>
    %125 = arith.mulf %120, %124 : vector<8x8xf32>
    %126 = arith.truncf %125 : vector<8x8xf32> to vector<8x8xbf16>
    %127 = vector.extract_strided_slice %89 {offsets = [0, 8], sizes = [8, 8], strides = [1, 1]} : vector<8x32xbf16> to vector<8x8xbf16>
    %cst_63 = arith.constant dense<0.000000e+00> : vector<8x8xf32>
    %128 = tpu.matmul %126, %127, %cst_63 {dimension_numbers = #tpu.dot_dimension_numbers<[1], [0], [0], [1], [0, 0, 1, 1], [], []>} : vector<8x8xbf16>, vector<8x8xbf16>, vector<8x8xf32> -> vector<8x8xf32>
    %c0_64 = arith.constant 0 : index
    %c8 = arith.constant 8 : index
    %129 = vector.load %arg35[%c0_64, %c8] : memref<8x32xf32, #tpu.memory_space<vmem>>, vector<8x8xf32>
    tpu.vector_store %arg35[%c0_64, %c8], %128 {strides = array<i32>} : memref<8x32xf32, #tpu.memory_space<vmem>>, vector<8x8xf32>,
    %130 = vector.extract_strided_slice %87 {offsets = [0, 16], sizes = [8, 8], strides = [1, 1]} : vector<8x32xbf16> to vector<8x8xbf16>
    %131 = vector.extract_strided_slice %88 {offsets = [0, 16], sizes = [8, 8], strides = [1, 1]} : vector<8x32xbf16> to vector<8x8xbf16>
    %cst_65 = arith.constant dense<0.000000e+00> : vector<8x8xf32>
    %132 = tpu.matmul %130, %131, %cst_65 {dimension_numbers = #tpu.dot_dimension_numbers<[1], [1], [0], [0], [0, 0, 1, 0], [], []>} : vector<8x8xbf16>, vector<8x8xbf16>, vector<8x8xf32> -> vector<8x8xf32>
    %cst_66 = arith.constant 0.353553385 : f32
    %133 = vector.broadcast %cst_66 : f32 to vector<8x8xf32>
    %134 = arith.mulf %132, %133 : vector<8x8xf32>
    %135 = arith.addf %134, %14 : vector<8x8xf32>
    %cst_67 = arith.constant dense<0xFF800000> : vector<8xf32>
    %136 = vector.multi_reduction <maximumf>, %135, %cst_67 [1] : vector<8x8xf32> to vector<8xf32>
    %137 = vector.shape_cast %136 : vector<8xf32> to vector<8x1xf32>
    %138 = vector.broadcast %137 : vector<8x1xf32> to vector<8x8xf32>
    %139 = arith.subf %135, %138 : vector<8x8xf32>
    %140 = math.exp %139 : vector<8x8xf32>
    %cst_68 = arith.constant dense<0.000000e+00> : vector<8xf32>
    %141 = vector.multi_reduction <add>, %140, %cst_68 [1] : vector<8x8xf32> to vector<8xf32>
    %142 = vector.shape_cast %141 : vector<8xf32> to vector<8x1xf32>
    %143 = tpu.reciprocal %142 {approx = true} : vector<8x1xf32> -> vector<8x1xf32>
    %144 = vector.broadcast %143 : vector<8x1xf32> to vector<8x8xf32>
    %145 = arith.mulf %140, %144 : vector<8x8xf32>
    %146 = arith.truncf %145 : vector<8x8xf32> to vector<8x8xbf16>
    %147 = vector.extract_strided_slice %89 {offsets = [0, 16], sizes = [8, 8], strides = [1, 1]} : vector<8x32xbf16> to vector<8x8xbf16>
    %cst_69 = arith.constant dense<0.000000e+00> : vector<8x8xf32>
    %148 = tpu.matmul %146, %147, %cst_69 {dimension_numbers = #tpu.dot_dimension_numbers<[1], [0], [0], [1], [0, 0, 1, 1], [], []>} : vector<8x8xbf16>, vector<8x8xbf16>, vector<8x8xf32> -> vector<8x8xf32>
    %c0_70 = arith.constant 0 : index
    %c16 = arith.constant 16 : index
    %149 = vector.load %arg35[%c0_70, %c16] : memref<8x32xf32, #tpu.memory_space<vmem>>, vector<8x8xf32>
    tpu.vector_store %arg35[%c0_70, %c16], %148 {strides = array<i32>} : memref<8x32xf32, #tpu.memory_space<vmem>>, vector<8x8xf32>,
    %150 = vector.extract_strided_slice %87 {offsets = [0, 24], sizes = [8, 8], strides = [1, 1]} : vector<8x32xbf16> to vector<8x8xbf16>
    %151 = vector.extract_strided_slice %88 {offsets = [0, 24], sizes = [8, 8], strides = [1, 1]} : vector<8x32xbf16> to vector<8x8xbf16>
    %cst_71 = arith.constant dense<0.000000e+00> : vector<8x8xf32>
    %152 = tpu.matmul %150, %151, %cst_71 {dimension_numbers = #tpu.dot_dimension_numbers<[1], [1], [0], [0], [0, 0, 1, 0], [], []>} : vector<8x8xbf16>, vector<8x8xbf16>, vector<8x8xf32> -> vector<8x8xf32>
    %cst_72 = arith.constant 0.353553385 : f32
    %153 = vector.broadcast %cst_72 : f32 to vector<8x8xf32>
    %154 = arith.mulf %152, %153 : vector<8x8xf32>
    %155 = arith.addf %154, %14 : vector<8x8xf32>
    %cst_73 = arith.constant dense<0xFF800000> : vector<8xf32>
    %156 = vector.multi_reduction <maximumf>, %155, %cst_73 [1] : vector<8x8xf32> to vector<8xf32>
    %157 = vector.shape_cast %156 : vector<8xf32> to vector<8x1xf32>
    %158 = vector.broadcast %157 : vector<8x1xf32> to vector<8x8xf32>
    %159 = arith.subf %155, %158 : vector<8x8xf32>
    %160 = math.exp %159 : vector<8x8xf32>
    %cst_74 = arith.constant dense<0.000000e+00> : vector<8xf32>
    %161 = vector.multi_reduction <add>, %160, %cst_74 [1] : vector<8x8xf32> to vector<8xf32>
    %162 = vector.shape_cast %161 : vector<8xf32> to vector<8x1xf32>
    %163 = tpu.reciprocal %162 {approx = true} : vector<8x1xf32> -> vector<8x1xf32>
    %164 = vector.broadcast %163 : vector<8x1xf32> to vector<8x8xf32>
    %165 = arith.mulf %160, %164 : vector<8x8xf32>
    %166 = arith.truncf %165 : vector<8x8xf32> to vector<8x8xbf16>
    %167 = vector.extract_strided_slice %89 {offsets = [0, 24], sizes = [8, 8], strides = [1, 1]} : vector<8x32xbf16> to vector<8x8xbf16>
    %cst_75 = arith.constant dense<0.000000e+00> : vector<8x8xf32>
    %168 = tpu.matmul %166, %167, %cst_75 {dimension_numbers = #tpu.dot_dimension_numbers<[1], [0], [0], [1], [0, 0, 1, 1], [], []>} : vector<8x8xbf16>, vector<8x8xbf16>, vector<8x8xf32> -> vector<8x8xf32>
    %c0_76 = arith.constant 0 : index
    %c24 = arith.constant 24 : index
    %169 = vector.load %arg35[%c0_76, %c24] : memref<8x32xf32, #tpu.memory_space<vmem>>, vector<8x8xf32>
    tpu.vector_store %arg35[%c0_76, %c24], %168 {strides = array<i32>} : memref<8x32xf32, #tpu.memory_space<vmem>>, vector<8x8xf32>,
    %c0_77 = arith.constant 0 : index
    %c0_78 = arith.constant 0 : index
    %170 = vector.load %arg35[%c0_77, %c0_78] : memref<8x32xf32, #tpu.memory_space<vmem>>, vector<8x32xf32>
    %171 = arith.truncf %170 : vector<8x32xf32> to vector<8x32xbf16>
    %cst_79 = arith.constant dense<0.000000e+00> : vector<8x32xf32>
    %172 = tpu.matmul %171, %73, %cst_79 {dimension_numbers = #tpu.dot_dimension_numbers<[1], [0], [0], [1], [0, 0, 1, 1], [], []>} : vector<8x32xbf16>, vector<32x32xbf16>, vector<8x32xf32> -> vector<8x32xf32>
    %173 = vector.broadcast %74 : vector<1x32xf32> to vector<8x32xf32>
    %174 = arith.addf %172, %173 : vector<8x32xf32>
    %175 = arith.addf %6, %174 : vector<8x32xf32>
    %c0_80 = arith.constant 0 : index
    %c0_81 = arith.constant 0 : index
    %176 = vector.load %arg16[%c0_80, %c0_81] : memref<1x32xf32, #tpu.memory_space<vmem>>, vector<1x32xf32>
    %c0_82 = arith.constant 0 : index
    %c0_83 = arith.constant 0 : index
    %177 = vector.load %arg17[%c0_82, %c0_83] : memref<1x32xf32, #tpu.memory_space<vmem>>, vector<1x32xf32>
    %cst_84 = arith.constant dense<0.000000e+00> : vector<8xf32>
    %178 = vector.multi_reduction <add>, %175, %cst_84 [1] : vector<8x32xf32> to vector<8xf32>
    %179 = vector.shape_cast %178 : vector<8xf32> to vector<8x1xf32>
    %cst_85 = arith.constant 3.200000e+01 : f32
    %180 = vector.broadcast %cst_85 : f32 to vector<8x1xf32>
    %181 = arith.divf %179, %180 : vector<8x1xf32>
    %182 = vector.broadcast %181 : vector<8x1xf32> to vector<8x32xf32>
    %183 = arith.subf %175, %182 : vector<8x32xf32>
    %184 = arith.mulf %183, %183 : vector<8x32xf32>
    %cst_86 = arith.constant dense<0.000000e+00> : vector<8xf32>
    %185 = vector.multi_reduction <add>, %184, %cst_86 [1] : vector<8x32xf32> to vector<8xf32>
    %186 = vector.shape_cast %185 : vector<8xf32> to vector<8x1xf32>
    %cst_87 = arith.constant 0.0322580636 : f32
    %187 = vector.broadcast %cst_87 : f32 to vector<8x1xf32>
    %188 = arith.mulf %186, %187 : vector<8x1xf32>
    %189 = vector.broadcast %176 : vector<1x32xf32> to vector<8x32xf32>
    %190 = arith.mulf %189, %183 : vector<8x32xf32>
    %191 = math.sqrt %188 : vector<8x1xf32>
    %cst_88 = arith.constant 9.99999997E-7 : f32
    %192 = vector.broadcast %cst_88 : f32 to vector<8x1xf32>
    %193 = arith.addf %191, %192 : vector<8x1xf32>
    %194 = vector.broadcast %193 : vector<8x1xf32> to vector<8x32xf32>
    %195 = arith.divf %190, %194 : vector<8x32xf32>
    %196 = vector.broadcast %177 : vector<1x32xf32> to vector<8x32xf32>
    %197 = arith.addf %195, %196 : vector<8x32xf32>
    %c0_89 = arith.constant 0 : index
    %c0_90 = arith.constant 0 : index
    %c0_91 = arith.constant 0 : index
    %198 = vector.load %arg3[%c0_89, %c0_90, %c0_91] : memref<1x8x32xf32, #tpu.memory_space<vmem>>, vector<1x8x32xf32>
    %199 = vector.shape_cast %198 : vector<1x8x32xf32> to vector<8x32xf32>
    %c0_92 = arith.constant 0 : index
    %c0_93 = arith.constant 0 : index
    %200 = vector.load %arg18[%c0_92, %c0_93] : memref<32x32xbf16, #tpu.memory_space<vmem>>, vector<32x32xbf16>
    %c0_94 = arith.constant 0 : index
    %c0_95 = arith.constant 0 : index
    %201 = vector.load %arg19[%c0_94, %c0_95] : memref<1x32xf32, #tpu.memory_space<vmem>>, vector<1x32xf32>
    %c0_96 = arith.constant 0 : index
    %c0_97 = arith.constant 0 : index
    %202 = vector.load %arg20[%c0_96, %c0_97] : memref<32x32xbf16, #tpu.memory_space<vmem>>, vector<32x32xbf16>
    %c0_98 = arith.constant 0 : index
    %c0_99 = arith.constant 0 : index
    %203 = vector.load %arg21[%c0_98, %c0_99] : memref<1x32xf32, #tpu.memory_space<vmem>>, vector<1x32xf32>
    %c0_100 = arith.constant 0 : index
    %c0_101 = arith.constant 0 : index
    %204 = vector.load %arg22[%c0_100, %c0_101] : memref<32x32xbf16, #tpu.memory_space<vmem>>, vector<32x32xbf16>
    %c0_102 = arith.constant 0 : index
    %c0_103 = arith.constant 0 : index
    %205 = vector.load %arg23[%c0_102, %c0_103] : memref<1x32xf32, #tpu.memory_space<vmem>>, vector<1x32xf32>
    %c0_104 = arith.constant 0 : index
    %c0_105 = arith.constant 0 : index
    %206 = vector.load %arg24[%c0_104, %c0_105] : memref<32x32xbf16, #tpu.memory_space<vmem>>, vector<32x32xbf16>
    %c0_106 = arith.constant 0 : index
    %c0_107 = arith.constant 0 : index
    %207 = vector.load %arg25[%c0_106, %c0_107] : memref<1x32xf32, #tpu.memory_space<vmem>>, vector<1x32xf32>
    %208 = arith.truncf %197 : vector<8x32xf32> to vector<8x32xbf16>
    %cst_108 = arith.constant dense<0.000000e+00> : vector<8x32xf32>
    %209 = tpu.matmul %208, %200, %cst_108 {dimension_numbers = #tpu.dot_dimension_numbers<[1], [0], [0], [1], [0, 0, 1, 1], [], []>} : vector<8x32xbf16>, vector<32x32xbf16>, vector<8x32xf32> -> vector<8x32xf32>
    %210 = vector.broadcast %201 : vector<1x32xf32> to vector<8x32xf32>
    %211 = arith.addf %209, %210 : vector<8x32xf32>
    %212 = arith.truncf %199 : vector<8x32xf32> to vector<8x32xbf16>
    %cst_109 = arith.constant dense<0.000000e+00> : vector<8x32xf32>
    %213 = tpu.matmul %212, %202, %cst_109 {dimension_numbers = #tpu.dot_dimension_numbers<[1], [0], [0], [1], [0, 0, 1, 1], [], []>} : vector<8x32xbf16>, vector<32x32xbf16>, vector<8x32xf32> -> vector<8x32xf32>
    %214 = vector.broadcast %203 : vector<1x32xf32> to vector<8x32xf32>
    %215 = arith.addf %213, %214 : vector<8x32xf32>
    %216 = arith.truncf %199 : vector<8x32xf32> to vector<8x32xbf16>
    %cst_110 = arith.constant dense<0.000000e+00> : vector<8x32xf32>
    %217 = tpu.matmul %216, %204, %cst_110 {dimension_numbers = #tpu.dot_dimension_numbers<[1], [0], [0], [1], [0, 0, 1, 1], [], []>} : vector<8x32xbf16>, vector<32x32xbf16>, vector<8x32xf32> -> vector<8x32xf32>
    %218 = vector.broadcast %205 : vector<1x32xf32> to vector<8x32xf32>
    %219 = arith.addf %217, %218 : vector<8x32xf32>
    %220 = arith.truncf %211 : vector<8x32xf32> to vector<8x32xbf16>
    %221 = arith.truncf %215 : vector<8x32xf32> to vector<8x32xbf16>
    %222 = arith.truncf %219 : vector<8x32xf32> to vector<8x32xbf16>
    %223 = vector.extract_strided_slice %220 {offsets = [0, 0], sizes = [8, 8], strides = [1, 1]} : vector<8x32xbf16> to vector<8x8xbf16>
    %224 = vector.extract_strided_slice %221 {offsets = [0, 0], sizes = [8, 8], strides = [1, 1]} : vector<8x32xbf16> to vector<8x8xbf16>
    %cst_111 = arith.constant dense<0.000000e+00> : vector<8x8xf32>
    %225 = tpu.matmul %223, %224, %cst_111 {dimension_numbers = #tpu.dot_dimension_numbers<[1], [1], [0], [0], [0, 0, 1, 0], [], []>} : vector<8x8xbf16>, vector<8x8xbf16>, vector<8x8xf32> -> vector<8x8xf32>
    %cst_112 = arith.constant 0.353553385 : f32
    %226 = vector.broadcast %cst_112 : f32 to vector<8x8xf32>
    %227 = arith.mulf %225, %226 : vector<8x8xf32>
    %228 = arith.addf %227, %22 : vector<8x8xf32>
    %cst_113 = arith.constant dense<0xFF800000> : vector<8xf32>
    %229 = vector.multi_reduction <maximumf>, %228, %cst_113 [1] : vector<8x8xf32> to vector<8xf32>
    %230 = vector.shape_cast %229 : vector<8xf32> to vector<8x1xf32>
    %231 = vector.broadcast %230 : vector<8x1xf32> to vector<8x8xf32>
    %232 = arith.subf %228, %231 : vector<8x8xf32>
    %233 = math.exp %232 : vector<8x8xf32>
    %cst_114 = arith.constant dense<0.000000e+00> : vector<8xf32>
    %234 = vector.multi_reduction <add>, %233, %cst_114 [1] : vector<8x8xf32> to vector<8xf32>
    %235 = vector.shape_cast %234 : vector<8xf32> to vector<8x1xf32>
    %236 = tpu.reciprocal %235 {approx = true} : vector<8x1xf32> -> vector<8x1xf32>
    %237 = vector.broadcast %236 : vector<8x1xf32> to vector<8x8xf32>
    %238 = arith.mulf %233, %237 : vector<8x8xf32>
    %239 = arith.truncf %238 : vector<8x8xf32> to vector<8x8xbf16>
    %240 = vector.extract_strided_slice %222 {offsets = [0, 0], sizes = [8, 8], strides = [1, 1]} : vector<8x32xbf16> to vector<8x8xbf16>
    %cst_115 = arith.constant dense<0.000000e+00> : vector<8x8xf32>
    %241 = tpu.matmul %239, %240, %cst_115 {dimension_numbers = #tpu.dot_dimension_numbers<[1], [0], [0], [1], [0, 0, 1, 1], [], []>} : vector<8x8xbf16>, vector<8x8xbf16>, vector<8x8xf32> -> vector<8x8xf32>
    %c0_116 = arith.constant 0 : index
    %c0_117 = arith.constant 0 : index
    %242 = vector.load %arg35[%c0_116, %c0_117] : memref<8x32xf32, #tpu.memory_space<vmem>>, vector<8x8xf32>
    tpu.vector_store %arg35[%c0_116, %c0_117], %241 {strides = array<i32>} : memref<8x32xf32, #tpu.memory_space<vmem>>, vector<8x8xf32>,
    %243 = vector.extract_strided_slice %220 {offsets = [0, 8], sizes = [8, 8], strides = [1, 1]} : vector<8x32xbf16> to vector<8x8xbf16>
    %244 = vector.extract_strided_slice %221 {offsets = [0, 8], sizes = [8, 8], strides = [1, 1]} : vector<8x32xbf16> to vector<8x8xbf16>
    %cst_118 = arith.constant dense<0.000000e+00> : vector<8x8xf32>
    %245 = tpu.matmul %243, %244, %cst_118 {dimension_numbers = #tpu.dot_dimension_numbers<[1], [1], [0], [0], [0, 0, 1, 0], [], []>} : vector<8x8xbf16>, vector<8x8xbf16>, vector<8x8xf32> -> vector<8x8xf32>
    %cst_119 = arith.constant 0.353553385 : f32
    %246 = vector.broadcast %cst_119 : f32 to vector<8x8xf32>
    %247 = arith.mulf %245, %246 : vector<8x8xf32>
    %248 = arith.addf %247, %22 : vector<8x8xf32>
    %cst_120 = arith.constant dense<0xFF800000> : vector<8xf32>
    %249 = vector.multi_reduction <maximumf>, %248, %cst_120 [1] : vector<8x8xf32> to vector<8xf32>
    %250 = vector.shape_cast %249 : vector<8xf32> to vector<8x1xf32>
    %251 = vector.broadcast %250 : vector<8x1xf32> to vector<8x8xf32>
    %252 = arith.subf %248, %251 : vector<8x8xf32>
    %253 = math.exp %252 : vector<8x8xf32>
    %cst_121 = arith.constant dense<0.000000e+00> : vector<8xf32>
    %254 = vector.multi_reduction <add>, %253, %cst_121 [1] : vector<8x8xf32> to vector<8xf32>
    %255 = vector.shape_cast %254 : vector<8xf32> to vector<8x1xf32>
    %256 = tpu.reciprocal %255 {approx = true} : vector<8x1xf32> -> vector<8x1xf32>
    %257 = vector.broadcast %256 : vector<8x1xf32> to vector<8x8xf32>
    %258 = arith.mulf %253, %257 : vector<8x8xf32>
    %259 = arith.truncf %258 : vector<8x8xf32> to vector<8x8xbf16>
    %260 = vector.extract_strided_slice %222 {offsets = [0, 8], sizes = [8, 8], strides = [1, 1]} : vector<8x32xbf16> to vector<8x8xbf16>
    %cst_122 = arith.constant dense<0.000000e+00> : vector<8x8xf32>
    %261 = tpu.matmul %259, %260, %cst_122 {dimension_numbers = #tpu.dot_dimension_numbers<[1], [0], [0], [1], [0, 0, 1, 1], [], []>} : vector<8x8xbf16>, vector<8x8xbf16>, vector<8x8xf32> -> vector<8x8xf32>
    %c0_123 = arith.constant 0 : index
    %c8_124 = arith.constant 8 : index
    %262 = vector.load %arg35[%c0_123, %c8_124] : memref<8x32xf32, #tpu.memory_space<vmem>>, vector<8x8xf32>
    tpu.vector_store %arg35[%c0_123, %c8_124], %261 {strides = array<i32>} : memref<8x32xf32, #tpu.memory_space<vmem>>, vector<8x8xf32>,
    %263 = vector.extract_strided_slice %220 {offsets = [0, 16], sizes = [8, 8], strides = [1, 1]} : vector<8x32xbf16> to vector<8x8xbf16>
    %264 = vector.extract_strided_slice %221 {offsets = [0, 16], sizes = [8, 8], strides = [1, 1]} : vector<8x32xbf16> to vector<8x8xbf16>
    %cst_125 = arith.constant dense<0.000000e+00> : vector<8x8xf32>
    %265 = tpu.matmul %263, %264, %cst_125 {dimension_numbers = #tpu.dot_dimension_numbers<[1], [1], [0], [0], [0, 0, 1, 0], [], []>} : vector<8x8xbf16>, vector<8x8xbf16>, vector<8x8xf32> -> vector<8x8xf32>
    %cst_126 = arith.constant 0.353553385 : f32
    %266 = vector.broadcast %cst_126 : f32 to vector<8x8xf32>
    %267 = arith.mulf %265, %266 : vector<8x8xf32>
    %268 = arith.addf %267, %22 : vector<8x8xf32>
    %cst_127 = arith.constant dense<0xFF800000> : vector<8xf32>
    %269 = vector.multi_reduction <maximumf>, %268, %cst_127 [1] : vector<8x8xf32> to vector<8xf32>
    %270 = vector.shape_cast %269 : vector<8xf32> to vector<8x1xf32>
    %271 = vector.broadcast %270 : vector<8x1xf32> to vector<8x8xf32>
    %272 = arith.subf %268, %271 : vector<8x8xf32>
    %273 = math.exp %272 : vector<8x8xf32>
    %cst_128 = arith.constant dense<0.000000e+00> : vector<8xf32>
    %274 = vector.multi_reduction <add>, %273, %cst_128 [1] : vector<8x8xf32> to vector<8xf32>
    %275 = vector.shape_cast %274 : vector<8xf32> to vector<8x1xf32>
    %276 = tpu.reciprocal %275 {approx = true} : vector<8x1xf32> -> vector<8x1xf32>
    %277 = vector.broadcast %276 : vector<8x1xf32> to vector<8x8xf32>
    %278 = arith.mulf %273, %277 : vector<8x8xf32>
    %279 = arith.truncf %278 : vector<8x8xf32> to vector<8x8xbf16>
    %280 = vector.extract_strided_slice %222 {offsets = [0, 16], sizes = [8, 8], strides = [1, 1]} : vector<8x32xbf16> to vector<8x8xbf16>
    %cst_129 = arith.constant dense<0.000000e+00> : vector<8x8xf32>
    %281 = tpu.matmul %279, %280, %cst_129 {dimension_numbers = #tpu.dot_dimension_numbers<[1], [0], [0], [1], [0, 0, 1, 1], [], []>} : vector<8x8xbf16>, vector<8x8xbf16>, vector<8x8xf32> -> vector<8x8xf32>
    %c0_130 = arith.constant 0 : index
    %c16_131 = arith.constant 16 : index
    %282 = vector.load %arg35[%c0_130, %c16_131] : memref<8x32xf32, #tpu.memory_space<vmem>>, vector<8x8xf32>
    tpu.vector_store %arg35[%c0_130, %c16_131], %281 {strides = array<i32>} : memref<8x32xf32, #tpu.memory_space<vmem>>, vector<8x8xf32>,
    %283 = vector.extract_strided_slice %220 {offsets = [0, 24], sizes = [8, 8], strides = [1, 1]} : vector<8x32xbf16> to vector<8x8xbf16>
    %284 = vector.extract_strided_slice %221 {offsets = [0, 24], sizes = [8, 8], strides = [1, 1]} : vector<8x32xbf16> to vector<8x8xbf16>
    %cst_132 = arith.constant dense<0.000000e+00> : vector<8x8xf32>
    %285 = tpu.matmul %283, %284, %cst_132 {dimension_numbers = #tpu.dot_dimension_numbers<[1], [1], [0], [0], [0, 0, 1, 0], [], []>} : vector<8x8xbf16>, vector<8x8xbf16>, vector<8x8xf32> -> vector<8x8xf32>
    %cst_133 = arith.constant 0.353553385 : f32
    %286 = vector.broadcast %cst_133 : f32 to vector<8x8xf32>
    %287 = arith.mulf %285, %286 : vector<8x8xf32>
    %288 = arith.addf %287, %22 : vector<8x8xf32>
    %cst_134 = arith.constant dense<0xFF800000> : vector<8xf32>
    %289 = vector.multi_reduction <maximumf>, %288, %cst_134 [1] : vector<8x8xf32> to vector<8xf32>
    %290 = vector.shape_cast %289 : vector<8xf32> to vector<8x1xf32>
    %291 = vector.broadcast %290 : vector<8x1xf32> to vector<8x8xf32>
    %292 = arith.subf %288, %291 : vector<8x8xf32>
    %293 = math.exp %292 : vector<8x8xf32>
    %cst_135 = arith.constant dense<0.000000e+00> : vector<8xf32>
    %294 = vector.multi_reduction <add>, %293, %cst_135 [1] : vector<8x8xf32> to vector<8xf32>
    %295 = vector.shape_cast %294 : vector<8xf32> to vector<8x1xf32>
    %296 = tpu.reciprocal %295 {approx = true} : vector<8x1xf32> -> vector<8x1xf32>
    %297 = vector.broadcast %296 : vector<8x1xf32> to vector<8x8xf32>
    %298 = arith.mulf %293, %297 : vector<8x8xf32>
    %299 = arith.truncf %298 : vector<8x8xf32> to vector<8x8xbf16>
    %300 = vector.extract_strided_slice %222 {offsets = [0, 24], sizes = [8, 8], strides = [1, 1]} : vector<8x32xbf16> to vector<8x8xbf16>
    %cst_136 = arith.constant dense<0.000000e+00> : vector<8x8xf32>
    %301 = tpu.matmul %299, %300, %cst_136 {dimension_numbers = #tpu.dot_dimension_numbers<[1], [0], [0], [1], [0, 0, 1, 1], [], []>} : vector<8x8xbf16>, vector<8x8xbf16>, vector<8x8xf32> -> vector<8x8xf32>
    %c0_137 = arith.constant 0 : index
    %c24_138 = arith.constant 24 : index
    %302 = vector.load %arg35[%c0_137, %c24_138] : memref<8x32xf32, #tpu.memory_space<vmem>>, vector<8x8xf32>
    tpu.vector_store %arg35[%c0_137, %c24_138], %301 {strides = array<i32>} : memref<8x32xf32, #tpu.memory_space<vmem>>, vector<8x8xf32>,
    %c0_139 = arith.constant 0 : index
    %c0_140 = arith.constant 0 : index
    %303 = vector.load %arg35[%c0_139, %c0_140] : memref<8x32xf32, #tpu.memory_space<vmem>>, vector<8x32xf32>
    %304 = arith.truncf %303 : vector<8x32xf32> to vector<8x32xbf16>
    %cst_141 = arith.constant dense<0.000000e+00> : vector<8x32xf32>
    %305 = tpu.matmul %304, %206, %cst_141 {dimension_numbers = #tpu.dot_dimension_numbers<[1], [0], [0], [1], [0, 0, 1, 1], [], []>} : vector<8x32xbf16>, vector<32x32xbf16>, vector<8x32xf32> -> vector<8x32xf32>
    %306 = vector.broadcast %207 : vector<1x32xf32> to vector<8x32xf32>
    %307 = arith.addf %305, %306 : vector<8x32xf32>
    %308 = arith.addf %175, %307 : vector<8x32xf32>
    %c0_142 = arith.constant 0 : index
    %c0_143 = arith.constant 0 : index
    %309 = vector.load %arg26[%c0_142, %c0_143] : memref<1x32xf32, #tpu.memory_space<vmem>>, vector<1x32xf32>
    %c0_144 = arith.constant 0 : index
    %c0_145 = arith.constant 0 : index
    %310 = vector.load %arg27[%c0_144, %c0_145] : memref<1x32xf32, #tpu.memory_space<vmem>>, vector<1x32xf32>
    %cst_146 = arith.constant dense<0.000000e+00> : vector<8xf32>
    %311 = vector.multi_reduction <add>, %308, %cst_146 [1] : vector<8x32xf32> to vector<8xf32>
    %312 = vector.shape_cast %311 : vector<8xf32> to vector<8x1xf32>
    %cst_147 = arith.constant 3.200000e+01 : f32
    %313 = vector.broadcast %cst_147 : f32 to vector<8x1xf32>
    %314 = arith.divf %312, %313 : vector<8x1xf32>
    %315 = vector.broadcast %314 : vector<8x1xf32> to vector<8x32xf32>
    %316 = arith.subf %308, %315 : vector<8x32xf32>
    %317 = arith.mulf %316, %316 : vector<8x32xf32>
    %cst_148 = arith.constant dense<0.000000e+00> : vector<8xf32>
    %318 = vector.multi_reduction <add>, %317, %cst_148 [1] : vector<8x32xf32> to vector<8xf32>
    %319 = vector.shape_cast %318 : vector<8xf32> to vector<8x1xf32>
    %cst_149 = arith.constant 0.0322580636 : f32
    %320 = vector.broadcast %cst_149 : f32 to vector<8x1xf32>
    %321 = arith.mulf %319, %320 : vector<8x1xf32>
    %322 = vector.broadcast %309 : vector<1x32xf32> to vector<8x32xf32>
    %323 = arith.mulf %322, %316 : vector<8x32xf32>
    %324 = math.sqrt %321 : vector<8x1xf32>
    %cst_150 = arith.constant 9.99999997E-7 : f32
    %325 = vector.broadcast %cst_150 : f32 to vector<8x1xf32>
    %326 = arith.addf %324, %325 : vector<8x1xf32>
    %327 = vector.broadcast %326 : vector<8x1xf32> to vector<8x32xf32>
    %328 = arith.divf %323, %327 : vector<8x32xf32>
    %329 = vector.broadcast %310 : vector<1x32xf32> to vector<8x32xf32>
    %330 = arith.addf %328, %329 : vector<8x32xf32>
    %331 = arith.truncf %330 : vector<8x32xf32> to vector<8x32xbf16>
    %c0_151 = arith.constant 0 : index
    %c0_152 = arith.constant 0 : index
    %332 = vector.load %arg28[%c0_151, %c0_152] : memref<32x64xbf16, #tpu.memory_space<vmem>>, vector<32x64xbf16>
    %cst_153 = arith.constant dense<0.000000e+00> : vector<8x64xf32>
    %333 = tpu.matmul %331, %332, %cst_153 {dimension_numbers = #tpu.dot_dimension_numbers<[1], [0], [0], [1], [0, 0, 1, 1], [], []>} : vector<8x32xbf16>, vector<32x64xbf16>, vector<8x64xf32> -> vector<8x64xf32>
    %c0_154 = arith.constant 0 : index
    %c0_155 = arith.constant 0 : index
    %334 = vector.load %arg29[%c0_154, %c0_155] : memref<1x64xf32, #tpu.memory_space<vmem>>, vector<1x64xf32>
    %335 = vector.broadcast %334 : vector<1x64xf32> to vector<8x64xf32>
    %336 = arith.addf %333, %335 : vector<8x64xf32>
    %cst_156 = arith.constant 0.000000e+00 : f32
    %337 = vector.broadcast %cst_156 : f32 to vector<8x64xf32>
    %338 = arith.maximumf %336, %337 : vector<8x64xf32>
    %339 = arith.truncf %338 : vector<8x64xf32> to vector<8x64xbf16>
    %c0_157 = arith.constant 0 : index
    %c0_158 = arith.constant 0 : index
    %340 = vector.load %arg30[%c0_157, %c0_158] : memref<64x32xbf16, #tpu.memory_space<vmem>>, vector<64x32xbf16>
    %cst_159 = arith.constant dense<0.000000e+00> : vector<8x32xf32>
    %341 = tpu.matmul %339, %340, %cst_159 {dimension_numbers = #tpu.dot_dimension_numbers<[1], [0], [0], [1], [0, 0, 1, 1], [], []>} : vector<8x64xbf16>, vector<64x32xbf16>, vector<8x32xf32> -> vector<8x32xf32>
    %c0_160 = arith.constant 0 : index
    %c0_161 = arith.constant 0 : index
    %342 = vector.load %arg31[%c0_160, %c0_161] : memref<1x32xf32, #tpu.memory_space<vmem>>, vector<1x32xf32>
    %343 = vector.broadcast %342 : vector<1x32xf32> to vector<8x32xf32>
    %344 = arith.addf %341, %343 : vector<8x32xf32>
    %345 = arith.addf %308, %344 : vector<8x32xf32>
    %c0_162 = arith.constant 0 : index
    %c0_163 = arith.constant 0 : index
    %c0_164 = arith.constant 0 : index
    %346 = vector.load %arg34[%c0_162, %c0_163, %c0_164] : memref<1x8x32xf32, #tpu.memory_space<vmem>>, vector<1x8x32xf32>
    %347 = vector.shape_cast %346 : vector<1x8x32xf32> to vector<8x32xf32>
    %348 = vector.shape_cast %345 : vector<8x32xf32> to vector<1x8x32xf32>
    tpu.vector_store %arg34[%c0_162, %c0_163, %c0_164], %348 {strides = array<i32>} : memref<1x8x32xf32, #tpu.memory_space<vmem>>, vector<1x8x32xf32>,
    return
  }
  func.func @transform_0(%arg0: i32, %arg1: i32) -> (i32, i32, i32) {
    %c0_i32 = arith.constant 0 : i32
    %c0_i32_0 = arith.constant 0 : i32
    %c0_i32_1 = arith.constant 0 : i32
    return %arg0, %c0_i32, %c0_i32_0 : i32, i32, i32
  }
  func.func @transform_1(%arg0: i32, %arg1: i32) -> (i32, i32, i32) {
    %c0_i32 = arith.constant 0 : i32
    %c0_i32_0 = arith.constant 0 : i32
    %c0_i32_1 = arith.constant 0 : i32
    return %arg0, %c0_i32, %c0_i32_0 : i32, i32, i32
  }
  func.func @transform_2(%arg0: i32, %arg1: i32) -> (i32, i32, i32) {
    %c0_i32 = arith.constant 0 : i32
    %c0_i32_0 = arith.constant 0 : i32
    return %arg0, %arg1, %c0_i32 : i32, i32, i32
  }
  func.func @transform_3(%arg0: i32, %arg1: i32) -> (i32, i32, i32) {
    %c0_i32 = arith.constant 0 : i32
    %c0_i32_0 = arith.constant 0 : i32
    return %arg0, %arg1, %c0_i32 : i32, i32, i32
  }
  func.func @transform_4(%arg0: i32, %arg1: i32) -> (i32, i32) {
    %c0_i32 = arith.constant 0 : i32
    %c0_i32_0 = arith.constant 0 : i32
    %c0_i32_1 = arith.constant 0 : i32
    return %c0_i32, %c0_i32_0 : i32, i32
  }
  func.func @transform_5(%arg0: i32, %arg1: i32) -> (i32, i32) {
    %c0_i32 = arith.constant 0 : i32
    %c0_i32_0 = arith.constant 0 : i32
    %c0_i32_1 = arith.constant 0 : i32
    return %c0_i32, %c0_i32_0 : i32, i32
  }
  func.func @transform_6(%arg0: i32, %arg1: i32) -> (i32, i32) {
    %c0_i32 = arith.constant 0 : i32
    %c0_i32_0 = arith.constant 0 : i32
    %c0_i32_1 = arith.constant 0 : i32
    return %c0_i32, %c0_i32_0 : i32, i32
  }
  func.func @transform_7(%arg0: i32, %arg1: i32) -> (i32, i32) {
    %c0_i32 = arith.constant 0 : i32
    %c0_i32_0 = arith.constant 0 : i32
    %c0_i32_1 = arith.constant 0 : i32
    return %c0_i32, %c0_i32_0 : i32, i32
  }
  func.func @transform_8(%arg0: i32, %arg1: i32) -> (i32, i32) {
    %c0_i32 = arith.constant 0 : i32
    %c0_i32_0 = arith.constant 0 : i32
    %c0_i32_1 = arith.constant 0 : i32
    return %c0_i32, %c0_i32_0 : i32, i32
  }
  func.func @transform_9(%arg0: i32, %arg1: i32) -> (i32, i32) {
    %c0_i32 = arith.constant 0 : i32
    %c0_i32_0 = arith.constant 0 : i32
    %c0_i32_1 = arith.constant 0 : i32
    return %c0_i32, %c0_i32_0 : i32, i32
  }
  func.func @transform_10(%arg0: i32, %arg1: i32) -> (i32, i32) {
    %c0_i32 = arith.constant 0 : i32
    %c0_i32_0 = arith.constant 0 : i32
    %c0_i32_1 = arith.constant 0 : i32
    return %c0_i32, %c0_i32_0 : i32, i32
  }
  func.func @transform_11(%arg0: i32, %arg1: i32) -> (i32, i32) {
    %c0_i32 = arith.constant 0 : i32
    %c0_i32_0 = arith.constant 0 : i32
    %c0_i32_1 = arith.constant 0 : i32
    return %c0_i32, %c0_i32_0 : i32, i32
  }
  func.func @transform_12(%arg0: i32, %arg1: i32) -> (i32, i32) {
    %c0_i32 = arith.constant 0 : i32
    %c0_i32_0 = arith.constant 0 : i32
    %c0_i32_1 = arith.constant 0 : i32
    return %c0_i32, %c0_i32_0 : i32, i32
  }
  func.func @transform_13(%arg0: i32, %arg1: i32) -> (i32, i32) {
    %c0_i32 = arith.constant 0 : i32
    %c0_i32_0 = arith.constant 0 : i32
    %c0_i32_1 = arith.constant 0 : i32
    return %c0_i32, %c0_i32_0 : i32, i32
  }
  func.func @transform_14(%arg0: i32, %arg1: i32) -> (i32, i32) {
    %c0_i32 = arith.constant 0 : i32
    %c0_i32_0 = arith.constant 0 : i32
    %c0_i32_1 = arith.constant 0 : i32
    return %c0_i32, %c0_i32_0 : i32, i32
  }
  func.func @transform_15(%arg0: i32, %arg1: i32) -> (i32, i32) {
    %c0_i32 = arith.constant 0 : i32
    %c0_i32_0 = arith.constant 0 : i32
    %c0_i32_1 = arith.constant 0 : i32
    return %c0_i32, %c0_i32_0 : i32, i32
  }
  func.func @transform_16(%arg0: i32, %arg1: i32) -> (i32, i32) {
    %c0_i32 = arith.constant 0 : i32
    %c0_i32_0 = arith.constant 0 : i32
    %c0_i32_1 = arith.constant 0 : i32
    return %c0_i32, %c0_i32_0 : i32, i32
  }
  func.func @transform_17(%arg0: i32, %arg1: i32) -> (i32, i32) {
    %c0_i32 = arith.constant 0 : i32
    %c0_i32_0 = arith.constant 0 : i32
    %c0_i32_1 = arith.constant 0 : i32
    return %c0_i32, %c0_i32_0 : i32, i32
  }
  func.func @transform_18(%arg0: i32, %arg1: i32) -> (i32, i32) {
    %c0_i32 = arith.constant 0 : i32
    %c0_i32_0 = arith.constant 0 : i32
    %c0_i32_1 = arith.constant 0 : i32
    return %c0_i32, %c0_i32_0 : i32, i32
  }
  func.func @transform_19(%arg0: i32, %arg1: i32) -> (i32, i32) {
    %c0_i32 = arith.constant 0 : i32
    %c0_i32_0 = arith.constant 0 : i32
    %c0_i32_1 = arith.constant 0 : i32
    return %c0_i32, %c0_i32_0 : i32, i32
  }
  func.func @transform_20(%arg0: i32, %arg1: i32) -> (i32, i32) {
    %c0_i32 = arith.constant 0 : i32
    %c0_i32_0 = arith.constant 0 : i32
    %c0_i32_1 = arith.constant 0 : i32
    return %c0_i32, %c0_i32_0 : i32, i32
  }
  func.func @transform_21(%arg0: i32, %arg1: i32) -> (i32, i32) {
    %c0_i32 = arith.constant 0 : i32
    %c0_i32_0 = arith.constant 0 : i32
    %c0_i32_1 = arith.constant 0 : i32
    return %c0_i32, %c0_i32_0 : i32, i32
  }
  func.func @transform_22(%arg0: i32, %arg1: i32) -> (i32, i32) {
    %c0_i32 = arith.constant 0 : i32
    %c0_i32_0 = arith.constant 0 : i32
    %c0_i32_1 = arith.constant 0 : i32
    return %c0_i32, %c0_i32_0 : i32, i32
  }
  func.func @transform_23(%arg0: i32, %arg1: i32) -> (i32, i32) {
    %c0_i32 = arith.constant 0 : i32
    %c0_i32_0 = arith.constant 0 : i32
    %c0_i32_1 = arith.constant 0 : i32
    return %c0_i32, %c0_i32_0 : i32, i32
  }
  func.func @transform_24(%arg0: i32, %arg1: i32) -> (i32, i32) {
    %c0_i32 = arith.constant 0 : i32
    %c0_i32_0 = arith.constant 0 : i32
    %c0_i32_1 = arith.constant 0 : i32
    return %c0_i32, %c0_i32_0 : i32, i32
  }
  func.func @transform_25(%arg0: i32, %arg1: i32) -> (i32, i32) {
    %c0_i32 = arith.constant 0 : i32
    %c0_i32_0 = arith.constant 0 : i32
    %c0_i32_1 = arith.constant 0 : i32
    return %c0_i32, %c0_i32_0 : i32, i32
  }
  func.func @transform_26(%arg0: i32, %arg1: i32) -> (i32, i32) {
    %c0_i32 = arith.constant 0 : i32
    %c0_i32_0 = arith.constant 0 : i32
    %c0_i32_1 = arith.constant 0 : i32
    return %c0_i32, %c0_i32_0 : i32, i32
  }
  func.func @transform_27(%arg0: i32, %arg1: i32) -> (i32, i32) {
    %c0_i32 = arith.constant 0 : i32
    %c0_i32_0 = arith.constant 0 : i32
    %c0_i32_1 = arith.constant 0 : i32
    return %c0_i32, %c0_i32_0 : i32, i32
  }
  func.func @transform_28(%arg0: i32, %arg1: i32) -> (i32, i32) {
    %c0_i32 = arith.constant 0 : i32
    %c0_i32_0 = arith.constant 0 : i32
    %c0_i32_1 = arith.constant 0 : i32
    return %c0_i32, %c0_i32_0 : i32, i32
  }
  func.func @transform_29(%arg0: i32, %arg1: i32) -> (i32, i32) {
    %c0_i32 = arith.constant 0 : i32
    %c0_i32_0 = arith.constant 0 : i32
    %c0_i32_1 = arith.constant 0 : i32
    return %c0_i32, %c0_i32_0 : i32, i32
  }
  func.func @transform_30(%arg0: i32, %arg1: i32) -> (i32, i32) {
    %c0_i32 = arith.constant 0 : i32
    %c0_i32_0 = arith.constant 0 : i32
    %c0_i32_1 = arith.constant 0 : i32
    return %c0_i32, %c0_i32_0 : i32, i32
  }
  func.func @transform_31(%arg0: i32, %arg1: i32) -> (i32, i32) {
    %c0_i32 = arith.constant 0 : i32
    %c0_i32_0 = arith.constant 0 : i32
    %c0_i32_1 = arith.constant 0 : i32
    return %c0_i32, %c0_i32_0 : i32, i32
  }
  func.func @transform_32(%arg0: i32, %arg1: i32) -> (i32, i32, i32) {
    %c0_i32 = arith.constant 0 : i32
    %c0_i32_0 = arith.constant 0 : i32
    return %arg0, %arg1, %c0_i32 : i32, i32, i32
  }
}

</mosaic_0001>

<llo_original>
// kernel: tpu_custom_call.1
$region0: #{tpu_custom_call.1}
  #allocation0 [shape = 'u32[]', space=smem, size = 0x4, offset = 0x4, fixed_abs, tag = 'smem constant byte address 0x4 - core index']
  #allocation1 [shape = 'u32[72,128]{1,0:T(1,128)}', space=vmem, size = 0x9000, scoped, tag = 'internal scratch']
  #allocation2 [shape = 'f32[8,32]{1,0:T(8,128)}', space=vmem, size = 0x1000, scoped, tag = 'scratch operand']
  %s0 = inlined_call_operand.smem [shape: u32[33], index: -1, kind: input, shape index: {}]
  %s1 = sld [smem:[%s0]]
  %s2 = scalar_lea.smem %s0, 1
  %s3 = sld [smem:[%s2]]
  %s4 = scalar_lea.smem %s0, 2
  %s5 = sld [smem:[%s4]]
  %s6 = scalar_lea.smem %s0, 3
  %s7 = sld [smem:[%s6]]
  %s8 = scalar_lea.smem %s0, 4
  %s9 = sld [smem:[%s8]]
  %s10 = scalar_lea.smem %s0, 5
  %s11 = sld [smem:[%s10]]
  %s12 = scalar_lea.smem %s0, 6
  %s13 = sld [smem:[%s12]]
  %s14 = scalar_lea.smem %s0, 7
  %s15 = sld [smem:[%s14]]
  %s16 = scalar_lea.smem %s0, 8
  %s17 = sld [smem:[%s16]]
  %s18 = scalar_lea.smem %s0, 9
  %s19 = sld [smem:[%s18]]
  %s20 = scalar_lea.smem %s0, 10
  %s21 = sld [smem:[%s20]]
  %s22 = scalar_lea.smem %s0, 11
  %s23 = sld [smem:[%s22]]
  %s24 = scalar_lea.smem %s0, 12
  %s25 = sld [smem:[%s24]]
  %s26 = scalar_lea.smem %s0, 13
  %s27 = sld [smem:[%s26]]
  %s28 = scalar_lea.smem %s0, 14
  %s29 = sld [smem:[%s28]]
  %s30 = scalar_lea.smem %s0, 15
  %s31 = sld [smem:[%s30]]
  %s32 = scalar_lea.smem %s0, 16
  %s33 = sld [smem:[%s32]]
  %s34 = scalar_lea.smem %s0, 17
  %s35 = sld [smem:[%s34]]
  %s36 = scalar_lea.smem %s0, 18
  %s37 = sld [smem:[%s36]]
  %s38 = scalar_lea.smem %s0, 19
  %s39 = sld [smem:[%s38]]
  %s40 = scalar_lea.smem %s0, 20
  %s41 = sld [smem:[%s40]]
  %s42 = scalar_lea.smem %s0, 21
  %s43 = sld [smem:[%s42]]
  %s44 = scalar_lea.smem %s0, 22
  %s45 = sld [smem:[%s44]]
  %s46 = scalar_lea.smem %s0, 23
  %s47 = sld [smem:[%s46]]
  %s48 = scalar_lea.smem %s0, 24
  %s49 = sld [smem:[%s48]]
  %s50 = scalar_lea.smem %s0, 25
  %s51 = sld [smem:[%s50]]
  %s52 = scalar_lea.smem %s0, 26
  %s53 = sld [smem:[%s52]]
  %s54 = scalar_lea.smem %s0, 27
  %s55 = sld [smem:[%s54]]
  %s56 = scalar_lea.smem %s0, 28
  %s57 = sld [smem:[%s56]]
  %s58 = scalar_lea.smem %s0, 29
  %s59 = sld [smem:[%s58]]
  %s60 = scalar_lea.smem %s0, 30
  %s61 = sld [smem:[%s60]]
  %s62 = scalar_lea.smem %s0, 31
  %s63 = sld [smem:[%s62]]
  %s64 = scalar_lea.smem %s0, 32
  %s65 = sld [smem:[%s64]]
  %s66 = sld [smem:[#allocation0]]
  $region221: #{tpu_custom_call.1} parent=0
    _
  %s68 = ssub.s32 1, %s66
  %s69 = scalar_select 0, %s68, %s66
  $region1: #{tpu_custom_call.1} parent=0
    #allocation3 [shape = 'u8[2048]{0}', space=vmem, size = 0x800, scoped, tag = 'input window, operand 2']
    #allocation4 [shape = 's32[2]{0}', space=sflag, size = 0x8, scoped, tag = 'scoped memory for tpu_custom_call.1']
    #allocation5 [shape = 's32[2]{0}', space=sflag, size = 0x8, scoped, tag = 'scoped memory for tpu_custom_call.1']
    #allocation6 [shape = 'u8[2048]{0}', space=vmem, size = 0x800, scoped, tag = 'input window, operand 3']
    #allocation7 [shape = 's32[2]{0}', space=sflag, size = 0x8, scoped, tag = 'scoped memory for tpu_custom_call.1']
    #allocation8 [shape = 'u8[8192]{0}', space=vmem, size = 0x2000, scoped, tag = 'input window, operand 8, single buffered']
    #allocation9 [shape = 'u8[8192]{0}', space=vmem, size = 0x2000, scoped, tag = 'input window, operand 10, single buffered']
    #allocation10 [shape = 's32[1]{0}', space=sflag, size = 0x4, scoped, tag = 'scoped memory for tpu_custom_call.1']
    #allocation11 [shape = 'u8[8192]{0}', space=vmem, size = 0x2000, scoped, tag = 'input window, operand 12, single buffered']
    #allocation12 [shape = 'u8[8192]{0}', space=vmem, size = 0x2000, scoped, tag = 'input window, operand 16, single buffered']
    #allocation13 [shape = 's32[1]{0}', space=sflag, size = 0x4, scoped, tag = 'scoped memory for tpu_custom_call.1']
    #allocation14 [shape = 'u8[8192]{0}', space=vmem, size = 0x2000, scoped, tag = 'input window, operand 18, single buffered']
    #allocation15 [shape = 'u8[8192]{0}', space=vmem, size = 0x2000, scoped, tag = 'input window, operand 20, single buffered']
    #allocation16 [shape = 's32[1]{0}', space=sflag, size = 0x4, scoped, tag = 'scoped memory for tpu_custom_call.1']
    #allocation17 [shape = 'u8[512]{0}', space=vmem, size = 0x400, scoped, tag = 'input window, operand 21, single buffered']
    #allocation18 [shape = 'u8[8192]{0}', space=vmem, size = 0x2000, scoped, tag = 'input window, operand 22, single buffered']
    #allocation19 [shape = 's32[1]{0}', space=sflag, size = 0x4, scoped, tag = 'scoped memory for tpu_custom_call.1']
    #allocation20 [shape = 'u8[512]{0}', space=vmem, size = 0x400, scoped, tag = 'input window, operand 23, single buffered']
    #allocation21 [shape = 'u8[512]{0}', space=vmem, size = 0x400, scoped, tag = 'input window, operand 24, single buffered']
    #allocation22 [shape = 's32[1]{0}', space=sflag, size = 0x4, scoped, tag = 'scoped memory for tpu_custom_call.1']
    #allocation23 [shape = 'u8[512]{0}', space=vmem, size = 0x400, scoped, tag = 'input window, operand 25, single buffered']
    #allocation24 [shape = 'u8[8192]{0}', space=vmem, size = 0x2000, scoped, tag = 'input window, operand 26, single buffered']
    #allocation25 [shape = 's32[1]{0}', space=sflag, size = 0x4, scoped, tag = 'scoped memory for tpu_custom_call.1']
    #allocation26 [shape = 'u8[512]{0}', space=vmem, size = 0x400, scoped, tag = 'input window, operand 27, single buffered']
    #allocation27 [shape = 'u8[8192]{0}', space=vmem, size = 0x2000, scoped, tag = 'output window, operand 0']
    %70 = vsyncpa [#allocation4], 0
    %s71 = scalar_lea.sflag [#allocation4], 1
    %72 = vsyncpa %s71, 0
    %73 = vsyncpa [#allocation7], 0
    %s74 = scalar_lea.sflag [#allocation7], 1
    %75 = vsyncpa %s74, 0
    %76 = vsyncpa [#allocation10], 0
    %77 = vsyncpa [#allocation13], 0
    %78 = vsyncpa [#allocation16], 0
    %79 = vsyncpa [#allocation19], 0
    %80 = vsyncpa [#allocation22], 0
    %81 = vsyncpa [#allocation25], 0
    %82 = vsyncpa [#allocation5], 0
    %s83 = scalar_lea.sflag [#allocation5], 1
    %84 = vsyncpa %s83, 0
    loop: start=0, step=1, limit=4
    $region2: #{tpu_custom_call.1} parent=1 // loop_pre_header
      _
    $region3: #{tpu_custom_call.1} parent=1 // loop_header
      %s86 = sphi 0, %s90
      %p87 = scmp.ge.s32.totalorder %s86, 4
      %s93 = sphi 0, %s105
      %s94 = sphi 0, %s101
      %s95 = sphi 0, %s93
      %s96 = sphi 0, %s94
      %s97 = sphi 0, %s95
      %s98 = sphi 0, %s96
      %s108 = sphi 0, %s110
      %s111 = sphi 0, %s108
      %s112 = sphi 0, %s111
      %s128 = sphi 0, %s112
      %s134 = sphi 0, %s136
      %s137 = sphi 0, %s134
      %s138 = sphi 0, %s137
      %s154 = sphi 0, %s138
      %s162 = sphi 0, %s164
      %s165 = sphi 0, %s162
      %s166 = sphi 0, %s165
      %s182 = sphi 0, %s166
      %s190 = sphi 0, %s192
      %s193 = sphi 0, %s190
      %s194 = sphi 0, %s193
      %s210 = sphi 0, %s194
      %s214 = sphi 0, %s214
      %s216 = sphi 0, %s214
      %s217 = sphi 0, %s216
      %s231 = sphi 0, %s217
      %s235 = sphi 0, %s235
      %s237 = sphi 0, %s235
      %s238 = sphi 0, %s237
      %s252 = sphi 0, %s238
      %s256 = sphi 0, %s256
      %s258 = sphi 0, %s256
      %s259 = sphi 0, %s258
      %s273 = sphi 0, %s259
      %s277 = sphi 0, %s277
      %s279 = sphi 0, %s277
      %s280 = sphi 0, %s279
      %s294 = sphi 0, %s280
      %s298 = sphi 0, %s298
      %s300 = sphi 0, %s298
      %s301 = sphi 0, %s300
      %s315 = sphi 0, %s301
      %s319 = sphi 0, %s319
      %s321 = sphi 0, %s319
      %s322 = sphi 0, %s321
      %s336 = sphi 0, %s322
      %s340 = sphi 0, %s340
      %s342 = sphi 0, %s340
      %s343 = sphi 0, %s342
      %s357 = sphi 0, %s343
      %s361 = sphi 0, %s361
      %s363 = sphi 0, %s361
      %s364 = sphi 0, %s363
      %s378 = sphi 0, %s364
      %s382 = sphi 0, %s382
      %s384 = sphi 0, %s382
      %s385 = sphi 0, %s384
      %s399 = sphi 0, %s385
      %s403 = sphi 0, %s403
      %s405 = sphi 0, %s403
      %s406 = sphi 0, %s405
      %s420 = sphi 0, %s406
      %s424 = sphi 0, %s424
      %s426 = sphi 0, %s424
      %s427 = sphi 0, %s426
      %s441 = sphi 0, %s427
      %s445 = sphi 0, %s445
      %s447 = sphi 0, %s445
      %s448 = sphi 0, %s447
      %s462 = sphi 0, %s448
      %s466 = sphi 0, %s466
      %s468 = sphi 0, %s466
      %s469 = sphi 0, %s468
      %s483 = sphi 0, %s469
      %s487 = sphi 0, %s487
      %s489 = sphi 0, %s487
      %s490 = sphi 0, %s489
      %s504 = sphi 0, %s490
      %s508 = sphi 0, %s508
      %s510 = sphi 0, %s508
      %s511 = sphi 0, %s510
      %s525 = sphi 0, %s511
      %s529 = sphi 0, %s529
      %s531 = sphi 0, %s529
      %s532 = sphi 0, %s531
      %s546 = sphi 0, %s532
      %s550 = sphi 0, %s550
      %s552 = sphi 0, %s550
      %s553 = sphi 0, %s552
      %s567 = sphi 0, %s553
      %s571 = sphi 0, %s571
      %s573 = sphi 0, %s571
      %s574 = sphi 0, %s573
      %s588 = sphi 0, %s574
      %s592 = sphi 0, %s592
      %s594 = sphi 0, %s592
      %s595 = sphi 0, %s594
      %s609 = sphi 0, %s595
      %s613 = sphi 0, %s613
      %s615 = sphi 0, %s613
      %s616 = sphi 0, %s615
      %s630 = sphi 0, %s616
      %s634 = sphi 0, %s634
      %s636 = sphi 0, %s634
      %s637 = sphi 0, %s636
      %s651 = sphi 0, %s637
      %s655 = sphi 0, %s655
      %s657 = sphi 0, %s655
      %s658 = sphi 0, %s657
      %s672 = sphi 0, %s658
      %s676 = sphi 0, %s676
      %s678 = sphi 0, %s676
      %s679 = sphi 0, %s678
      %s693 = sphi 0, %s679
      %s697 = sphi 0, %s697
      %s699 = sphi 0, %s697
      %s700 = sphi 0, %s699
      %s714 = sphi 0, %s700
      %s718 = sphi 0, %s718
      %s720 = sphi 0, %s718
      %s721 = sphi 0, %s720
      %s735 = sphi 0, %s721
      %s739 = sphi 0, %s739
      %s741 = sphi 0, %s739
      %s742 = sphi 0, %s741
      %s756 = sphi 0, %s742
      %s760 = sphi 0, %s760
      %s762 = sphi 0, %s760
      %s763 = sphi 0, %s762
      %s777 = sphi 0, %s763
      %s781 = sphi 0, %s781
      %s783 = sphi 0, %s781
      %s784 = sphi 0, %s783
      %s798 = sphi 0, %s784
      %s806 = sphi 0, %s808
      %s809 = sphi 0, %s806
      %s810 = sphi 0, %s809
      %s826 = sphi 0, %s810
    $region4: #{tpu_custom_call.1} parent=1 // loop_header_branch
      %89 = sbr.rel (%p87) target = $region8
    $region5: #{tpu_custom_call.1} parent=1 // loop_body
      %s91 = ssub.s32 %s86, 1
      %s92 = ssub.s32 %s86, 2
      %s99 = sadd.s32 1, %s94
      %p100 = scmp.ge.s32.totalorder %s99, 1
      %s101 = scalar_select %p100, 0, %s99
      %s102 = sadd.s32 1, %s93
      %s103 = scalar_select %p100, %s102, %s93
      %p104 = scmp.ge.s32.totalorder %s103, 2
      %s105 = scalar_select %p104, 0, %s103
      %s106 = ssub.s32 %s93, %s105
      %p107 = scmp.eq.s32.totalorder %s106, 0
      %s109 = sadd.s32 %s108, 1
      %s110 = scalar_select %p107, %s108, %s109
      %p113 = pneg %p107
      %p114 = scmp.eq.s32.totalorder %s86, 1
      %p115 = por %p113, %p114
      %p116 = scmp.ne.s32.totalorder %s108, %s111
      %p117 = scmp.eq.s32.totalorder %s86, 0
      %p118 = por %p116, %p117
      %p119 = scmp.ne.s32.totalorder %s108, %s111
      %p120 = scmp.eq.s32.totalorder %s91, 1
      %p121 = por %p119, %p120
      %p122 = scmp.ne.s32.totalorder %s111, %s112
      %p123 = scmp.eq.s32.totalorder %s91, 0
      %p124 = por %p122, %p123
      %p125 = scmp.ne.s32.totalorder %s111, %s112
      %p126 = scmp.eq.s32.totalorder %s92, 1
      %p127 = por %p125, %p126
      %p129 = scmp.ne.s32.totalorder %s112, %s128
      %p130 = scmp.eq.s32.totalorder %s92, 0
      %p131 = por %p129, %p130
      %s132 = ssub.s32 %s93, %s105
      %p133 = scmp.eq.s32.totalorder %s132, 0
      %s135 = sadd.s32 %s134, 1
      %s136 = scalar_select %p133, %s134, %s135
      %p139 = pneg %p133
      %p140 = scmp.eq.s32.totalorder %s86, 1
      %p141 = por %p139, %p140
      %p142 = scmp.ne.s32.totalorder %s134, %s137
      %p143 = scmp.eq.s32.totalorder %s86, 0
      %p144 = por %p142, %p143
      %p145 = scmp.ne.s32.totalorder %s134, %s137
      %p146 = scmp.eq.s32.totalorder %s91, 1
      %p147 = por %p145, %p146
      %p148 = scmp.ne.s32.totalorder %s137, %s138
      %p149 = scmp.eq.s32.totalorder %s91, 0
      %p150 = por %p148, %p149
      %p151 = scmp.ne.s32.totalorder %s137, %s138
      %p152 = scmp.eq.s32.totalorder %s92, 1
      %p153 = por %p151, %p152
      %p155 = scmp.ne.s32.totalorder %s138, %s154
      %p156 = scmp.eq.s32.totalorder %s92, 0
      %p157 = por %p155, %p156
      %s158 = ssub.s32 %s93, %s105
      %s159 = ssub.s32 %s94, %s101
      %s160 = sor.u32 %s158, %s159
      %p161 = scmp.eq.s32.totalorder %s160, 0
      %s163 = sadd.s32 %s162, 1
      %s164 = scalar_select %p161, %s162, %s163
      %p167 = pneg %p161
      %p168 = scmp.eq.s32.totalorder %s86, 1
      %p169 = por %p167, %p168
      %p170 = scmp.ne.s32.totalorder %s162, %s165
      %p171 = scmp.eq.s32.totalorder %s86, 0
      %p172 = por %p170, %p171
      %p173 = scmp.ne.s32.totalorder %s162, %s165
      %p174 = scmp.eq.s32.totalorder %s91, 1
      %p175 = por %p173, %p174
      %p176 = scmp.ne.s32.totalorder %s165, %s166
      %p177 = scmp.eq.s32.totalorder %s91, 0
      %p178 = por %p176, %p177
      %p179 = scmp.ne.s32.totalorder %s165, %s166
      %p180 = scmp.eq.s32.totalorder %s92, 1
      %p181 = por %p179, %p180
      %p183 = scmp.ne.s32.totalorder %s166, %s182
      %p184 = scmp.eq.s32.totalorder %s92, 0
      %p185 = por %p183, %p184
      %s186 = ssub.s32 %s93, %s105
      %s187 = ssub.s32 %s94, %s101
      %s188 = sor.u32 %s186, %s187
      %p189 = scmp.eq.s32.totalorder %s188, 0
      %s191 = sadd.s32 %s190, 1
      %s192 = scalar_select %p189, %s190, %s191
      %p195 = pneg %p189
      %p196 = scmp.eq.s32.totalorder %s86, 1
      %p197 = por %p195, %p196
      %p198 = scmp.ne.s32.totalorder %s190, %s193
      %p199 = scmp.eq.s32.totalorder %s86, 0
      %p200 = por %p198, %p199
      %p201 = scmp.ne.s32.totalorder %s190, %s193
      %p202 = scmp.eq.s32.totalorder %s91, 1
      %p203 = por %p201, %p202
      %p204 = scmp.ne.s32.totalorder %s193, %s194
      %p205 = scmp.eq.s32.totalorder %s91, 0
      %p206 = por %p204, %p205
      %p207 = scmp.ne.s32.totalorder %s193, %s194
      %p208 = scmp.eq.s32.totalorder %s92, 1
      %p209 = por %p207, %p208
      %p211 = scmp.ne.s32.totalorder %s194, %s210
      %p212 = scmp.eq.s32.totalorder %s92, 0
      %p213 = por %p211, %p212
      %s215 = sadd.s32 %s214, 1
      %p218 = scmp.eq.s32.totalorder %s86, 1
      %p219 = scmp.ne.s32.totalorder %s214, %s216
      %p220 = scmp.eq.s32.totalorder %s86, 0
      %p221 = por %p219, %p220
      %p222 = scmp.ne.s32.totalorder %s214, %s216
      %p223 = scmp.eq.s32.totalorder %s91, 1
      %p224 = por %p222, %p223
      %p225 = scmp.ne.s32.totalorder %s216, %s217
      %p226 = scmp.eq.s32.totalorder %s91, 0
      %p227 = por %p225, %p226
      %p228 = scmp.ne.s32.totalorder %s216, %s217
      %p229 = scmp.eq.s32.totalorder %s92, 1
      %p230 = por %p228, %p229
      %p232 = scmp.ne.s32.totalorder %s217, %s231
      %p233 = scmp.eq.s32.totalorder %s92, 0
      %p234 = por %p232, %p233
      %s236 = sadd.s32 %s235, 1
      %p239 = scmp.eq.s32.totalorder %s86, 1
      %p240 = scmp.ne.s32.totalorder %s235, %s237
      %p241 = scmp.eq.s32.totalorder %s86, 0
      %p242 = por %p240, %p241
      %p243 = scmp.ne.s32.totalorder %s235, %s237
      %p244 = scmp.eq.s32.totalorder %s91, 1
      %p245 = por %p243, %p244
      %p246 = scmp.ne.s32.totalorder %s237, %s238
      %p247 = scmp.eq.s32.totalorder %s91, 0
      %p248 = por %p246, %p247
      %p249 = scmp.ne.s32.totalorder %s237, %s238
      %p250 = scmp.eq.s32.totalorder %s92, 1
      %p251 = por %p249, %p250
      %p253 = scmp.ne.s32.totalorder %s238, %s252
      %p254 = scmp.eq.s32.totalorder %s92, 0
      %p255 = por %p253, %p254
      %s257 = sadd.s32 %s256, 1
      %p260 = scmp.eq.s32.totalorder %s86, 1
      %p261 = scmp.ne.s32.totalorder %s256, %s258
      %p262 = scmp.eq.s32.totalorder %s86, 0
      %p263 = por %p261, %p262
      %p264 = scmp.ne.s32.totalorder %s256, %s258
      %p265 = scmp.eq.s32.totalorder %s91, 1
      %p266 = por %p264, %p265
      %p267 = scmp.ne.s32.totalorder %s258, %s259
      %p268 = scmp.eq.s32.totalorder %s91, 0
      %p269 = por %p267, %p268
      %p270 = scmp.ne.s32.totalorder %s258, %s259
      %p271 = scmp.eq.s32.totalorder %s92, 1
      %p272 = por %p270, %p271
      %p274 = scmp.ne.s32.totalorder %s259, %s273
      %p275 = scmp.eq.s32.totalorder %s92, 0
      %p276 = por %p274, %p275
      %s278 = sadd.s32 %s277, 1
      %p281 = scmp.eq.s32.totalorder %s86, 1
      %p282 = scmp.ne.s32.totalorder %s277, %s279
      %p283 = scmp.eq.s32.totalorder %s86, 0
      %p284 = por %p282, %p283
      %p285 = scmp.ne.s32.totalorder %s277, %s279
      %p286 = scmp.eq.s32.totalorder %s91, 1
      %p287 = por %p285, %p286
      %p288 = scmp.ne.s32.totalorder %s279, %s280
      %p289 = scmp.eq.s32.totalorder %s91, 0
      %p290 = por %p288, %p289
      %p291 = scmp.ne.s32.totalorder %s279, %s280
      %p292 = scmp.eq.s32.totalorder %s92, 1
      %p293 = por %p291, %p292
      %p295 = scmp.ne.s32.totalorder %s280, %s294
      %p296 = scmp.eq.s32.totalorder %s92, 0
      %p297 = por %p295, %p296
      %s299 = sadd.s32 %s298, 1
      %p302 = scmp.eq.s32.totalorder %s86, 1
      %p303 = scmp.ne.s32.totalorder %s298, %s300
      %p304 = scmp.eq.s32.totalorder %s86, 0
      %p305 = por %p303, %p304
      %p306 = scmp.ne.s32.totalorder %s298, %s300
      %p307 = scmp.eq.s32.totalorder %s91, 1
      %p308 = por %p306, %p307
      %p309 = scmp.ne.s32.totalorder %s300, %s301
      %p310 = scmp.eq.s32.totalorder %s91, 0
      %p311 = por %p309, %p310
      %p312 = scmp.ne.s32.totalorder %s300, %s301
      %p313 = scmp.eq.s32.totalorder %s92, 1
      %p314 = por %p312, %p313
      %p316 = scmp.ne.s32.totalorder %s301, %s315
      %p317 = scmp.eq.s32.totalorder %s92, 0
      %p318 = por %p316, %p317
      %s320 = sadd.s32 %s319, 1
      %p323 = scmp.eq.s32.totalorder %s86, 1
      %p324 = scmp.ne.s32.totalorder %s319, %s321
      %p325 = scmp.eq.s32.totalorder %s86, 0
      %p326 = por %p324, %p325
      %p327 = scmp.ne.s32.totalorder %s319, %s321
      %p328 = scmp.eq.s32.totalorder %s91, 1
      %p329 = por %p327, %p328
      %p330 = scmp.ne.s32.totalorder %s321, %s322
      %p331 = scmp.eq.s32.totalorder %s91, 0
      %p332 = por %p330, %p331
      %p333 = scmp.ne.s32.totalorder %s321, %s322
      %p334 = scmp.eq.s32.totalorder %s92, 1
      %p335 = por %p333, %p334
      %p337 = scmp.ne.s32.totalorder %s322, %s336
      %p338 = scmp.eq.s32.totalorder %s92, 0
      %p339 = por %p337, %p338
      %s341 = sadd.s32 %s340, 1
      %p344 = scmp.eq.s32.totalorder %s86, 1
      %p345 = scmp.ne.s32.totalorder %s340, %s342
      %p346 = scmp.eq.s32.totalorder %s86, 0
      %p347 = por %p345, %p346
      %p348 = scmp.ne.s32.totalorder %s340, %s342
      %p349 = scmp.eq.s32.totalorder %s91, 1
      %p350 = por %p348, %p349
      %p351 = scmp.ne.s32.totalorder %s342, %s343
      %p352 = scmp.eq.s32.totalorder %s91, 0
      %p353 = por %p351, %p352
      %p354 = scmp.ne.s32.totalorder %s342, %s343
      %p355 = scmp.eq.s32.totalorder %s92, 1
      %p356 = por %p354, %p355
      %p358 = scmp.ne.s32.totalorder %s343, %s357
      %p359 = scmp.eq.s32.totalorder %s92, 0
      %p360 = por %p358, %p359
      %s362 = sadd.s32 %s361, 1
      %p365 = scmp.eq.s32.totalorder %s86, 1
      %p366 = scmp.ne.s32.totalorder %s361, %s363
      %p367 = scmp.eq.s32.totalorder %s86, 0
      %p368 = por %p366, %p367
      %p369 = scmp.ne.s32.totalorder %s361, %s363
      %p370 = scmp.eq.s32.totalorder %s91, 1
      %p371 = por %p369, %p370
      %p372 = scmp.ne.s32.totalorder %s363, %s364
      %p373 = scmp.eq.s32.totalorder %s91, 0
      %p374 = por %p372, %p373
      %p375 = scmp.ne.s32.totalorder %s363, %s364
      %p376 = scmp.eq.s32.totalorder %s92, 1
      %p377 = por %p375, %p376
      %p379 = scmp.ne.s32.totalorder %s364, %s378
      %p380 = scmp.eq.s32.totalorder %s92, 0
      %p381 = por %p379, %p380
      %s383 = sadd.s32 %s382, 1
      %p386 = scmp.eq.s32.totalorder %s86, 1
      %p387 = scmp.ne.s32.totalorder %s382, %s384
      %p388 = scmp.eq.s32.totalorder %s86, 0
      %p389 = por %p387, %p388
      %p390 = scmp.ne.s32.totalorder %s382, %s384
      %p391 = scmp.eq.s32.totalorder %s91, 1
      %p392 = por %p390, %p391
      %p393 = scmp.ne.s32.totalorder %s384, %s385
      %p394 = scmp.eq.s32.totalorder %s91, 0
      %p395 = por %p393, %p394
      %p396 = scmp.ne.s32.totalorder %s384, %s385
      %p397 = scmp.eq.s32.totalorder %s92, 1
      %p398 = por %p396, %p397
      %p400 = scmp.ne.s32.totalorder %s385, %s399
      %p401 = scmp.eq.s32.totalorder %s92, 0
      %p402 = por %p400, %p401
      %s404 = sadd.s32 %s403, 1
      %p407 = scmp.eq.s32.totalorder %s86, 1
      %p408 = scmp.ne.s32.totalorder %s403, %s405
      %p409 = scmp.eq.s32.totalorder %s86, 0
      %p410 = por %p408, %p409
      %p411 = scmp.ne.s32.totalorder %s403, %s405
      %p412 = scmp.eq.s32.totalorder %s91, 1
      %p413 = por %p411, %p412
      %p414 = scmp.ne.s32.totalorder %s405, %s406
      %p415 = scmp.eq.s32.totalorder %s91, 0
      %p416 = por %p414, %p415
      %p417 = scmp.ne.s32.totalorder %s405, %s406
      %p418 = scmp.eq.s32.totalorder %s92, 1
      %p419 = por %p417, %p418
      %p421 = scmp.ne.s32.totalorder %s406, %s420
      %p422 = scmp.eq.s32.totalorder %s92, 0
      %p423 = por %p421, %p422
      %s425 = sadd.s32 %s424, 1
      %p428 = scmp.eq.s32.totalorder %s86, 1
      %p429 = scmp.ne.s32.totalorder %s424, %s426
      %p430 = scmp.eq.s32.totalorder %s86, 0
      %p431 = por %p429, %p430
      %p432 = scmp.ne.s32.totalorder %s424, %s426
      %p433 = scmp.eq.s32.totalorder %s91, 1
      %p434 = por %p432, %p433
      %p435 = scmp.ne.s32.totalorder %s426, %s427
      %p436 = scmp.eq.s32.totalorder %s91, 0
      %p437 = por %p435, %p436
      %p438 = scmp.ne.s32.totalorder %s426, %s427
      %p439 = scmp.eq.s32.totalorder %s92, 1
      %p440 = por %p438, %p439
      %p442 = scmp.ne.s32.totalorder %s427, %s441
      %p443 = scmp.eq.s32.totalorder %s92, 0
      %p444 = por %p442, %p443
      %s446 = sadd.s32 %s445, 1
      %p449 = scmp.eq.s32.totalorder %s86, 1
      %p450 = scmp.ne.s32.totalorder %s445, %s447
      %p451 = scmp.eq.s32.totalorder %s86, 0
      %p452 = por %p450, %p451
      %p453 = scmp.ne.s32.totalorder %s445, %s447
      %p454 = scmp.eq.s32.totalorder %s91, 1
      %p455 = por %p453, %p454
      %p456 = scmp.ne.s32.totalorder %s447, %s448
      %p457 = scmp.eq.s32.totalorder %s91, 0
      %p458 = por %p456, %p457
      %p459 = scmp.ne.s32.totalorder %s447, %s448
      %p460 = scmp.eq.s32.totalorder %s92, 1
      %p461 = por %p459, %p460
      %p463 = scmp.ne.s32.totalorder %s448, %s462
      %p464 = scmp.eq.s32.totalorder %s92, 0
      %p465 = por %p463, %p464
      %s467 = sadd.s32 %s466, 1
      %p470 = scmp.eq.s32.totalorder %s86, 1
      %p471 = scmp.ne.s32.totalorder %s466, %s468
      %p472 = scmp.eq.s32.totalorder %s86, 0
      %p473 = por %p471, %p472
      %p474 = scmp.ne.s32.totalorder %s466, %s468
      %p475 = scmp.eq.s32.totalorder %s91, 1
      %p476 = por %p474, %p475
      %p477 = scmp.ne.s32.totalorder %s468, %s469
      %p478 = scmp.eq.s32.totalorder %s91, 0
      %p479 = por %p477, %p478
      %p480 = scmp.ne.s32.totalorder %s468, %s469
      %p481 = scmp.eq.s32.totalorder %s92, 1
      %p482 = por %p480, %p481
      %p484 = scmp.ne.s32.totalorder %s469, %s483
      %p485 = scmp.eq.s32.totalorder %s92, 0
      %p486 = por %p484, %p485
      %s488 = sadd.s32 %s487, 1
      %p491 = scmp.eq.s32.totalorder %s86, 1
      %p492 = scmp.ne.s32.totalorder %s487, %s489
      %p493 = scmp.eq.s32.totalorder %s86, 0
      %p494 = por %p492, %p493
      %p495 = scmp.ne.s32.totalorder %s487, %s489
      %p496 = scmp.eq.s32.totalorder %s91, 1
      %p497 = por %p495, %p496
      %p498 = scmp.ne.s32.totalorder %s489, %s490
      %p499 = scmp.eq.s32.totalorder %s91, 0
      %p500 = por %p498, %p499
      %p501 = scmp.ne.s32.totalorder %s489, %s490
      %p502 = scmp.eq.s32.totalorder %s92, 1
      %p503 = por %p501, %p502
      %p505 = scmp.ne.s32.totalorder %s490, %s504
      %p506 = scmp.eq.s32.totalorder %s92, 0
      %p507 = por %p505, %p506
      %s509 = sadd.s32 %s508, 1
      %p512 = scmp.eq.s32.totalorder %s86, 1
      %p513 = scmp.ne.s32.totalorder %s508, %s510
      %p514 = scmp.eq.s32.totalorder %s86, 0
      %p515 = por %p513, %p514
      %p516 = scmp.ne.s32.totalorder %s508, %s510
      %p517 = scmp.eq.s32.totalorder %s91, 1
      %p518 = por %p516, %p517
      %p519 = scmp.ne.s32.totalorder %s510, %s511
      %p520 = scmp.eq.s32.totalorder %s91, 0
      %p521 = por %p519, %p520
      %p522 = scmp.ne.s32.totalorder %s510, %s511
      %p523 = scmp.eq.s32.totalorder %s92, 1
      %p524 = por %p522, %p523
      %p526 = scmp.ne.s32.totalorder %s511, %s525
      %p527 = scmp.eq.s32.totalorder %s92, 0
      %p528 = por %p526, %p527
      %s530 = sadd.s32 %s529, 1
      %p533 = scmp.eq.s32.totalorder %s86, 1
      %p534 = scmp.ne.s32.totalorder %s529, %s531
      %p535 = scmp.eq.s32.totalorder %s86, 0
      %p536 = por %p534, %p535
      %p537 = scmp.ne.s32.totalorder %s529, %s531
      %p538 = scmp.eq.s32.totalorder %s91, 1
      %p539 = por %p537, %p538
      %p540 = scmp.ne.s32.totalorder %s531, %s532
      %p541 = scmp.eq.s32.totalorder %s91, 0
      %p542 = por %p540, %p541
      %p543 = scmp.ne.s32.totalorder %s531, %s532
      %p544 = scmp.eq.s32.totalorder %s92, 1
      %p545 = por %p543, %p544
      %p547 = scmp.ne.s32.totalorder %s532, %s546
      %p548 = scmp.eq.s32.totalorder %s92, 0
      %p549 = por %p547, %p548
      %s551 = sadd.s32 %s550, 1
      %p554 = scmp.eq.s32.totalorder %s86, 1
      %p555 = scmp.ne.s32.totalorder %s550, %s552
      %p556 = scmp.eq.s32.totalorder %s86, 0
      %p557 = por %p555, %p556
      %p558 = scmp.ne.s32.totalorder %s550, %s552
      %p559 = scmp.eq.s32.totalorder %s91, 1
      %p560 = por %p558, %p559
      %p561 = scmp.ne.s32.totalorder %s552, %s553
      %p562 = scmp.eq.s32.totalorder %s91, 0
      %p563 = por %p561, %p562
      %p564 = scmp.ne.s32.totalorder %s552, %s553
      %p565 = scmp.eq.s32.totalorder %s92, 1
      %p566 = por %p564, %p565
      %p568 = scmp.ne.s32.totalorder %s553, %s567
      %p569 = scmp.eq.s32.totalorder %s92, 0
      %p570 = por %p568, %p569
      %s572 = sadd.s32 %s571, 1
      %p575 = scmp.eq.s32.totalorder %s86, 1
      %p576 = scmp.ne.s32.totalorder %s571, %s573
      %p577 = scmp.eq.s32.totalorder %s86, 0
      %p578 = por %p576, %p577
      %p579 = scmp.ne.s32.totalorder %s571, %s573
      %p580 = scmp.eq.s32.totalorder %s91, 1
      %p581 = por %p579, %p580
      %p582 = scmp.ne.s32.totalorder %s573, %s574
      %p583 = scmp.eq.s32.totalorder %s91, 0
      %p584 = por %p582, %p583
      %p585 = scmp.ne.s32.totalorder %s573, %s574
      %p586 = scmp.eq.s32.totalorder %s92, 1
      %p587 = por %p585, %p586
      %p589 = scmp.ne.s32.totalorder %s574, %s588
      %p590 = scmp.eq.s32.totalorder %s92, 0
      %p591 = por %p589, %p590
      %s593 = sadd.s32 %s592, 1
      %p596 = scmp.eq.s32.totalorder %s86, 1
      %p597 = scmp.ne.s32.totalorder %s592, %s594
      %p598 = scmp.eq.s32.totalorder %s86, 0
      %p599 = por %p597, %p598
      %p600 = scmp.ne.s32.totalorder %s592, %s594
      %p601 = scmp.eq.s32.totalorder %s91, 1
      %p602 = por %p600, %p601
      %p603 = scmp.ne.s32.totalorder %s594, %s595
      %p604 = scmp.eq.s32.totalorder %s91, 0
      %p605 = por %p603, %p604
      %p606 = scmp.ne.s32.totalorder %s594, %s595
      %p607 = scmp.eq.s32.totalorder %s92, 1
      %p608 = por %p606, %p607
      %p610 = scmp.ne.s32.totalorder %s595, %s609
      %p611 = scmp.eq.s32.totalorder %s92, 0
      %p612 = por %p610, %p611
      %s614 = sadd.s32 %s613, 1
      %p617 = scmp.eq.s32.totalorder %s86, 1
      %p618 = scmp.ne.s32.totalorder %s613, %s615
      %p619 = scmp.eq.s32.totalorder %s86, 0
      %p620 = por %p618, %p619
      %p621 = scmp.ne.s32.totalorder %s613, %s615
      %p622 = scmp.eq.s32.totalorder %s91, 1
      %p623 = por %p621, %p622
      %p624 = scmp.ne.s32.totalorder %s615, %s616
      %p625 = scmp.eq.s32.totalorder %s91, 0
      %p626 = por %p624, %p625
      %p627 = scmp.ne.s32.totalorder %s615, %s616
      %p628 = scmp.eq.s32.totalorder %s92, 1
      %p629 = por %p627, %p628
      %p631 = scmp.ne.s32.totalorder %s616, %s630
      %p632 = scmp.eq.s32.totalorder %s92, 0
      %p633 = por %p631, %p632
      %s635 = sadd.s32 %s634, 1
      %p638 = scmp.eq.s32.totalorder %s86, 1
      %p639 = scmp.ne.s32.totalorder %s634, %s636
      %p640 = scmp.eq.s32.totalorder %s86, 0
      %p641 = por %p639, %p640
      %p642 = scmp.ne.s32.totalorder %s634, %s636
      %p643 = scmp.eq.s32.totalorder %s91, 1
      %p644 = por %p642, %p643
      %p645 = scmp.ne.s32.totalorder %s636, %s637
      %p646 = scmp.eq.s32.totalorder %s91, 0
      %p647 = por %p645, %p646
      %p648 = scmp.ne.s32.totalorder %s636, %s637
      %p649 = scmp.eq.s32.totalorder %s92, 1
      %p650 = por %p648, %p649
      %p652 = scmp.ne.s32.totalorder %s637, %s651
      %p653 = scmp.eq.s32.totalorder %s92, 0
      %p654 = por %p652, %p653
      %s656 = sadd.s32 %s655, 1
      %p659 = scmp.eq.s32.totalorder %s86, 1
      %p660 = scmp.ne.s32.totalorder %s655, %s657
      %p661 = scmp.eq.s32.totalorder %s86, 0
      %p662 = por %p660, %p661
      %p663 = scmp.ne.s32.totalorder %s655, %s657
      %p664 = scmp.eq.s32.totalorder %s91, 1
      %p665 = por %p663, %p664
      %p666 = scmp.ne.s32.totalorder %s657, %s658
      %p667 = scmp.eq.s32.totalorder %s91, 0
      %p668 = por %p666, %p667
      %p669 = scmp.ne.s32.totalorder %s657, %s658
      %p670 = scmp.eq.s32.totalorder %s92, 1
      %p671 = por %p669, %p670
      %p673 = scmp.ne.s32.totalorder %s658, %s672
      %p674 = scmp.eq.s32.totalorder %s92, 0
      %p675 = por %p673, %p674
      %s677 = sadd.s32 %s676, 1
      %p680 = scmp.eq.s32.totalorder %s86, 1
      %p681 = scmp.ne.s32.totalorder %s676, %s678
      %p682 = scmp.eq.s32.totalorder %s86, 0
      %p683 = por %p681, %p682
      %p684 = scmp.ne.s32.totalorder %s676, %s678
      %p685 = scmp.eq.s32.totalorder %s91, 1
      %p686 = por %p684, %p685
      %p687 = scmp.ne.s32.totalorder %s678, %s679
      %p688 = scmp.eq.s32.totalorder %s91, 0
      %p689 = por %p687, %p688
      %p690 = scmp.ne.s32.totalorder %s678, %s679
      %p691 = scmp.eq.s32.totalorder %s92, 1
      %p692 = por %p690, %p691
      %p694 = scmp.ne.s32.totalorder %s679, %s693
      %p695 = scmp.eq.s32.totalorder %s92, 0
      %p696 = por %p694, %p695
      %s698 = sadd.s32 %s697, 1
      %p701 = scmp.eq.s32.totalorder %s86, 1
      %p702 = scmp.ne.s32.totalorder %s697, %s699
      %p703 = scmp.eq.s32.totalorder %s86, 0
      %p704 = por %p702, %p703
      %p705 = scmp.ne.s32.totalorder %s697, %s699
      %p706 = scmp.eq.s32.totalorder %s91, 1
      %p707 = por %p705, %p706
      %p708 = scmp.ne.s32.totalorder %s699, %s700
      %p709 = scmp.eq.s32.totalorder %s91, 0
      %p710 = por %p708, %p709
      %p711 = scmp.ne.s32.totalorder %s699, %s700
      %p712 = scmp.eq.s32.totalorder %s92, 1
      %p713 = por %p711, %p712
      %p715 = scmp.ne.s32.totalorder %s700, %s714
      %p716 = scmp.eq.s32.totalorder %s92, 0
      %p717 = por %p715, %p716
      %s719 = sadd.s32 %s718, 1
      %p722 = scmp.eq.s32.totalorder %s86, 1
      %p723 = scmp.ne.s32.totalorder %s718, %s720
      %p724 = scmp.eq.s32.totalorder %s86, 0
      %p725 = por %p723, %p724
      %p726 = scmp.ne.s32.totalorder %s718, %s720
      %p727 = scmp.eq.s32.totalorder %s91, 1
      %p728 = por %p726, %p727
      %p729 = scmp.ne.s32.totalorder %s720, %s721
      %p730 = scmp.eq.s32.totalorder %s91, 0
      %p731 = por %p729, %p730
      %p732 = scmp.ne.s32.totalorder %s720, %s721
      %p733 = scmp.eq.s32.totalorder %s92, 1
      %p734 = por %p732, %p733
      %p736 = scmp.ne.s32.totalorder %s721, %s735
      %p737 = scmp.eq.s32.totalorder %s92, 0
      %p738 = por %p736, %p737
      %s740 = sadd.s32 %s739, 1
      %p743 = scmp.eq.s32.totalorder %s86, 1
      %p744 = scmp.ne.s32.totalorder %s739, %s741
      %p745 = scmp.eq.s32.totalorder %s86, 0
      %p746 = por %p744, %p745
      %p747 = scmp.ne.s32.totalorder %s739, %s741
      %p748 = scmp.eq.s32.totalorder %s91, 1
      %p749 = por %p747, %p748
      %p750 = scmp.ne.s32.totalorder %s741, %s742
      %p751 = scmp.eq.s32.totalorder %s91, 0
      %p752 = por %p750, %p751
      %p753 = scmp.ne.s32.totalorder %s741, %s742
      %p754 = scmp.eq.s32.totalorder %s92, 1
      %p755 = por %p753, %p754
      %p757 = scmp.ne.s32.totalorder %s742, %s756
      %p758 = scmp.eq.s32.totalorder %s92, 0
      %p759 = por %p757, %p758
      %s761 = sadd.s32 %s760, 1
      %p764 = scmp.eq.s32.totalorder %s86, 1
      %p765 = scmp.ne.s32.totalorder %s760, %s762
      %p766 = scmp.eq.s32.totalorder %s86, 0
      %p767 = por %p765, %p766
      %p768 = scmp.ne.s32.totalorder %s760, %s762
      %p769 = scmp.eq.s32.totalorder %s91, 1
      %p770 = por %p768, %p769
      %p771 = scmp.ne.s32.totalorder %s762, %s763
      %p772 = scmp.eq.s32.totalorder %s91, 0
      %p773 = por %p771, %p772
      %p774 = scmp.ne.s32.totalorder %s762, %s763
      %p775 = scmp.eq.s32.totalorder %s92, 1
      %p776 = por %p774, %p775
      %p778 = scmp.ne.s32.totalorder %s763, %s777
      %p779 = scmp.eq.s32.totalorder %s92, 0
      %p780 = por %p778, %p779
      %s782 = sadd.s32 %s781, 1
      %p785 = scmp.eq.s32.totalorder %s86, 1
      %p786 = scmp.ne.s32.totalorder %s781, %s783
      %p787 = scmp.eq.s32.totalorder %s86, 0
      %p788 = por %p786, %p787
      %p789 = scmp.ne.s32.totalorder %s781, %s783
      %p790 = scmp.eq.s32.totalorder %s91, 1
      %p791 = por %p789, %p790
      %p792 = scmp.ne.s32.totalorder %s783, %s784
      %p793 = scmp.eq.s32.totalorder %s91, 0
      %p794 = por %p792, %p793
      %p795 = scmp.ne.s32.totalorder %s783, %s784
      %p796 = scmp.eq.s32.totalorder %s92, 1
      %p797 = por %p795, %p796
      %p799 = scmp.ne.s32.totalorder %s784, %s798
      %p800 = scmp.eq.s32.totalorder %s92, 0
      %p801 = por %p799, %p800
      %s802 = ssub.s32 %s93, %s105
      %s803 = ssub.s32 %s94, %s101
      %s804 = sor.u32 %s802, %s803
      %p805 = scmp.eq.s32.totalorder %s804, 0
      %s807 = sadd.s32 %s806, 1
      %s808 = scalar_select %p805, %s806, %s807
      %p811 = pneg %p805
      %p812 = scmp.eq.s32.totalorder %s86, 1
      %p813 = por %p811, %p812
      %p814 = scmp.ne.s32.totalorder %s806, %s809
      %p815 = scmp.eq.s32.totalorder %s86, 0
      %p816 = por %p814, %p815
      %p817 = scmp.ne.s32.totalorder %s806, %s809
      %p818 = scmp.eq.s32.totalorder %s91, 1
      %p819 = por %p817, %p818
      %p820 = scmp.ne.s32.totalorder %s809, %s810
      %p821 = scmp.eq.s32.totalorder %s91, 0
      %p822 = por %p820, %p821
      %p823 = scmp.ne.s32.totalorder %s809, %s810
      %p824 = scmp.eq.s32.totalorder %s92, 1
      %p825 = por %p823, %p824
      %p827 = scmp.ne.s32.totalorder %s810, %s826
      %p828 = scmp.eq.s32.totalorder %s92, 0
      %p829 = por %p827, %p828
      %p830 = scmp.le.s32.totalorder 1, %s86
      %p831 = scmp.lt.s32.totalorder %s86, 3
      %p832 = pnand %p830, %p831
      %p833 = pneg %p832
      // Predicated region
      $region9: #{tpu_custom_call.1} parent=5 // pred_check
        _
      $region10: #{tpu_custom_call.1} parent=5 // pred_check_branch
        %835 = sbr.rel (%p832) target = $region12
      $region11: #{tpu_custom_call.1} parent=5 // pred_region
        %s836 = ssub.s32 %s86, 1
        // Predicated region
        $region13: #{tpu_custom_call.1} parent=11 // pred_check
          %p837 = pneg %p227
        $region14: #{tpu_custom_call.1} parent=11 // pred_check_branch
          %839 = sbr.rel (%p837) target = $region16
        $region15: #{tpu_custom_call.1} parent=11 // pred_region
          _
        $region16: #{tpu_custom_call.1} parent=11 // pred_fallthru
          _
        // Predicated region
        $region17: #{tpu_custom_call.1} parent=11 // pred_check
          %p840 = pneg %p248
        $region18: #{tpu_custom_call.1} parent=11 // pred_check_branch
          %842 = sbr.rel (%p840) target = $region20
        $region19: #{tpu_custom_call.1} parent=11 // pred_region
          _
        $region20: #{tpu_custom_call.1} parent=11 // pred_fallthru
          _
        // Predicated region
        $region21: #{tpu_custom_call.1} parent=11 // pred_check
          %p843 = pneg %p269
        $region22: #{tpu_custom_call.1} parent=11 // pred_check_branch
          %845 = sbr.rel (%p843) target = $region24
        $region23: #{tpu_custom_call.1} parent=11 // pred_region
          _
        $region24: #{tpu_custom_call.1} parent=11 // pred_fallthru
          _
        // Predicated region
        $region25: #{tpu_custom_call.1} parent=11 // pred_check
          %p846 = pneg %p290
        $region26: #{tpu_custom_call.1} parent=11 // pred_check_branch
          %848 = sbr.rel (%p846) target = $region28
        $region27: #{tpu_custom_call.1} parent=11 // pred_region
          _
        $region28: #{tpu_custom_call.1} parent=11 // pred_fallthru
          _
        // Predicated region
        $region29: #{tpu_custom_call.1} parent=11 // pred_check
          %p849 = pneg %p311
        $region30: #{tpu_custom_call.1} parent=11 // pred_check_branch
          %851 = sbr.rel (%p849) target = $region32
        $region31: #{tpu_custom_call.1} parent=11 // pred_region
          %853 = vsyncadd [#allocation7], 0
          %s854 = sshll.u32 %s17, 4
          %s855 = int_to_ptr.hbm [resolvable:$true] %s854
          %s856 = sshll.u32 [#allocation8], 4
          %s857 = int_to_ptr.vmem [resolvable:$true] %s856
          %862 = dma.hbm_to_vmem [thread:$0]  %s855, 256, %s857, [#allocation7], 64, 64, 4
        $region32: #{tpu_custom_call.1} parent=11 // pred_fallthru
          _
        // Predicated region
        $region33: #{tpu_custom_call.1} parent=11 // pred_check
          %p863 = pneg %p332
        $region34: #{tpu_custom_call.1} parent=11 // pred_check_branch
          %865 = sbr.rel (%p863) target = $region36
        $region35: #{tpu_custom_call.1} parent=11 // pred_region
          _
        $region36: #{tpu_custom_call.1} parent=11 // pred_fallthru
          _
        // Predicated region
        $region37: #{tpu_custom_call.1} parent=11 // pred_check
          %p866 = pneg %p353
        $region38: #{tpu_custom_call.1} parent=11 // pred_check_branch
          %868 = sbr.rel (%p866) target = $region40
        $region39: #{tpu_custom_call.1} parent=11 // pred_region
          %870 = vsyncadd [#allocation10], 0
          %s871 = sshll.u32 %s21, 4
          %s872 = int_to_ptr.hbm [resolvable:$true] %s871
          %s873 = sshll.u32 [#allocation9], 4
          %s874 = int_to_ptr.vmem [resolvable:$true] %s873
          %879 = dma.hbm_to_vmem [thread:$0]  %s872, 256, %s874, [#allocation10], 64, 64, 4
        $region40: #{tpu_custom_call.1} parent=11 // pred_fallthru
          _
        // Predicated region
        $region41: #{tpu_custom_call.1} parent=11 // pred_check
          %p880 = pneg %p374
        $region42: #{tpu_custom_call.1} parent=11 // pred_check_branch
          %882 = sbr.rel (%p880) target = $region44
        $region43: #{tpu_custom_call.1} parent=11 // pred_region
          _
        $region44: #{tpu_custom_call.1} parent=11 // pred_fallthru
          _
        // Predicated region
        $region45: #{tpu_custom_call.1} parent=11 // pred_check
          %p883 = pneg %p395
        $region46: #{tpu_custom_call.1} parent=11 // pred_check_branch
          %885 = sbr.rel (%p883) target = $region48
        $region47: #{tpu_custom_call.1} parent=11 // pred_region
          %887 = vsyncadd [#allocation10], 0
          %s888 = sshll.u32 %s25, 4
          %s889 = int_to_ptr.hbm [resolvable:$true] %s888
          %s890 = sshll.u32 [#allocation11], 4
          %s891 = int_to_ptr.vmem [resolvable:$true] %s890
          %896 = dma.hbm_to_vmem [thread:$0]  %s889, 256, %s891, [#allocation10], 64, 64, 4
        $region48: #{tpu_custom_call.1} parent=11 // pred_fallthru
          _
        // Predicated region
        $region49: #{tpu_custom_call.1} parent=11 // pred_check
          %p897 = pneg %p416
        $region50: #{tpu_custom_call.1} parent=11 // pred_check_branch
          %899 = sbr.rel (%p897) target = $region52
        $region51: #{tpu_custom_call.1} parent=11 // pred_region
          _
        $region52: #{tpu_custom_call.1} parent=11 // pred_fallthru
          _
        // Predicated region
        $region53: #{tpu_custom_call.1} parent=11 // pred_check
          %p900 = pneg %p437
        $region54: #{tpu_custom_call.1} parent=11 // pred_check_branch
          %902 = sbr.rel (%p900) target = $region56
        $region55: #{tpu_custom_call.1} parent=11 // pred_region
          _
        $region56: #{tpu_custom_call.1} parent=11 // pred_fallthru
          _
        // Predicated region
        $region57: #{tpu_custom_call.1} parent=11 // pred_check
          %p903 = pneg %p458
        $region58: #{tpu_custom_call.1} parent=11 // pred_check_branch
          %905 = sbr.rel (%p903) target = $region60
        $region59: #{tpu_custom_call.1} parent=11 // pred_region
          _
        $region60: #{tpu_custom_call.1} parent=11 // pred_fallthru
          _
        // Predicated region
        $region61: #{tpu_custom_call.1} parent=11 // pred_check
          %p906 = pneg %p479
        $region62: #{tpu_custom_call.1} parent=11 // pred_check_branch
          %908 = sbr.rel (%p906) target = $region64
        $region63: #{tpu_custom_call.1} parent=11 // pred_region
          %910 = vsyncadd [#allocation13], 0
          %s911 = sshll.u32 %s33, 4
          %s912 = int_to_ptr.hbm [resolvable:$true] %s911
          %s913 = sshll.u32 [#allocation12], 4
          %s914 = int_to_ptr.vmem [resolvable:$true] %s913
          %919 = dma.hbm_to_vmem [thread:$0]  %s912, 256, %s914, [#allocation13], 64, 64, 4
        $region64: #{tpu_custom_call.1} parent=11 // pred_fallthru
          _
        // Predicated region
        $region65: #{tpu_custom_call.1} parent=11 // pred_check
          %p920 = pneg %p500
        $region66: #{tpu_custom_call.1} parent=11 // pred_check_branch
          %922 = sbr.rel (%p920) target = $region68
        $region67: #{tpu_custom_call.1} parent=11 // pred_region
          _
        $region68: #{tpu_custom_call.1} parent=11 // pred_fallthru
          _
        // Predicated region
        $region69: #{tpu_custom_call.1} parent=11 // pred_check
          %p923 = pneg %p521
        $region70: #{tpu_custom_call.1} parent=11 // pred_check_branch
          %925 = sbr.rel (%p923) target = $region72
        $region71: #{tpu_custom_call.1} parent=11 // pred_region
          %927 = vsyncadd [#allocation13], 0
          %s928 = sshll.u32 %s37, 4
          %s929 = int_to_ptr.hbm [resolvable:$true] %s928
          %s930 = sshll.u32 [#allocation14], 4
          %s931 = int_to_ptr.vmem [resolvable:$true] %s930
          %936 = dma.hbm_to_vmem [thread:$0]  %s929, 256, %s931, [#allocation13], 64, 64, 4
        $region72: #{tpu_custom_call.1} parent=11 // pred_fallthru
          _
        // Predicated region
        $region73: #{tpu_custom_call.1} parent=11 // pred_check
          %p937 = pneg %p542
        $region74: #{tpu_custom_call.1} parent=11 // pred_check_branch
          %939 = sbr.rel (%p937) target = $region76
        $region75: #{tpu_custom_call.1} parent=11 // pred_region
          _
        $region76: #{tpu_custom_call.1} parent=11 // pred_fallthru
          _
        // Predicated region
        $region77: #{tpu_custom_call.1} parent=11 // pred_check
          %p940 = pneg %p563
        $region78: #{tpu_custom_call.1} parent=11 // pred_check_branch
          %942 = sbr.rel (%p940) target = $region80
        $region79: #{tpu_custom_call.1} parent=11 // pred_region
          %944 = vsyncadd [#allocation16], 0
          %s945 = sshll.u32 %s41, 4
          %s946 = int_to_ptr.hbm [resolvable:$true] %s945
          %s947 = sshll.u32 [#allocation15], 4
          %s948 = int_to_ptr.vmem [resolvable:$true] %s947
          %953 = dma.hbm_to_vmem [thread:$0]  %s946, 256, %s948, [#allocation16], 64, 64, 4
        $region80: #{tpu_custom_call.1} parent=11 // pred_fallthru
          _
        // Predicated region
        $region81: #{tpu_custom_call.1} parent=11 // pred_check
          %p954 = pneg %p584
        $region82: #{tpu_custom_call.1} parent=11 // pred_check_branch
          %956 = sbr.rel (%p954) target = $region84
        $region83: #{tpu_custom_call.1} parent=11 // pred_region
          %958 = vsyncadd [#allocation16], 0
          %s960 = sshll.u32 %s43, 4
          %s961 = int_to_ptr.hbm [resolvable:$true] %s960
          %s962 = sshll.u32 [#allocation17], 4
          %s963 = int_to_ptr.vmem [resolvable:$true] %s962
          %965 = dma.hbm_to_vmem [thread:$0]  %s961, 16, %s963, [#allocation16]
        $region84: #{tpu_custom_call.1} parent=11 // pred_fallthru
          _
        // Predicated region
        $region85: #{tpu_custom_call.1} parent=11 // pred_check
          %p966 = pneg %p605
        $region86: #{tpu_custom_call.1} parent=11 // pred_check_branch
          %968 = sbr.rel (%p966) target = $region88
        $region87: #{tpu_custom_call.1} parent=11 // pred_region
          %970 = vsyncadd [#allocation19], 0
          %s971 = sshll.u32 %s45, 4
          %s972 = int_to_ptr.hbm [resolvable:$true] %s971
          %s973 = sshll.u32 [#allocation18], 4
          %s974 = int_to_ptr.vmem [resolvable:$true] %s973
          %979 = dma.hbm_to_vmem [thread:$0]  %s972, 256, %s974, [#allocation19], 64, 64, 4
        $region88: #{tpu_custom_call.1} parent=11 // pred_fallthru
          _
        // Predicated region
        $region89: #{tpu_custom_call.1} parent=11 // pred_check
          %p980 = pneg %p626
        $region90: #{tpu_custom_call.1} parent=11 // pred_check_branch
          %982 = sbr.rel (%p980) target = $region92
        $region91: #{tpu_custom_call.1} parent=11 // pred_region
          %984 = vsyncadd [#allocation19], 0
          %s986 = sshll.u32 %s47, 4
          %s987 = int_to_ptr.hbm [resolvable:$true] %s986
          %s988 = sshll.u32 [#allocation20], 4
          %s989 = int_to_ptr.vmem [resolvable:$true] %s988
          %991 = dma.hbm_to_vmem [thread:$0]  %s987, 16, %s989, [#allocation19]
        $region92: #{tpu_custom_call.1} parent=11 // pred_fallthru
          _
        // Predicated region
        $region93: #{tpu_custom_call.1} parent=11 // pred_check
          %p992 = pneg %p647
        $region94: #{tpu_custom_call.1} parent=11 // pred_check_branch
          %994 = sbr.rel (%p992) target = $region96
        $region95: #{tpu_custom_call.1} parent=11 // pred_region
          %996 = vsyncadd [#allocation22], 0
          %s998 = sshll.u32 %s49, 4
          %s999 = int_to_ptr.hbm [resolvable:$true] %s998
          %s1000 = sshll.u32 [#allocation21], 4
          %s1001 = int_to_ptr.vmem [resolvable:$true] %s1000
          %1003 = dma.hbm_to_vmem [thread:$0]  %s999, 16, %s1001, [#allocation22]
        $region96: #{tpu_custom_call.1} parent=11 // pred_fallthru
          _
        // Predicated region
        $region97: #{tpu_custom_call.1} parent=11 // pred_check
          %p1004 = pneg %p668
        $region98: #{tpu_custom_call.1} parent=11 // pred_check_branch
          %1006 = sbr.rel (%p1004) target = $region100
        $region99: #{tpu_custom_call.1} parent=11 // pred_region
          %1008 = vsyncadd [#allocation22], 0
          %s1010 = sshll.u32 %s51, 4
          %s1011 = int_to_ptr.hbm [resolvable:$true] %s1010
          %s1012 = sshll.u32 [#allocation23], 4
          %s1013 = int_to_ptr.vmem [resolvable:$true] %s1012
          %1015 = dma.hbm_to_vmem [thread:$0]  %s1011, 16, %s1013, [#allocation22]
        $region100: #{tpu_custom_call.1} parent=11 // pred_fallthru
          _
        // Predicated region
        $region101: #{tpu_custom_call.1} parent=11 // pred_check
          %p1016 = pneg %p689
        $region102: #{tpu_custom_call.1} parent=11 // pred_check_branch
          %1018 = sbr.rel (%p1016) target = $region104
        $region103: #{tpu_custom_call.1} parent=11 // pred_region
          %1020 = vsyncadd [#allocation25], 0
          %s1021 = sshll.u32 %s53, 4
          %s1022 = int_to_ptr.hbm [resolvable:$true] %s1021
          %s1023 = sshll.u32 [#allocation24], 4
          %s1024 = int_to_ptr.vmem [resolvable:$true] %s1023
          %1029 = dma.hbm_to_vmem [thread:$0]  %s1022, 256, %s1024, [#allocation25], 64, 64, 4
        $region104: #{tpu_custom_call.1} parent=11 // pred_fallthru
          _
        // Predicated region
        $region105: #{tpu_custom_call.1} parent=11 // pred_check
          %p1030 = pneg %p710
        $region106: #{tpu_custom_call.1} parent=11 // pred_check_branch
          %1032 = sbr.rel (%p1030) target = $region108
        $region107: #{tpu_custom_call.1} parent=11 // pred_region
          %1034 = vsyncadd [#allocation25], 0
          %s1036 = sshll.u32 %s55, 4
          %s1037 = int_to_ptr.hbm [resolvable:$true] %s1036
          %s1038 = sshll.u32 [#allocation26], 4
          %s1039 = int_to_ptr.vmem [resolvable:$true] %s1038
          %1041 = dma.hbm_to_vmem [thread:$0]  %s1037, 16, %s1039, [#allocation25]
        $region108: #{tpu_custom_call.1} parent=11 // pred_fallthru
          _
        // Predicated region
        $region109: #{tpu_custom_call.1} parent=11 // pred_check
          %p1042 = pneg %p731
        $region110: #{tpu_custom_call.1} parent=11 // pred_check_branch
          %1044 = sbr.rel (%p1042) target = $region112
        $region111: #{tpu_custom_call.1} parent=11 // pred_region
          _
        $region112: #{tpu_custom_call.1} parent=11 // pred_fallthru
          _
        // Predicated region
        $region113: #{tpu_custom_call.1} parent=11 // pred_check
          %p1045 = pneg %p752
        $region114: #{tpu_custom_call.1} parent=11 // pred_check_branch
          %1047 = sbr.rel (%p1045) target = $region116
        $region115: #{tpu_custom_call.1} parent=11 // pred_region
          _
        $region116: #{tpu_custom_call.1} parent=11 // pred_fallthru
          _
        // Predicated region
        $region117: #{tpu_custom_call.1} parent=11 // pred_check
          %p1048 = pneg %p773
        $region118: #{tpu_custom_call.1} parent=11 // pred_check_branch
          %1050 = sbr.rel (%p1048) target = $region120
        $region119: #{tpu_custom_call.1} parent=11 // pred_region
          _
        $region120: #{tpu_custom_call.1} parent=11 // pred_fallthru
          _
        // Predicated region
        $region121: #{tpu_custom_call.1} parent=11 // pred_check
          %p1051 = pneg %p794
        $region122: #{tpu_custom_call.1} parent=11 // pred_check_branch
          %1053 = sbr.rel (%p1051) target = $region124
        $region123: #{tpu_custom_call.1} parent=11 // pred_region
          _
        $region124: #{tpu_custom_call.1} parent=11 // pred_fallthru
          _
      $region12: #{tpu_custom_call.1} parent=5 // pred_fallthru
        _
      %p1054 = scmp.lt.s32.totalorder %s86, 2
      // Predicated region
      $region125: #{tpu_custom_call.1} parent=5 // pred_check
        %p1055 = pneg %p1054
      $region126: #{tpu_custom_call.1} parent=5 // pred_check_branch
        %1057 = sbr.rel (%p1055) target = $region128
      $region127: #{tpu_custom_call.1} parent=5 // pred_region
        // Predicated region
        $region129: #{tpu_custom_call.1} parent=127 // pred_check
          %p1058 = pneg %p118
        $region130: #{tpu_custom_call.1} parent=127 // pred_check_branch
          %1060 = sbr.rel (%p1058) target = $region132
        $region131: #{tpu_custom_call.1} parent=127 // pred_region
          %p1061 = scmp.lt.s32.totalorder %s93, 1
          %s1062 = scalar_select %p1061, %s93, 1
          %s1063 = smul.addr %s1062, 8
          %s1064 = scalar_lea.vmem %s1, %s1063
        $region132: #{tpu_custom_call.1} parent=127 // pred_fallthru
          _
        // Predicated region
        $region133: #{tpu_custom_call.1} parent=127 // pred_check
          %p1065 = pneg %p144
        $region134: #{tpu_custom_call.1} parent=127 // pred_check_branch
          %1067 = sbr.rel (%p1065) target = $region136
        $region135: #{tpu_custom_call.1} parent=127 // pred_region
          %p1068 = scmp.lt.s32.totalorder %s93, 1
          %s1069 = scalar_select %p1068, %s93, 1
          %s1070 = smul.addr %s1069, 8
          %s1071 = scalar_lea.vmem %s3, %s1070
        $region136: #{tpu_custom_call.1} parent=127 // pred_fallthru
          _
        // Predicated region
        $region137: #{tpu_custom_call.1} parent=127 // pred_check
          %p1072 = pneg %p172
        $region138: #{tpu_custom_call.1} parent=127 // pred_check_branch
          %1074 = sbr.rel (%p1072) target = $region140
        $region139: #{tpu_custom_call.1} parent=127 // pred_region
          %s1075 = sand.u32 %s162, 1
          %s1076 = scalar_lea.sflag [#allocation4], %s1075
          %s1077 = sand.u32 %s162, 1
          %s1078 = smul.addr %s1077, 2
          %s1079 = scalar_lea.vmem [#allocation3], %s1078
          %1081 = vsyncadd %s1076, 0
          %s1082 = sadd.s32 %s94, %s93
          %s1083 = smul.addr %s1082, 2
          %s1084 = scalar_lea.hbm %s5, %s1083
          %s1086 = sshll.u32 %s1084, 4
          %s1087 = int_to_ptr.hbm [resolvable:$true] %s1086
          %s1088 = sshll.u32 %s1079, 4
          %s1089 = int_to_ptr.vmem [resolvable:$true] %s1088
          %1091 = dma.hbm_to_vmem [thread:$0]  %s1087, 32, %s1089, %s1076
        $region140: #{tpu_custom_call.1} parent=127 // pred_fallthru
          _
        // Predicated region
        $region141: #{tpu_custom_call.1} parent=127 // pred_check
          %p1092 = pneg %p200
        $region142: #{tpu_custom_call.1} parent=127 // pred_check_branch
          %1094 = sbr.rel (%p1092) target = $region144
        $region143: #{tpu_custom_call.1} parent=127 // pred_region
          %s1095 = sand.u32 %s86, 1
          %s1096 = scalar_lea.sflag [#allocation7], %s1095
          %s1097 = sand.u32 %s190, 1
          %s1098 = smul.addr %s1097, 2
          %s1099 = scalar_lea.vmem [#allocation6], %s1098
          %1101 = vsyncadd %s1096, 0
          %s1102 = sadd.s32 %s94, %s93
          %s1103 = smul.addr %s1102, 2
          %s1104 = scalar_lea.hbm %s7, %s1103
          %s1106 = sshll.u32 %s1104, 4
          %s1107 = int_to_ptr.hbm [resolvable:$true] %s1106
          %s1108 = sshll.u32 %s1099, 4
          %s1109 = int_to_ptr.vmem [resolvable:$true] %s1108
          %1111 = dma.hbm_to_vmem [thread:$0]  %s1107, 32, %s1109, %s1096
        $region144: #{tpu_custom_call.1} parent=127 // pred_fallthru
          _
      $region128: #{tpu_custom_call.1} parent=5 // pred_fallthru
        _
      %p1112 = scmp.le.s32.totalorder 1, %s86
      %p1113 = scmp.lt.s32.totalorder %s86, 3
      %p1114 = pnand %p1112, %p1113
      %p1115 = pneg %p1114
      // Predicated region
      $region145: #{tpu_custom_call.1} parent=5 // pred_check
        _
      $region146: #{tpu_custom_call.1} parent=5 // pred_check_branch
        %1117 = sbr.rel (%p1114) target = $region148
      $region147: #{tpu_custom_call.1} parent=5 // pred_region
        %s1118 = ssub.s32 %s86, 1
        %s1119 = sand.u32 %s165, 1
        %s1120 = scalar_lea.sflag [#allocation4], %s1119
        %s1121 = sand.u32 %s165, 1
        %s1122 = smul.addr %s1121, 2
        %s1123 = scalar_lea.vmem [#allocation3], %s1122
        // Predicated region
        $region149: #{tpu_custom_call.1} parent=147 // pred_check
          %p1124 = pneg %p178
        $region150: #{tpu_custom_call.1} parent=147 // pred_check_branch
          %1126 = sbr.rel (%p1124) target = $region152
        $region151: #{tpu_custom_call.1} parent=147 // pred_region
          %1128 = dma.done %s1120, 32
        $region152: #{tpu_custom_call.1} parent=147 // pred_fallthru
          _
        %s1129 = sand.u32 %s91, 1
        %s1130 = scalar_lea.sflag [#allocation7], %s1129
        %s1131 = sand.u32 %s193, 1
        %s1132 = smul.addr %s1131, 2
        %s1133 = scalar_lea.vmem [#allocation6], %s1132
        // Predicated region
        $region153: #{tpu_custom_call.1} parent=147 // pred_check
          %p1134 = pneg %p206
        $region154: #{tpu_custom_call.1} parent=147 // pred_check_branch
          %1136 = sbr.rel (%p1134) target = $region156
        $region155: #{tpu_custom_call.1} parent=147 // pred_region
          %1138 = dma.done %s1130, 32
        $region156: #{tpu_custom_call.1} parent=147 // pred_fallthru
          _
        // Predicated region
        $region157: #{tpu_custom_call.1} parent=147 // pred_check
          %p1139 = pneg %p311
        $region158: #{tpu_custom_call.1} parent=147 // pred_check_branch
          %1141 = sbr.rel (%p1139) target = $region160
        $region159: #{tpu_custom_call.1} parent=147 // pred_region
          %1143 = dma.done [#allocation7], 256
        $region160: #{tpu_custom_call.1} parent=147 // pred_fallthru
          _
        // Predicated region
        $region161: #{tpu_custom_call.1} parent=147 // pred_check
          %p1144 = pneg %p353
        $region162: #{tpu_custom_call.1} parent=147 // pred_check_branch
          %1146 = sbr.rel (%p1144) target = $region164
        $region163: #{tpu_custom_call.1} parent=147 // pred_region
          %1148 = dma.done [#allocation10], 256
        $region164: #{tpu_custom_call.1} parent=147 // pred_fallthru
          _
        // Predicated region
        $region165: #{tpu_custom_call.1} parent=147 // pred_check
          %p1149 = pneg %p395
        $region166: #{tpu_custom_call.1} parent=147 // pred_check_branch
          %1151 = sbr.rel (%p1149) target = $region168
        $region167: #{tpu_custom_call.1} parent=147 // pred_region
          %1153 = dma.done [#allocation10], 256
        $region168: #{tpu_custom_call.1} parent=147 // pred_fallthru
          _
        // Predicated region
        $region169: #{tpu_custom_call.1} parent=147 // pred_check
          %p1154 = pneg %p479
        $region170: #{tpu_custom_call.1} parent=147 // pred_check_branch
          %1156 = sbr.rel (%p1154) target = $region172
        $region171: #{tpu_custom_call.1} parent=147 // pred_region
          %1158 = dma.done [#allocation13], 256
        $region172: #{tpu_custom_call.1} parent=147 // pred_fallthru
          _
        // Predicated region
        $region173: #{tpu_custom_call.1} parent=147 // pred_check
          %p1159 = pneg %p521
        $region174: #{tpu_custom_call.1} parent=147 // pred_check_branch
          %1161 = sbr.rel (%p1159) target = $region176
        $region175: #{tpu_custom_call.1} parent=147 // pred_region
          %1163 = dma.done [#allocation13], 256
        $region176: #{tpu_custom_call.1} parent=147 // pred_fallthru
          _
        // Predicated region
        $region177: #{tpu_custom_call.1} parent=147 // pred_check
          %p1164 = pneg %p563
        $region178: #{tpu_custom_call.1} parent=147 // pred_check_branch
          %1166 = sbr.rel (%p1164) target = $region180
        $region179: #{tpu_custom_call.1} parent=147 // pred_region
          %1168 = dma.done [#allocation16], 256
        $region180: #{tpu_custom_call.1} parent=147 // pred_fallthru
          _
        // Predicated region
        $region181: #{tpu_custom_call.1} parent=147 // pred_check
          %p1169 = pneg %p584
        $region182: #{tpu_custom_call.1} parent=147 // pred_check_branch
          %1171 = sbr.rel (%p1169) target = $region184
        $region183: #{tpu_custom_call.1} parent=147 // pred_region
          %1173 = dma.done [#allocation16], 16
        $region184: #{tpu_custom_call.1} parent=147 // pred_fallthru
          _
        // Predicated region
        $region185: #{tpu_custom_call.1} parent=147 // pred_check
          %p1174 = pneg %p605
        $region186: #{tpu_custom_call.1} parent=147 // pred_check_branch
          %1176 = sbr.rel (%p1174) target = $region188
        $region187: #{tpu_custom_call.1} parent=147 // pred_region
          %1178 = dma.done [#allocation19], 256
        $region188: #{tpu_custom_call.1} parent=147 // pred_fallthru
          _
        // Predicated region
        $region189: #{tpu_custom_call.1} parent=147 // pred_check
          %p1179 = pneg %p626
        $region190: #{tpu_custom_call.1} parent=147 // pred_check_branch
          %1181 = sbr.rel (%p1179) target = $region192
        $region191: #{tpu_custom_call.1} parent=147 // pred_region
          %1183 = dma.done [#allocation19], 16
        $region192: #{tpu_custom_call.1} parent=147 // pred_fallthru
          _
        // Predicated region
        $region193: #{tpu_custom_call.1} parent=147 // pred_check
          %p1184 = pneg %p647
        $region194: #{tpu_custom_call.1} parent=147 // pred_check_branch
          %1186 = sbr.rel (%p1184) target = $region196
        $region195: #{tpu_custom_call.1} parent=147 // pred_region
          %1188 = dma.done [#allocation22], 16
        $region196: #{tpu_custom_call.1} parent=147 // pred_fallthru
          _
        // Predicated region
        $region197: #{tpu_custom_call.1} parent=147 // pred_check
          %p1189 = pneg %p668
        $region198: #{tpu_custom_call.1} parent=147 // pred_check_branch
          %1191 = sbr.rel (%p1189) target = $region200
        $region199: #{tpu_custom_call.1} parent=147 // pred_region
          %1193 = dma.done [#allocation22], 16
        $region200: #{tpu_custom_call.1} parent=147 // pred_fallthru
          _
        // Predicated region
        $region201: #{tpu_custom_call.1} parent=147 // pred_check
          %p1194 = pneg %p689
        $region202: #{tpu_custom_call.1} parent=147 // pred_check_branch
          %1196 = sbr.rel (%p1194) target = $region204
        $region203: #{tpu_custom_call.1} parent=147 // pred_region
          %1198 = dma.done [#allocation25], 256
        $region204: #{tpu_custom_call.1} parent=147 // pred_fallthru
          _
        // Predicated region
        $region205: #{tpu_custom_call.1} parent=147 // pred_check
          %p1199 = pneg %p710
        $region206: #{tpu_custom_call.1} parent=147 // pred_check_branch
          %1201 = sbr.rel (%p1199) target = $region208
        $region207: #{tpu_custom_call.1} parent=147 // pred_region
          %1203 = dma.done [#allocation25], 16
        $region208: #{tpu_custom_call.1} parent=147 // pred_fallthru
          _
        %p1204 = scmp.lt.s32.totalorder %s95, 1
        %s1205 = scalar_select %p1204, %s95, 1
        %s1206 = smul.addr %s1205, 8
        %s1207 = scalar_lea.vmem %s1, %s1206
        %p1208 = pneg %p124
        %p1209 = pneg %p121
        %p1210 = scmp.lt.s32.totalorder %s95, 1
        %s1211 = scalar_select %p1210, %s95, 1
        %s1212 = smul.addr %s1211, 8
        %s1213 = scalar_lea.vmem %s3, %s1212
        %p1214 = pneg %p150
        %p1215 = pneg %p147
        %s1216 = sand.u32 %s165, 1
        %s1217 = scalar_lea.sflag [#allocation4], %s1216
        %s1218 = sand.u32 %s165, 1
        %s1219 = smul.addr %s1218, 2
        %s1220 = scalar_lea.vmem [#allocation3], %s1219
        %p1221 = pneg %p178
        %p1222 = pneg %p175
        %s1223 = sand.u32 %s91, 1
        %s1224 = scalar_lea.sflag [#allocation7], %s1223
        %s1225 = sand.u32 %s193, 1
        %s1226 = smul.addr %s1225, 2
        %s1227 = scalar_lea.vmem [#allocation6], %s1226
        %p1228 = pneg %p206
        %p1229 = pneg %p203
        %p1230 = pneg %p227
        %p1231 = pneg %p224
        %p1232 = pneg %p248
        %p1233 = pneg %p245
        %p1234 = pneg %p269
        %p1235 = pneg %p266
        %p1236 = pneg %p290
        %p1237 = pneg %p287
        %p1238 = pneg %p311
        %p1239 = pneg %p308
        %p1240 = pneg %p332
        %p1241 = pneg %p329
        %p1242 = pneg %p353
        %p1243 = pneg %p350
        %p1244 = pneg %p374
        %p1245 = pneg %p371
        %p1246 = pneg %p395
        %p1247 = pneg %p392
        %p1248 = pneg %p416
        %p1249 = pneg %p413
        %p1250 = pneg %p437
        %p1251 = pneg %p434
        %p1252 = pneg %p458
        %p1253 = pneg %p455
        %p1254 = pneg %p479
        %p1255 = pneg %p476
        %p1256 = pneg %p500
        %p1257 = pneg %p497
        %p1258 = pneg %p521
        %p1259 = pneg %p518
        %p1260 = pneg %p542
        %p1261 = pneg %p539
        %p1262 = pneg %p563
        %p1263 = pneg %p560
        %p1264 = pneg %p584
        %p1265 = pneg %p581
        %p1266 = pneg %p605
        %p1267 = pneg %p602
        %p1268 = pneg %p626
        %p1269 = pneg %p623
        %p1270 = pneg %p647
        %p1271 = pneg %p644
        %p1272 = pneg %p668
        %p1273 = pneg %p665
        %p1274 = pneg %p689
        %p1275 = pneg %p686
        %p1276 = pneg %p710
        %p1277 = pneg %p707
        %p1278 = pneg %p731
        %p1279 = pneg %p728
        %p1280 = pneg %p752
        %p1281 = pneg %p749
        %p1282 = pneg %p773
        %p1283 = pneg %p770
        %p1284 = pneg %p794
        %p1285 = pneg %p791
        %p1286 = pneg %p822
        %p1287 = pneg %p819
        %s1288 = sand.u32 %s809, 1
        %s1289 = scalar_lea.sflag [#allocation5], %s1288
        %s1290 = sand.u32 %s809, 1
        %s1291 = smul.addr %s1290, 8
        %s1292 = scalar_lea.vmem [#allocation27], %s1291
        %p1293 = scmp.lt.s32.totalorder %s95, 1
        %s1294 = scalar_select %p1293, %s95, 1
        %s1295 = smul.addr %s1294, 8
        %s1296 = scalar_lea.vmem %s1, %s1295
        %p1297 = scmp.lt.s32.totalorder %s95, 1
        %s1298 = scalar_select %p1297, %s95, 1
        %s1299 = smul.addr %s1298, 8
        %s1300 = scalar_lea.vmem %s3, %s1299
        %s1302 = smul.u32 %s96, 8
        %v1303 = vld [vmem:[%s1296] sm:$0xff]
        %s1304 = scalar_lea.vmem %s1296, %s1302
        %v1305 = vld [vmem:[%s1304] sm:$0xff]
        %v1306 = vld [vmem:[%s1123] sm:$0x3]
        %v1307 = vunpack.c.0.s8 %v1306
        %v1308 = vcvt.s32.f32 %v1307
        %vm1309 = vcmp.eq.f32.partialorder %v1308, 0.0
        %v1310 = vsel %vm1309, -1e+09, 0.0
        %v1311 = vld [vmem:[%s1133] sm:$0x3]
        %v1312 = vunpack.c.0.s8 %v1311
        %v1313 = vcvt.s32.f32 %v1312
        %vm1314 = vcmp.eq.f32.partialorder %v1313, 0.0
        %v1315 = vsel %vm1314, -1e+09, 0.0
        %v1316 = vld [vmem:[%s9] sm:$0x1]
        %v1317 = vld [vmem:[%s11] sm:$0x1]
        %vm1318 = vcmask 261120
        %v1319 = vsel %vm1318, %v1303, 0.0
        %1320 = vadd.xlane.f32.xlu0 %v1319
        %v1321 = vpop.xlane.xlu0 %1320
        %v1322 = vrcp.pop 32.0
        %v1323 = vmul.f32 32.0, %v1322
        %v1324 = vsub.f32 1.0, %v1323
        %v1325 = vmul.f32 %v1322, %v1324
        %v1326 = vadd.f32 %v1322, %v1325
        %vm1327 = vweird.f32 %v1322
        %v1328 = vsel %vm1327, %v1322, %v1326
        %v1329 = vmul.f32 %v1321, %v1328
        %v1330 = vsub.f32 %v1303, %v1329
        %v1331 = vmul.f32 %v1330, %v1330
        %v1332 = vsel %vm1318, %v1331, 0.0
        %1333 = vadd.xlane.f32.xlu0 %v1332
        %v1334 = vpop.xlane.xlu0 %1333
        %v1335 = vmul.f32 %v1334, 0.032258064
        %v1337 = vperm.slane %v1316, 0
        %v1339 = vmul.f32 %v1337, %v1330
        %v1340 = vrsqrt.pop %v1335
        %v1341 = vmul.f32 %v1340, %v1335
        %v1342 = vmul.f32 %v1341, %v1340
        %v1343 = vmul.f32 0.5, %v1342
        %v1344 = vsub.f32 1.5, %v1343
        %v1345 = vmul.f32 %v1340, %v1344
        %v1346 = vmul.f32 %v1335, %v1345
        %vm1347 = vcmp.eq.f32.partialorder %v1335, inf
        %v1348 = vsel %vm1347, %v1335, %v1346
        %vm1349 = vcmp.eq.f32.partialorder %v1335, 0.0
        %v1350 = vand.u32 %v1335, 2147483648
        %v1351 = vsel %vm1349, %v1350, %v1348
        %v1352 = vadd.f32 %v1351, 1e-06
        %v1353 = vrcp.pop %v1352
        %v1354 = vmul.f32 %v1352, %v1353
        %v1355 = vsub.f32 1.0, %v1354
        %v1356 = vmul.f32 %v1353, %v1355
        %v1357 = vadd.f32 %v1353, %v1356
        %vm1358 = vweird.f32 %v1352
        %vm1359 = vweird.f32 %v1353
        %vm1360 = vmor %vm1358, %vm1359
        %v1361 = vsel %vm1360, %v1353, %v1357
        %v1362 = vand.u32 2147483647, %v1352
        %vm1363 = vcmp.eq.f32.partialorder %v1362, 8.507059e+37
        %v1364 = vand.u32 %v1352, 2147483648
        %v1365 = vor.u32 1.1754944e-38, %v1364
        %v1366 = vsel %vm1363, %v1365, %v1361
        %v1367 = vmul.f32 %v1339, %v1366
        %v1369 = vperm.slane %v1317, 0
        %v1371 = vadd.f32 %v1367, %v1369
        %v1372 = vsel %vm1318, %v1305, 0.0
        %1373 = vadd.xlane.f32.xlu0 %v1372
        %v1374 = vpop.xlane.xlu0 %1373
        %v1375 = vmul.f32 %v1374, %v1328
        %v1376 = vsub.f32 %v1305, %v1375
        %v1377 = vmul.f32 %v1376, %v1376
        %v1378 = vsel %vm1318, %v1377, 0.0
        %1379 = vadd.xlane.f32.xlu0 %v1378
        %v1380 = vpop.xlane.xlu0 %1379
        %v1381 = vmul.f32 %v1380, 0.032258064
        %v1382 = vmul.f32 %v1337, %v1376
        %v1383 = vrsqrt.pop %v1381
        %v1384 = vmul.f32 %v1383, %v1381
        %v1385 = vmul.f32 %v1384, %v1383
        %v1386 = vmul.f32 0.5, %v1385
        %v1387 = vsub.f32 1.5, %v1386
        %v1388 = vmul.f32 %v1383, %v1387
        %v1389 = vmul.f32 %v1381, %v1388
        %vm1390 = vcmp.eq.f32.partialorder %v1381, inf
        %v1391 = vsel %vm1390, %v1381, %v1389
        %vm1392 = vcmp.eq.f32.partialorder %v1381, 0.0
        %v1393 = vand.u32 %v1381, 2147483648
        %v1394 = vsel %vm1392, %v1393, %v1391
        %v1395 = vadd.f32 %v1394, 1e-06
        %v1396 = vrcp.pop %v1395
        %v1397 = vmul.f32 %v1395, %v1396
        %v1398 = vsub.f32 1.0, %v1397
        %v1399 = vmul.f32 %v1396, %v1398
        %v1400 = vadd.f32 %v1396, %v1399
        %vm1401 = vweird.f32 %v1395
        %vm1402 = vweird.f32 %v1396
        %vm1403 = vmor %vm1401, %vm1402
        %v1404 = vsel %vm1403, %v1396, %v1400
        %v1405 = vand.u32 2147483647, %v1395
        %vm1406 = vcmp.eq.f32.partialorder %v1405, 8.507059e+37
        %v1407 = vand.u32 %v1395, 2147483648
        %v1408 = vor.u32 1.1754944e-38, %v1407
        %v1409 = vsel %vm1406, %v1408, %v1404
        %v1410 = vmul.f32 %v1382, %v1409
        %v1411 = vadd.f32 %v1410, %v1369
        %v1412 = vld [vmem:[%s13] sm:$0xf]
        %v1413 = vld [vmem:[%s13 + $0x4] sm:$0xf]
        %v1414 = vld [vmem:[%s13 + $0x8] sm:$0xf]
        %v1415 = vld [vmem:[%s13 + $0xc] sm:$0xf]
        %v1416 = vld [vmem:[%s15] sm:$0x1]
        %v1417 = vld [vmem:[#allocation8] sm:$0xf]
        %v1418 = vld [vmem:[#allocation8 + $0x4] sm:$0xf]
        %v1419 = vld [vmem:[#allocation8 + $0x8] sm:$0xf]
        %v1420 = vld [vmem:[#allocation8 + $0xc] sm:$0xf]
        %v1421 = vld [vmem:[%s19] sm:$0x1]
        %v1422 = vld [vmem:[#allocation9] sm:$0xf]
        %v1423 = vld [vmem:[#allocation9 + $0x4] sm:$0xf]
        %v1424 = vld [vmem:[#allocation9 + $0x8] sm:$0xf]
        %v1425 = vld [vmem:[#allocation9 + $0xc] sm:$0xf]
        %v1426 = vld [vmem:[%s23] sm:$0x1]
        %v1427 = vld [vmem:[#allocation11] sm:$0xf]
        %v1428 = vld [vmem:[#allocation11 + $0x4] sm:$0xf]
        %v1429 = vld [vmem:[#allocation11 + $0x8] sm:$0xf]
        %v1430 = vld [vmem:[#allocation11 + $0xc] sm:$0xf]
        %v1431 = vld [vmem:[%s27] sm:$0x1]
        %v1432 = vpack.c.bf16 %v1411, %v1411
        %v1434 = vperm.slane %v1416, 0
        %v1440 = vunpack.c.l.b16 %v1412
        %v1441 = vunpack.c.l.b16 %v1413
        %v1442 = vunpack.c.l.b16 %v1414
        %v1443 = vunpack.c.l.b16 %v1415
        %v1444 = vpack.c.b16 %v1441, %v1440
        %v1445 = vpack.c.b16 %v1443, %v1442
        %v1449 = vsel %vm1318, %v1432, 0
        %1451 = vmatpush.bf16.msra.mxu0 0
        %1452 = vmatpush.bf16.msra.mxu0 0
        %1453 = vmatpush.bf16.msra.mxu0 0
        %1454 = vmatpush.bf16.msra.mxu0 0
        %1455 = vmatpush.bf16.msra.mxu0 0
        %1456 = vmatpush.bf16.msra.mxu0 0
        %1457 = vmatpush.bf16.msra.mxu0 %v1445
        %1458 = vmatpush.bf16.msra.mxu0 %v1444
        %1459 = vmatmul.bf16.gmra.mxu0 %v1449
        %v1460 = vpop.f32.mrf.mxu0
        %v1461 = vadd.f32 %v1434, %v1460
        %v1462 = vpop.f32.mrf.mxu0
        %1463 = vdwg.mxu0
        %v1464 = vpack.c.bf16 %v1371, %v1371
        %v1466 = vperm.slane %v1421, 0
        %v1472 = vunpack.c.l.b16 %v1417
        %v1473 = vunpack.c.l.b16 %v1418
        %v1474 = vunpack.c.l.b16 %v1419
        %v1475 = vunpack.c.l.b16 %v1420
        %v1476 = vpack.c.b16 %v1473, %v1472
        %v1477 = vpack.c.b16 %v1475, %v1474
        %v1481 = vsel %vm1318, %v1464, 0
        %1483 = vmatpush.bf16.msra.mxu0 0
        %1484 = vmatpush.bf16.msra.mxu0 0
        %1485 = vmatpush.bf16.msra.mxu0 0
        %1486 = vmatpush.bf16.msra.mxu0 0
        %1487 = vmatpush.bf16.msra.mxu0 0
        %1488 = vmatpush.bf16.msra.mxu0 0
        %1489 = vmatpush.bf16.msra.mxu0 %v1477
        %1490 = vmatpush.bf16.msra.mxu0 %v1476
        %1491 = vmatmul.bf16.gmra.mxu0 %v1481
        %v1492 = vpop.f32.mrf.mxu0
        %v1493 = vadd.f32 %v1466, %v1492
        %v1494 = vpop.f32.mrf.mxu0
        %1495 = vdwg.mxu0
        %v1497 = vperm.slane %v1426, 0
        %v1503 = vunpack.c.l.b16 %v1422
        %v1504 = vunpack.c.l.b16 %v1423
        %v1505 = vunpack.c.l.b16 %v1424
        %v1506 = vunpack.c.l.b16 %v1425
        %v1507 = vpack.c.b16 %v1504, %v1503
        %v1508 = vpack.c.b16 %v1506, %v1505
        %1511 = vmatpush.bf16.msra.mxu0 0
        %1512 = vmatpush.bf16.msra.mxu0 0
        %1513 = vmatpush.bf16.msra.mxu0 0
        %1514 = vmatpush.bf16.msra.mxu0 0
        %1515 = vmatpush.bf16.msra.mxu0 0
        %1516 = vmatpush.bf16.msra.mxu0 0
        %1517 = vmatpush.bf16.msra.mxu0 %v1508
        %1518 = vmatpush.bf16.msra.mxu0 %v1507
        %1519 = vmatmul.bf16.gmra.mxu0 %v1481
        %v1520 = vpop.f32.mrf.mxu0
        %v1521 = vadd.f32 %v1497, %v1520
        %v1522 = vpop.f32.mrf.mxu0
        %1523 = vdwg.mxu0
        %v1524 = vpack.c.bf16 %v1461, %v1461
        %v1525 = vpack.c.bf16 %v1493, %v1493
        %v1526 = vpack.c.bf16 %v1521, %v1521
        %vm1527 = vcmask 64512
        %v1529 = vsel %vm1527, %v1524, 0
        %v1532 = vsel %vm1527, %v1525, 0
        %1534 = vmatpush.bf16.xpose.msra.mxu0 0
        %1535 = vmatpush.bf16.xpose.msra.mxu0 0
        %1536 = vmatpush.bf16.xpose.msra.mxu0 0
        %1537 = vmatpush.bf16.xpose.msra.mxu0 0
        %1538 = vmatpush.bf16.xpose.msra.mxu0 0
        %1539 = vmatpush.bf16.xpose.msra.mxu0 0
        %1540 = vmatpush.bf16.xpose.msra.mxu0 0
        %1541 = vmatpush.bf16.xpose.msra.mxu0 %v1532
        %1542 = vmatmul.bf16.gmra.mxu0 %v1529
        %v1543 = vpop.f32.mrf.mxu0
        %v1544 = vadd.f32 0.0, %v1543
        %v1545 = vpop.f32.mrf.mxu0
        %1546 = vdwg.mxu0
        %v1547 = vmul.f32 %v1544, 0.35355338
        %v1548 = vadd.f32 %v1547, %v1310
        %v1549 = vsel %vm1527, %v1548, -inf
        %1550 = vmax.xlane.f32.xlu0 %v1549
        %v1551 = vpop.xlane.xlu0 %1550
        %v1552 = vsub.f32 %v1548, %v1551
        %v1553 = vmul.f32 %v1552, 1.442695
        %v1554 = vpow.pop %v1553
        %v1555 = vsel %vm1527, %v1554, 0.0
        %1556 = vadd.xlane.f32.xlu0 %v1555
        %v1557 = vpop.xlane.xlu0 %1556
        %v1558 = vrcp.pop %v1557
        %v1559 = vmul.f32 %v1554, %v1558
        %v1560 = vpack.c.bf16 %v1559, %v1559
        %v1562 = vsel %vm1527, %v1560, 0
        %vm1564 = vcmask 1043456
        %v1566 = vsel %vm1564, %v1526, 0
        %1568 = vmatpush.bf16.msra.mxu0 0
        %1569 = vmatpush.bf16.msra.mxu0 0
        %1570 = vmatpush.bf16.msra.mxu0 0
        %1571 = vmatpush.bf16.msra.mxu0 0
        %1572 = vmatpush.bf16.msra.mxu0 0
        %1573 = vmatpush.bf16.msra.mxu0 0
        %1574 = vmatpush.bf16.msra.mxu0 0
        %1575 = vmatpush.bf16.msra.mxu0 %v1566
        %1576 = vmatmul.bf16.gmra.mxu0 %v1562
        %v1577 = vpop.f32.mrf.mxu0
        %v1578 = vadd.f32 0.0, %v1577
        %v1579 = vpop.f32.mrf.mxu0
        %1580 = vdwg.mxu0
        %1581 = vst.msk [vmem:[#allocation2] sm:$0xff] %vm1527, %v1578
        %v1583 = vunpack.c.l.b16 %v1524
        %v1584 = vpack.c.b16 %v1583, %v1583
        %1585 = vrot.lane.b32.xlu0 %v1584, 120
        %v1586 = vpop.permute.xlu0 %1585
        %v1588 = vunpack.c.l.b16 %v1525
        %v1589 = vpack.c.b16 %v1588, %v1588
        %1590 = vrot.lane.b32.xlu0 %v1589, 120
        %v1591 = vpop.permute.xlu0 %1590
        %v1593 = vsel %vm1527, %v1586, 0
        %v1596 = vsel %vm1527, %v1591, 0
        %1598 = vmatpush.bf16.xpose.msra.mxu0 0
        %1599 = vmatpush.bf16.xpose.msra.mxu0 0
        %1600 = vmatpush.bf16.xpose.msra.mxu0 0
        %1601 = vmatpush.bf16.xpose.msra.mxu0 0
        %1602 = vmatpush.bf16.xpose.msra.mxu0 0
        %1603 = vmatpush.bf16.xpose.msra.mxu0 0
        %1604 = vmatpush.bf16.xpose.msra.mxu0 0
        %1605 = vmatpush.bf16.xpose.msra.mxu0 %v1596
        %1606 = vmatmul.bf16.gmra.mxu0 %v1593
        %v1607 = vpop.f32.mrf.mxu0
        %v1608 = vadd.f32 0.0, %v1607
        %v1609 = vpop.f32.mrf.mxu0
        %1610 = vdwg.mxu0
        %v1611 = vmul.f32 %v1608, 0.35355338
        %v1612 = vadd.f32 %v1611, %v1310
        %v1613 = vsel %vm1527, %v1612, -inf
        %1614 = vmax.xlane.f32.xlu0 %v1613
        %v1615 = vpop.xlane.xlu0 %1614
        %v1616 = vsub.f32 %v1612, %v1615
        %v1617 = vmul.f32 %v1616, 1.442695
        %v1618 = vpow.pop %v1617
        %v1619 = vsel %vm1527, %v1618, 0.0
        %1620 = vadd.xlane.f32.xlu0 %v1619
        %v1621 = vpop.xlane.xlu0 %1620
        %v1622 = vrcp.pop %v1621
        %v1623 = vmul.f32 %v1618, %v1622
        %v1624 = vpack.c.bf16 %v1623, %v1623
        %v1626 = vunpack.c.l.b16 %v1526
        %v1627 = vpack.c.b16 %v1626, %v1626
        %1628 = vrot.lane.b32.xlu0 %v1627, 120
        %v1629 = vpop.permute.xlu0 %1628
        %v1631 = vsel %vm1527, %v1624, 0
        %v1634 = vsel %vm1564, %v1629, 0
        %1636 = vmatpush.bf16.msra.mxu0 0
        %1637 = vmatpush.bf16.msra.mxu0 0
        %1638 = vmatpush.bf16.msra.mxu0 0
        %1639 = vmatpush.bf16.msra.mxu0 0
        %1640 = vmatpush.bf16.msra.mxu0 0
        %1641 = vmatpush.bf16.msra.mxu0 0
        %1642 = vmatpush.bf16.msra.mxu0 0
        %1643 = vmatpush.bf16.msra.mxu0 %v1634
        %1644 = vmatmul.bf16.gmra.mxu0 %v1631
        %v1645 = vpop.f32.mrf.mxu0
        %v1646 = vadd.f32 0.0, %v1645
        %v1647 = vpop.f32.mrf.mxu0
        %1648 = vdwg.mxu0
        %1650 = vrot.lane.b32.xlu0 %v1646, 8
        %v1651 = vpop.permute.xlu0 %1650
        %vm1653 = vcmask 130112
        %1654 = vst.msk [vmem:[#allocation2] sm:$0xff] %vm1653, %v1651
        %1655 = vrot.lane.b32.xlu0 %v1584, 112
        %v1656 = vpop.permute.xlu0 %1655
        %1657 = vrot.lane.b32.xlu0 %v1589, 112
        %v1658 = vpop.permute.xlu0 %1657
        %v1660 = vsel %vm1527, %v1656, 0
        %v1663 = vsel %vm1527, %v1658, 0
        %1665 = vmatpush.bf16.xpose.msra.mxu0 0
        %1666 = vmatpush.bf16.xpose.msra.mxu0 0
        %1667 = vmatpush.bf16.xpose.msra.mxu0 0
        %1668 = vmatpush.bf16.xpose.msra.mxu0 0
        %1669 = vmatpush.bf16.xpose.msra.mxu0 0
        %1670 = vmatpush.bf16.xpose.msra.mxu0 0
        %1671 = vmatpush.bf16.xpose.msra.mxu0 0
        %1672 = vmatpush.bf16.xpose.msra.mxu0 %v1663
        %1673 = vmatmul.bf16.gmra.mxu0 %v1660
        %v1674 = vpop.f32.mrf.mxu0
        %v1675 = vadd.f32 0.0, %v1674
        %v1676 = vpop.f32.mrf.mxu0
        %1677 = vdwg.mxu0
        %v1678 = vmul.f32 %v1675, 0.35355338
        %v1679 = vadd.f32 %v1678, %v1310
        %v1680 = vsel %vm1527, %v1679, -inf
        %1681 = vmax.xlane.f32.xlu0 %v1680
        %v1682 = vpop.xlane.xlu0 %1681
        %v1683 = vsub.f32 %v1679, %v1682
        %v1684 = vmul.f32 %v1683, 1.442695
        %v1685 = vpow.pop %v1684
        %v1686 = vsel %vm1527, %v1685, 0.0
        %1687 = vadd.xlane.f32.xlu0 %v1686
        %v1688 = vpop.xlane.xlu0 %1687
        %v1689 = vrcp.pop %v1688
        %v1690 = vmul.f32 %v1685, %v1689
        %v1691 = vpack.c.bf16 %v1690, %v1690
        %1692 = vrot.lane.b32.xlu0 %v1627, 112
        %v1693 = vpop.permute.xlu0 %1692
        %v1695 = vsel %vm1527, %v1691, 0
        %v1698 = vsel %vm1564, %v1693, 0
        %1700 = vmatpush.bf16.msra.mxu0 0
        %1701 = vmatpush.bf16.msra.mxu0 0
        %1702 = vmatpush.bf16.msra.mxu0 0
        %1703 = vmatpush.bf16.msra.mxu0 0
        %1704 = vmatpush.bf16.msra.mxu0 0
        %1705 = vmatpush.bf16.msra.mxu0 0
        %1706 = vmatpush.bf16.msra.mxu0 0
        %1707 = vmatpush.bf16.msra.mxu0 %v1698
        %1708 = vmatmul.bf16.gmra.mxu0 %v1695
        %v1709 = vpop.f32.mrf.mxu0
        %v1710 = vadd.f32 0.0, %v1709
        %v1711 = vpop.f32.mrf.mxu0
        %1712 = vdwg.mxu0
        %1714 = vrot.lane.b32.xlu0 %v1710, 16
        %v1715 = vpop.permute.xlu0 %1714
        %vm1717 = vcmask 195712
        %1718 = vst.msk [vmem:[#allocation2] sm:$0xff] %vm1717, %v1715
        %1719 = vrot.lane.b32.xlu0 %v1584, 104
        %v1720 = vpop.permute.xlu0 %1719
        %1721 = vrot.lane.b32.xlu0 %v1589, 104
        %v1722 = vpop.permute.xlu0 %1721
        %v1724 = vsel %vm1527, %v1720, 0
        %v1727 = vsel %vm1527, %v1722, 0
        %1729 = vmatpush.bf16.xpose.msra.mxu0 0
        %1730 = vmatpush.bf16.xpose.msra.mxu0 0
        %1731 = vmatpush.bf16.xpose.msra.mxu0 0
        %1732 = vmatpush.bf16.xpose.msra.mxu0 0
        %1733 = vmatpush.bf16.xpose.msra.mxu0 0
        %1734 = vmatpush.bf16.xpose.msra.mxu0 0
        %1735 = vmatpush.bf16.xpose.msra.mxu0 0
        %1736 = vmatpush.bf16.xpose.msra.mxu0 %v1727
        %1737 = vmatmul.bf16.gmra.mxu0 %v1724
        %v1738 = vpop.f32.mrf.mxu0
        %v1739 = vadd.f32 0.0, %v1738
        %v1740 = vpop.f32.mrf.mxu0
        %1741 = vdwg.mxu0
        %v1742 = vmul.f32 %v1739, 0.35355338
        %v1743 = vadd.f32 %v1742, %v1310
        %v1744 = vsel %vm1527, %v1743, -inf
        %1745 = vmax.xlane.f32.xlu0 %v1744
        %v1746 = vpop.xlane.xlu0 %1745
        %v1747 = vsub.f32 %v1743, %v1746
        %v1748 = vmul.f32 %v1747, 1.442695
        %v1749 = vpow.pop %v1748
        %v1750 = vsel %vm1527, %v1749, 0.0
        %1751 = vadd.xlane.f32.xlu0 %v1750
        %v1752 = vpop.xlane.xlu0 %1751
        %v1753 = vrcp.pop %v1752
        %v1754 = vmul.f32 %v1749, %v1753
        %v1755 = vpack.c.bf16 %v1754, %v1754
        %1756 = vrot.lane.b32.xlu0 %v1627, 104
        %v1757 = vpop.permute.xlu0 %1756
        %v1759 = vsel %vm1527, %v1755, 0
        %v1762 = vsel %vm1564, %v1757, 0
        %1764 = vmatpush.bf16.msra.mxu0 0
        %1765 = vmatpush.bf16.msra.mxu0 0
        %1766 = vmatpush.bf16.msra.mxu0 0
        %1767 = vmatpush.bf16.msra.mxu0 0
        %1768 = vmatpush.bf16.msra.mxu0 0
        %1769 = vmatpush.bf16.msra.mxu0 0
        %1770 = vmatpush.bf16.msra.mxu0 0
        %1771 = vmatpush.bf16.msra.mxu0 %v1762
        %1772 = vmatmul.bf16.gmra.mxu0 %v1759
        %v1773 = vpop.f32.mrf.mxu0
        %v1774 = vadd.f32 0.0, %v1773
        %v1775 = vpop.f32.mrf.mxu0
        %1776 = vdwg.mxu0
        %1778 = vrot.lane.b32.xlu0 %v1774, 24
        %v1779 = vpop.permute.xlu0 %1778
        %vm1781 = vcmask 261312
        %1782 = vst.msk [vmem:[#allocation2] sm:$0xff] %vm1781, %v1779
        %v1783 = vld [vmem:[#allocation2] sm:$0xff]
        %v1784 = vpack.c.bf16 %v1783, %v1783
        %v1786 = vperm.slane %v1431, 0
        %v1792 = vunpack.c.l.b16 %v1427
        %v1793 = vunpack.c.l.b16 %v1428
        %v1794 = vunpack.c.l.b16 %v1429
        %v1795 = vunpack.c.l.b16 %v1430
        %v1796 = vpack.c.b16 %v1793, %v1792
        %v1797 = vpack.c.b16 %v1795, %v1794
        %v1801 = vsel %vm1318, %v1784, 0
        %1803 = vmatpush.bf16.msra.mxu0 0
        %1804 = vmatpush.bf16.msra.mxu0 0
        %1805 = vmatpush.bf16.msra.mxu0 0
        %1806 = vmatpush.bf16.msra.mxu0 0
        %1807 = vmatpush.bf16.msra.mxu0 0
        %1808 = vmatpush.bf16.msra.mxu0 0
        %1809 = vmatpush.bf16.msra.mxu0 %v1797
        %1810 = vmatpush.bf16.msra.mxu0 %v1796
        %1811 = vmatmul.bf16.gmra.mxu0 %v1801
        %v1812 = vpop.f32.mrf.mxu0
        %v1813 = vadd.f32 %v1786, %v1812
        %v1814 = vpop.f32.mrf.mxu0
        %1815 = vdwg.mxu0
        %v1816 = vadd.f32 %v1305, %v1813
        %v1817 = vld [vmem:[%s29] sm:$0x1]
        %v1818 = vld [vmem:[%s31] sm:$0x1]
        %v1819 = vsel %vm1318, %v1816, 0.0
        %1820 = vadd.xlane.f32.xlu0 %v1819
        %v1821 = vpop.xlane.xlu0 %1820
        %v1822 = vmul.f32 %v1821, %v1328
        %v1823 = vsub.f32 %v1816, %v1822
        %v1824 = vmul.f32 %v1823, %v1823
        %v1825 = vsel %vm1318, %v1824, 0.0
        %1826 = vadd.xlane.f32.xlu0 %v1825
        %v1827 = vpop.xlane.xlu0 %1826
        %v1828 = vmul.f32 %v1827, 0.032258064
        %v1830 = vperm.slane %v1817, 0
        %v1832 = vmul.f32 %v1830, %v1823
        %v1833 = vrsqrt.pop %v1828
        %v1834 = vmul.f32 %v1833, %v1828
        %v1835 = vmul.f32 %v1834, %v1833
        %v1836 = vmul.f32 0.5, %v1835
        %v1837 = vsub.f32 1.5, %v1836
        %v1838 = vmul.f32 %v1833, %v1837
        %v1839 = vmul.f32 %v1828, %v1838
        %vm1840 = vcmp.eq.f32.partialorder %v1828, inf
        %v1841 = vsel %vm1840, %v1828, %v1839
        %vm1842 = vcmp.eq.f32.partialorder %v1828, 0.0
        %v1843 = vand.u32 %v1828, 2147483648
        %v1844 = vsel %vm1842, %v1843, %v1841
        %v1845 = vadd.f32 %v1844, 1e-06
        %v1846 = vrcp.pop %v1845
        %v1847 = vmul.f32 %v1845, %v1846
        %v1848 = vsub.f32 1.0, %v1847
        %v1849 = vmul.f32 %v1846, %v1848
        %v1850 = vadd.f32 %v1846, %v1849
        %vm1851 = vweird.f32 %v1845
        %vm1852 = vweird.f32 %v1846
        %vm1853 = vmor %vm1851, %vm1852
        %v1854 = vsel %vm1853, %v1846, %v1850
        %v1855 = vand.u32 2147483647, %v1845
        %vm1856 = vcmp.eq.f32.partialorder %v1855, 8.507059e+37
        %v1857 = vand.u32 %v1845, 2147483648
        %v1858 = vor.u32 1.1754944e-38, %v1857
        %v1859 = vsel %vm1856, %v1858, %v1854
        %v1860 = vmul.f32 %v1832, %v1859
        %v1862 = vperm.slane %v1818, 0
        %v1864 = vadd.f32 %v1860, %v1862
        %v1865 = vld [vmem:[%s1300] sm:$0xff]
        %v1866 = vld [vmem:[#allocation12] sm:$0xf]
        %v1867 = vld [vmem:[#allocation12 + $0x4] sm:$0xf]
        %v1868 = vld [vmem:[#allocation12 + $0x8] sm:$0xf]
        %v1869 = vld [vmem:[#allocation12 + $0xc] sm:$0xf]
        %v1870 = vld [vmem:[%s35] sm:$0x1]
        %v1871 = vld [vmem:[#allocation14] sm:$0xf]
        %v1872 = vld [vmem:[#allocation14 + $0x4] sm:$0xf]
        %v1873 = vld [vmem:[#allocation14 + $0x8] sm:$0xf]
        %v1874 = vld [vmem:[#allocation14 + $0xc] sm:$0xf]
        %v1875 = vld [vmem:[%s39] sm:$0x1]
        %v1876 = vld [vmem:[#allocation15] sm:$0xf]
        %v1877 = vld [vmem:[#allocation15 + $0x4] sm:$0xf]
        %v1878 = vld [vmem:[#allocation15 + $0x8] sm:$0xf]
        %v1879 = vld [vmem:[#allocation15 + $0xc] sm:$0xf]
        %v1880 = vld [vmem:[#allocation17] sm:$0x1]
        %v1881 = vld [vmem:[#allocation18] sm:$0xf]
        %v1882 = vld [vmem:[#allocation18 + $0x4] sm:$0xf]
        %v1883 = vld [vmem:[#allocation18 + $0x8] sm:$0xf]
        %v1884 = vld [vmem:[#allocation18 + $0xc] sm:$0xf]
        %v1885 = vld [vmem:[#allocation20] sm:$0x1]
        %v1886 = vpack.c.bf16 %v1864, %v1864
        %v1888 = vperm.slane %v1870, 0
        %v1894 = vunpack.c.l.b16 %v1866
        %v1895 = vunpack.c.l.b16 %v1867
        %v1896 = vunpack.c.l.b16 %v1868
        %v1897 = vunpack.c.l.b16 %v1869
        %v1898 = vpack.c.b16 %v1895, %v1894
        %v1899 = vpack.c.b16 %v1897, %v1896
        %v1903 = vsel %vm1318, %v1886, 0
        %1905 = vmatpush.bf16.msra.mxu0 0
        %1906 = vmatpush.bf16.msra.mxu0 0
        %1907 = vmatpush.bf16.msra.mxu0 0
        %1908 = vmatpush.bf16.msra.mxu0 0
        %1909 = vmatpush.bf16.msra.mxu0 0
        %1910 = vmatpush.bf16.msra.mxu0 0
        %1911 = vmatpush.bf16.msra.mxu0 %v1899
        %1912 = vmatpush.bf16.msra.mxu0 %v1898
        %1913 = vmatmul.bf16.gmra.mxu0 %v1903
        %v1914 = vpop.f32.mrf.mxu0
        %v1915 = vadd.f32 %v1888, %v1914
        %v1916 = vpop.f32.mrf.mxu0
        %1917 = vdwg.mxu0
        %v1918 = vpack.c.bf16 %v1865, %v1865
        %v1920 = vperm.slane %v1875, 0
        %v1926 = vunpack.c.l.b16 %v1871
        %v1927 = vunpack.c.l.b16 %v1872
        %v1928 = vunpack.c.l.b16 %v1873
        %v1929 = vunpack.c.l.b16 %v1874
        %v1930 = vpack.c.b16 %v1927, %v1926
        %v1931 = vpack.c.b16 %v1929, %v1928
        %v1935 = vsel %vm1318, %v1918, 0
        %1937 = vmatpush.bf16.msra.mxu0 0
        %1938 = vmatpush.bf16.msra.mxu0 0
        %1939 = vmatpush.bf16.msra.mxu0 0
        %1940 = vmatpush.bf16.msra.mxu0 0
        %1941 = vmatpush.bf16.msra.mxu0 0
        %1942 = vmatpush.bf16.msra.mxu0 0
        %1943 = vmatpush.bf16.msra.mxu0 %v1931
        %1944 = vmatpush.bf16.msra.mxu0 %v1930
        %1945 = vmatmul.bf16.gmra.mxu0 %v1935
        %v1946 = vpop.f32.mrf.mxu0
        %v1947 = vadd.f32 %v1920, %v1946
        %v1948 = vpop.f32.mrf.mxu0
        %1949 = vdwg.mxu0
        %v1951 = vperm.slane %v1880, 0
        %v1957 = vunpack.c.l.b16 %v1876
        %v1958 = vunpack.c.l.b16 %v1877
        %v1959 = vunpack.c.l.b16 %v1878
        %v1960 = vunpack.c.l.b16 %v1879
        %v1961 = vpack.c.b16 %v1958, %v1957
        %v1962 = vpack.c.b16 %v1960, %v1959
        %1965 = vmatpush.bf16.msra.mxu0 0
        %1966 = vmatpush.bf16.msra.mxu0 0
        %1967 = vmatpush.bf16.msra.mxu0 0
        %1968 = vmatpush.bf16.msra.mxu0 0
        %1969 = vmatpush.bf16.msra.mxu0 0
        %1970 = vmatpush.bf16.msra.mxu0 0
        %1971 = vmatpush.bf16.msra.mxu0 %v1962
        %1972 = vmatpush.bf16.msra.mxu0 %v1961
        %1973 = vmatmul.bf16.gmra.mxu0 %v1935
        %v1974 = vpop.f32.mrf.mxu0
        %v1975 = vadd.f32 %v1951, %v1974
        %v1976 = vpop.f32.mrf.mxu0
        %1977 = vdwg.mxu0
        %v1978 = vpack.c.bf16 %v1915, %v1915
        %v1979 = vpack.c.bf16 %v1947, %v1947
        %v1980 = vpack.c.bf16 %v1975, %v1975
        %v1982 = vsel %vm1527, %v1978, 0
        %v1985 = vsel %vm1527, %v1979, 0
        %1987 = vmatpush.bf16.xpose.msra.mxu0 0
        %1988 = vmatpush.bf16.xpose.msra.mxu0 0
        %1989 = vmatpush.bf16.xpose.msra.mxu0 0
        %1990 = vmatpush.bf16.xpose.msra.mxu0 0
        %1991 = vmatpush.bf16.xpose.msra.mxu0 0
        %1992 = vmatpush.bf16.xpose.msra.mxu0 0
        %1993 = vmatpush.bf16.xpose.msra.mxu0 0
        %1994 = vmatpush.bf16.xpose.msra.mxu0 %v1985
        %1995 = vmatmul.bf16.gmra.mxu0 %v1982
        %v1996 = vpop.f32.mrf.mxu0
        %v1997 = vadd.f32 0.0, %v1996
        %v1998 = vpop.f32.mrf.mxu0
        %1999 = vdwg.mxu0
        %v2000 = vmul.f32 %v1997, 0.35355338
        %v2001 = vadd.f32 %v2000, %v1315
        %v2002 = vsel %vm1527, %v2001, -inf
        %2003 = vmax.xlane.f32.xlu0 %v2002
        %v2004 = vpop.xlane.xlu0 %2003
        %v2005 = vsub.f32 %v2001, %v2004
        %v2006 = vmul.f32 %v2005, 1.442695
        %v2007 = vpow.pop %v2006
        %v2008 = vsel %vm1527, %v2007, 0.0
        %2009 = vadd.xlane.f32.xlu0 %v2008
        %v2010 = vpop.xlane.xlu0 %2009
        %v2011 = vrcp.pop %v2010
        %v2012 = vmul.f32 %v2007, %v2011
        %v2013 = vpack.c.bf16 %v2012, %v2012
        %v2015 = vsel %vm1527, %v2013, 0
        %v2018 = vsel %vm1564, %v1980, 0
        %2020 = vmatpush.bf16.msra.mxu0 0
        %2021 = vmatpush.bf16.msra.mxu0 0
        %2022 = vmatpush.bf16.msra.mxu0 0
        %2023 = vmatpush.bf16.msra.mxu0 0
        %2024 = vmatpush.bf16.msra.mxu0 0
        %2025 = vmatpush.bf16.msra.mxu0 0
        %2026 = vmatpush.bf16.msra.mxu0 0
        %2027 = vmatpush.bf16.msra.mxu0 %v2018
        %2028 = vmatmul.bf16.gmra.mxu0 %v2015
        %v2029 = vpop.f32.mrf.mxu0
        %v2030 = vadd.f32 0.0, %v2029
        %v2031 = vpop.f32.mrf.mxu0
        %2032 = vdwg.mxu0
        %2033 = vst.msk [vmem:[#allocation2] sm:$0xff] %vm1527, %v2030
        %v2035 = vunpack.c.l.b16 %v1978
        %v2036 = vpack.c.b16 %v2035, %v2035
        %2037 = vrot.lane.b32.xlu0 %v2036, 120
        %v2038 = vpop.permute.xlu0 %2037
        %v2040 = vunpack.c.l.b16 %v1979
        %v2041 = vpack.c.b16 %v2040, %v2040
        %2042 = vrot.lane.b32.xlu0 %v2041, 120
        %v2043 = vpop.permute.xlu0 %2042
        %v2045 = vsel %vm1527, %v2038, 0
        %v2048 = vsel %vm1527, %v2043, 0
        %2050 = vmatpush.bf16.xpose.msra.mxu0 0
        %2051 = vmatpush.bf16.xpose.msra.mxu0 0
        %2052 = vmatpush.bf16.xpose.msra.mxu0 0
        %2053 = vmatpush.bf16.xpose.msra.mxu0 0
        %2054 = vmatpush.bf16.xpose.msra.mxu0 0
        %2055 = vmatpush.bf16.xpose.msra.mxu0 0
        %2056 = vmatpush.bf16.xpose.msra.mxu0 0
        %2057 = vmatpush.bf16.xpose.msra.mxu0 %v2048
        %2058 = vmatmul.bf16.gmra.mxu0 %v2045
        %v2059 = vpop.f32.mrf.mxu0
        %v2060 = vadd.f32 0.0, %v2059
        %v2061 = vpop.f32.mrf.mxu0
        %2062 = vdwg.mxu0
        %v2063 = vmul.f32 %v2060, 0.35355338
        %v2064 = vadd.f32 %v2063, %v1315
        %v2065 = vsel %vm1527, %v2064, -inf
        %2066 = vmax.xlane.f32.xlu0 %v2065
        %v2067 = vpop.xlane.xlu0 %2066
        %v2068 = vsub.f32 %v2064, %v2067
        %v2069 = vmul.f32 %v2068, 1.442695
        %v2070 = vpow.pop %v2069
        %v2071 = vsel %vm1527, %v2070, 0.0
        %2072 = vadd.xlane.f32.xlu0 %v2071
        %v2073 = vpop.xlane.xlu0 %2072
        %v2074 = vrcp.pop %v2073
        %v2075 = vmul.f32 %v2070, %v2074
        %v2076 = vpack.c.bf16 %v2075, %v2075
        %v2078 = vunpack.c.l.b16 %v1980
        %v2079 = vpack.c.b16 %v2078, %v2078
        %2080 = vrot.lane.b32.xlu0 %v2079, 120
        %v2081 = vpop.permute.xlu0 %2080
        %v2083 = vsel %vm1527, %v2076, 0
        %v2086 = vsel %vm1564, %v2081, 0
        %2088 = vmatpush.bf16.msra.mxu0 0
        %2089 = vmatpush.bf16.msra.mxu0 0
        %2090 = vmatpush.bf16.msra.mxu0 0
        %2091 = vmatpush.bf16.msra.mxu0 0
        %2092 = vmatpush.bf16.msra.mxu0 0
        %2093 = vmatpush.bf16.msra.mxu0 0
        %2094 = vmatpush.bf16.msra.mxu0 0
        %2095 = vmatpush.bf16.msra.mxu0 %v2086
        %2096 = vmatmul.bf16.gmra.mxu0 %v2083
        %v2097 = vpop.f32.mrf.mxu0
        %v2098 = vadd.f32 0.0, %v2097
        %v2099 = vpop.f32.mrf.mxu0
        %2100 = vdwg.mxu0
        %2102 = vrot.lane.b32.xlu0 %v2098, 8
        %v2103 = vpop.permute.xlu0 %2102
        %2105 = vst.msk [vmem:[#allocation2] sm:$0xff] %vm1653, %v2103
        %2106 = vrot.lane.b32.xlu0 %v2036, 112
        %v2107 = vpop.permute.xlu0 %2106
        %2108 = vrot.lane.b32.xlu0 %v2041, 112
        %v2109 = vpop.permute.xlu0 %2108
        %v2111 = vsel %vm1527, %v2107, 0
        %v2114 = vsel %vm1527, %v2109, 0
        %2116 = vmatpush.bf16.xpose.msra.mxu0 0
        %2117 = vmatpush.bf16.xpose.msra.mxu0 0
        %2118 = vmatpush.bf16.xpose.msra.mxu0 0
        %2119 = vmatpush.bf16.xpose.msra.mxu0 0
        %2120 = vmatpush.bf16.xpose.msra.mxu0 0
        %2121 = vmatpush.bf16.xpose.msra.mxu0 0
        %2122 = vmatpush.bf16.xpose.msra.mxu0 0
        %2123 = vmatpush.bf16.xpose.msra.mxu0 %v2114
        %2124 = vmatmul.bf16.gmra.mxu0 %v2111
        %v2125 = vpop.f32.mrf.mxu0
        %v2126 = vadd.f32 0.0, %v2125
        %v2127 = vpop.f32.mrf.mxu0
        %2128 = vdwg.mxu0
        %v2129 = vmul.f32 %v2126, 0.35355338
        %v2130 = vadd.f32 %v2129, %v1315
        %v2131 = vsel %vm1527, %v2130, -inf
        %2132 = vmax.xlane.f32.xlu0 %v2131
        %v2133 = vpop.xlane.xlu0 %2132
        %v2134 = vsub.f32 %v2130, %v2133
        %v2135 = vmul.f32 %v2134, 1.442695
        %v2136 = vpow.pop %v2135
        %v2137 = vsel %vm1527, %v2136, 0.0
        %2138 = vadd.xlane.f32.xlu0 %v2137
        %v2139 = vpop.xlane.xlu0 %2138
        %v2140 = vrcp.pop %v2139
        %v2141 = vmul.f32 %v2136, %v2140
        %v2142 = vpack.c.bf16 %v2141, %v2141
        %2143 = vrot.lane.b32.xlu0 %v2079, 112
        %v2144 = vpop.permute.xlu0 %2143
        %v2146 = vsel %vm1527, %v2142, 0
        %v2149 = vsel %vm1564, %v2144, 0
        %2151 = vmatpush.bf16.msra.mxu0 0
        %2152 = vmatpush.bf16.msra.mxu0 0
        %2153 = vmatpush.bf16.msra.mxu0 0
        %2154 = vmatpush.bf16.msra.mxu0 0
        %2155 = vmatpush.bf16.msra.mxu0 0
        %2156 = vmatpush.bf16.msra.mxu0 0
        %2157 = vmatpush.bf16.msra.mxu0 0
        %2158 = vmatpush.bf16.msra.mxu0 %v2149
        %2159 = vmatmul.bf16.gmra.mxu0 %v2146
        %v2160 = vpop.f32.mrf.mxu0
        %v2161 = vadd.f32 0.0, %v2160
        %v2162 = vpop.f32.mrf.mxu0
        %2163 = vdwg.mxu0
        %2165 = vrot.lane.b32.xlu0 %v2161, 16
        %v2166 = vpop.permute.xlu0 %2165
        %2168 = vst.msk [vmem:[#allocation2] sm:$0xff] %vm1717, %v2166
        %2169 = vrot.lane.b32.xlu0 %v2036, 104
        %v2170 = vpop.permute.xlu0 %2169
        %2171 = vrot.lane.b32.xlu0 %v2041, 104
        %v2172 = vpop.permute.xlu0 %2171
        %v2174 = vsel %vm1527, %v2170, 0
        %v2177 = vsel %vm1527, %v2172, 0
        %2179 = vmatpush.bf16.xpose.msra.mxu0 0
        %2180 = vmatpush.bf16.xpose.msra.mxu0 0
        %2181 = vmatpush.bf16.xpose.msra.mxu0 0
        %2182 = vmatpush.bf16.xpose.msra.mxu0 0
        %2183 = vmatpush.bf16.xpose.msra.mxu0 0
        %2184 = vmatpush.bf16.xpose.msra.mxu0 0
        %2185 = vmatpush.bf16.xpose.msra.mxu0 0
        %2186 = vmatpush.bf16.xpose.msra.mxu0 %v2177
        %2187 = vmatmul.bf16.gmra.mxu0 %v2174
        %v2188 = vpop.f32.mrf.mxu0
        %v2189 = vadd.f32 0.0, %v2188
        %v2190 = vpop.f32.mrf.mxu0
        %2191 = vdwg.mxu0
        %v2192 = vmul.f32 %v2189, 0.35355338
        %v2193 = vadd.f32 %v2192, %v1315
        %v2194 = vsel %vm1527, %v2193, -inf
        %2195 = vmax.xlane.f32.xlu0 %v2194
        %v2196 = vpop.xlane.xlu0 %2195
        %v2197 = vsub.f32 %v2193, %v2196
        %v2198 = vmul.f32 %v2197, 1.442695
        %v2199 = vpow.pop %v2198
        %v2200 = vsel %vm1527, %v2199, 0.0
        %2201 = vadd.xlane.f32.xlu0 %v2200
        %v2202 = vpop.xlane.xlu0 %2201
        %v2203 = vrcp.pop %v2202
        %v2204 = vmul.f32 %v2199, %v2203
        %v2205 = vpack.c.bf16 %v2204, %v2204
        %2206 = vrot.lane.b32.xlu0 %v2079, 104
        %v2207 = vpop.permute.xlu0 %2206
        %v2209 = vsel %vm1527, %v2205, 0
        %v2212 = vsel %vm1564, %v2207, 0
        %2214 = vmatpush.bf16.msra.mxu0 0
        %2215 = vmatpush.bf16.msra.mxu0 0
        %2216 = vmatpush.bf16.msra.mxu0 0
        %2217 = vmatpush.bf16.msra.mxu0 0
        %2218 = vmatpush.bf16.msra.mxu0 0
        %2219 = vmatpush.bf16.msra.mxu0 0
        %2220 = vmatpush.bf16.msra.mxu0 0
        %2221 = vmatpush.bf16.msra.mxu0 %v2212
        %2222 = vmatmul.bf16.gmra.mxu0 %v2209
        %v2223 = vpop.f32.mrf.mxu0
        %v2224 = vadd.f32 0.0, %v2223
        %v2225 = vpop.f32.mrf.mxu0
        %2226 = vdwg.mxu0
        %2228 = vrot.lane.b32.xlu0 %v2224, 24
        %v2229 = vpop.permute.xlu0 %2228
        %2231 = vst.msk [vmem:[#allocation2] sm:$0xff] %vm1781, %v2229
        %v2232 = vld [vmem:[#allocation2] sm:$0xff]
        %v2233 = vpack.c.bf16 %v2232, %v2232
        %v2235 = vperm.slane %v1885, 0
        %v2241 = vunpack.c.l.b16 %v1881
        %v2242 = vunpack.c.l.b16 %v1882
        %v2243 = vunpack.c.l.b16 %v1883
        %v2244 = vunpack.c.l.b16 %v1884
        %v2245 = vpack.c.b16 %v2242, %v2241
        %v2246 = vpack.c.b16 %v2244, %v2243
        %v2250 = vsel %vm1318, %v2233, 0
        %2252 = vmatpush.bf16.msra.mxu0 0
        %2253 = vmatpush.bf16.msra.mxu0 0
        %2254 = vmatpush.bf16.msra.mxu0 0
        %2255 = vmatpush.bf16.msra.mxu0 0
        %2256 = vmatpush.bf16.msra.mxu0 0
        %2257 = vmatpush.bf16.msra.mxu0 0
        %2258 = vmatpush.bf16.msra.mxu0 %v2246
        %2259 = vmatpush.bf16.msra.mxu0 %v2245
        %2260 = vmatmul.bf16.gmra.mxu0 %v2250
        %v2261 = vpop.f32.mrf.mxu0
        %v2262 = vadd.f32 %v2235, %v2261
        %v2263 = vpop.f32.mrf.mxu0
        %2264 = vdwg.mxu0
        %v2265 = vadd.f32 %v1816, %v2262
        %v2266 = vld [vmem:[#allocation21] sm:$0x1]
        %v2267 = vld [vmem:[#allocation23] sm:$0x1]
        %v2268 = vsel %vm1318, %v2265, 0.0
        %2269 = vadd.xlane.f32.xlu0 %v2268
        %v2270 = vpop.xlane.xlu0 %2269
        %v2271 = vmul.f32 %v2270, %v1328
        %v2272 = vsub.f32 %v2265, %v2271
        %v2273 = vmul.f32 %v2272, %v2272
        %v2274 = vsel %vm1318, %v2273, 0.0
        %2275 = vadd.xlane.f32.xlu0 %v2274
        %v2276 = vpop.xlane.xlu0 %2275
        %v2277 = vmul.f32 %v2276, 0.032258064
        %v2279 = vperm.slane %v2266, 0
        %v2281 = vmul.f32 %v2279, %v2272
        %v2282 = vrsqrt.pop %v2277
        %v2283 = vmul.f32 %v2282, %v2277
        %v2284 = vmul.f32 %v2283, %v2282
        %v2285 = vmul.f32 0.5, %v2284
        %v2286 = vsub.f32 1.5, %v2285
        %v2287 = vmul.f32 %v2282, %v2286
        %v2288 = vmul.f32 %v2277, %v2287
        %vm2289 = vcmp.eq.f32.partialorder %v2277, inf
        %v2290 = vsel %vm2289, %v2277, %v2288
        %vm2291 = vcmp.eq.f32.partialorder %v2277, 0.0
        %v2292 = vand.u32 %v2277, 2147483648
        %v2293 = vsel %vm2291, %v2292, %v2290
        %v2294 = vadd.f32 %v2293, 1e-06
        %v2295 = vrcp.pop %v2294
        %v2296 = vmul.f32 %v2294, %v2295
        %v2297 = vsub.f32 1.0, %v2296
        %v2298 = vmul.f32 %v2295, %v2297
        %v2299 = vadd.f32 %v2295, %v2298
        %vm2300 = vweird.f32 %v2294
        %vm2301 = vweird.f32 %v2295
        %vm2302 = vmor %vm2300, %vm2301
        %v2303 = vsel %vm2302, %v2295, %v2299
        %v2304 = vand.u32 2147483647, %v2294
        %vm2305 = vcmp.eq.f32.partialorder %v2304, 8.507059e+37
        %v2306 = vand.u32 %v2294, 2147483648
        %v2307 = vor.u32 1.1754944e-38, %v2306
        %v2308 = vsel %vm2305, %v2307, %v2303
        %v2309 = vmul.f32 %v2281, %v2308
        %v2311 = vperm.slane %v2267, 0
        %v2313 = vadd.f32 %v2309, %v2311
        %v2314 = vpack.c.bf16 %v2313, %v2313
        %v2315 = vld [vmem:[#allocation24] sm:$0xf]
        %v2316 = vld [vmem:[#allocation24 + $0x4] sm:$0xf]
        %v2317 = vld [vmem:[#allocation24 + $0x8] sm:$0xf]
        %v2318 = vld [vmem:[#allocation24 + $0xc] sm:$0xf]
        %v2319 = vld [vmem:[#allocation26] sm:$0x1]
        %v2321 = vperm.slane %v2319, 0
        %v2327 = vunpack.c.l.b16 %v2315
        %v2328 = vunpack.c.l.b16 %v2316
        %v2329 = vunpack.c.l.b16 %v2317
        %v2330 = vunpack.c.l.b16 %v2318
        %v2331 = vpack.c.b16 %v2328, %v2327
        %v2332 = vpack.c.b16 %v2330, %v2329
        %v2336 = vsel %vm1318, %v2314, 0
        %2338 = vmatpush.bf16.msra.mxu0 0
        %2339 = vmatpush.bf16.msra.mxu0 0
        %2340 = vmatpush.bf16.msra.mxu0 0
        %2341 = vmatpush.bf16.msra.mxu0 0
        %2342 = vmatpush.bf16.msra.mxu0 0
        %2343 = vmatpush.bf16.msra.mxu0 0
        %2344 = vmatpush.bf16.msra.mxu0 %v2332
        %2345 = vmatpush.bf16.msra.mxu0 %v2331
        %2346 = vmatmul.bf16.gmra.mxu0 %v2336
        %v2347 = vpop.f32.mrf.mxu0
        %v2348 = vadd.f32 %v2321, %v2347
        %v2349 = vpop.f32.mrf.mxu0
        %2350 = vdwg.mxu0
        %v2351 = vmax.f32 %v2348, 0.0
        %v2352 = vpack.c.bf16 %v2351, %v2351
        %v2353 = vld [vmem:[%s57] sm:$0xf]
        %v2354 = vld [vmem:[%s57 + $0x4] sm:$0xf]
        %v2355 = vld [vmem:[%s57 + $0x8] sm:$0xf]
        %v2356 = vld [vmem:[%s57 + $0xc] sm:$0xf]
        %v2357 = vld [vmem:[%s57 + $0x10] sm:$0xf]
        %v2358 = vld [vmem:[%s57 + $0x14] sm:$0xf]
        %v2359 = vld [vmem:[%s57 + $0x18] sm:$0xf]
        %v2360 = vld [vmem:[%s57 + $0x1c] sm:$0xf]
        %v2361 = vld [vmem:[%s59] sm:$0x1]
        %v2363 = vperm.slane %v2361, 0
        %v2373 = vunpack.c.l.b16 %v2353
        %v2374 = vunpack.c.l.b16 %v2354
        %v2375 = vunpack.c.l.b16 %v2355
        %v2376 = vunpack.c.l.b16 %v2356
        %v2377 = vunpack.c.l.b16 %v2357
        %v2378 = vunpack.c.l.b16 %v2358
        %v2379 = vunpack.c.l.b16 %v2359
        %v2380 = vunpack.c.l.b16 %v2360
        %v2381 = vpack.c.b16 %v2374, %v2373
        %v2382 = vpack.c.b16 %v2376, %v2375
        %v2383 = vpack.c.b16 %v2378, %v2377
        %v2384 = vpack.c.b16 %v2380, %v2379
        %vm2389 = vcmask 523264
        %v2391 = vsel %vm2389, %v2352, 0
        %2393 = vmatpush.bf16.msra.mxu0 0
        %2394 = vmatpush.bf16.msra.mxu0 0
        %2395 = vmatpush.bf16.msra.mxu0 0
        %2396 = vmatpush.bf16.msra.mxu0 0
        %2397 = vmatpush.bf16.msra.mxu0 %v2384
        %2398 = vmatpush.bf16.msra.mxu0 %v2383
        %2399 = vmatpush.bf16.msra.mxu0 %v2382
        %2400 = vmatpush.bf16.msra.mxu0 %v2381
        %2401 = vmatmul.bf16.gmra.mxu0 %v2391
        %v2402 = vpop.f32.mrf.mxu0
        %v2403 = vadd.f32 %v2363, %v2402
        %v2404 = vpop.f32.mrf.mxu0
        %2405 = vdwg.mxu0
        %v2406 = vadd.f32 %v2265, %v2403
        %2407 = vst.msk [vmem:[%s1292] sm:$0xff] %vm1318, %v2406
        %s2408 = sand.u32 %s809, 1
        %s2409 = scalar_lea.sflag [#allocation5], %s2408
        %s2410 = sand.u32 %s809, 1
        %s2411 = smul.addr %s2410, 8
        %s2412 = scalar_lea.vmem [#allocation27], %s2411
        // Predicated region
        $region209: #{tpu_custom_call.1} parent=147 // pred_check
          %p2413 = pneg %p819
        $region210: #{tpu_custom_call.1} parent=147 // pred_check_branch
          %2415 = sbr.rel (%p2413) target = $region212
        $region211: #{tpu_custom_call.1} parent=147 // pred_region
          %2417 = vsyncadd %s2409, 0
          %s2418 = sadd.s32 %s96, %s95
          %s2419 = smul.addr %s2418, 8
          %s2420 = scalar_lea.hbm %s65, %s2419
          %s2422 = sshll.u32 %s2412, 4
          %s2423 = int_to_ptr.vmem [resolvable:$true] %s2422
          %s2424 = sshll.u32 %s2420, 4
          %s2425 = int_to_ptr.hbm [resolvable:$true] %s2424
          %2427 = dma.vmem_to_hbm [thread:$0]  %s2423, 128, %s2425, %s2409
        $region212: #{tpu_custom_call.1} parent=147 // pred_fallthru
          _
      $region148: #{tpu_custom_call.1} parent=5 // pred_fallthru
        _
      %p2428 = scmp.le.s32.totalorder 2, %s86
      // Predicated region
      $region213: #{tpu_custom_call.1} parent=5 // pred_check
        %p2429 = pneg %p2428
      $region214: #{tpu_custom_call.1} parent=5 // pred_check_branch
        %2431 = sbr.rel (%p2429) target = $region216
      $region215: #{tpu_custom_call.1} parent=5 // pred_region
        %s2432 = ssub.s32 %s86, 2
        // Predicated region
        $region217: #{tpu_custom_call.1} parent=215 // pred_check
          %p2433 = pneg %p825
        $region218: #{tpu_custom_call.1} parent=215 // pred_check_branch
          %2435 = sbr.rel (%p2433) target = $region220
        $region219: #{tpu_custom_call.1} parent=215 // pred_region
          %s2436 = sand.u32 %s810, 1
          %s2437 = scalar_lea.sflag [#allocation5], %s2436
          %s2438 = sand.u32 %s810, 1
          %s2439 = smul.addr %s2438, 8
          %s2440 = scalar_lea.vmem [#allocation27], %s2439
          %2442 = dma.done %s2437, 128
        $region220: #{tpu_custom_call.1} parent=215 // pred_fallthru
          _
      $region216: #{tpu_custom_call.1} parent=5 // pred_fallthru
        _
    $region6: #{tpu_custom_call.1} parent=1 // loop_footer
      %s90 = sadd.s32 1, %s86
    $region7: #{tpu_custom_call.1} parent=1 // loop_footer_branch
      %85 = sbr.rel target = $region3
    $region8: #{tpu_custom_call.1} parent=1 // loop_exit
      _
    %2443 = vsyncpa [#allocation4], 1
    %s2444 = scalar_lea.sflag [#allocation4], 1
    %2445 = vsyncpa %s2444, 1
    %2446 = vsyncpa [#allocation7], 1
    %s2447 = scalar_lea.sflag [#allocation7], 1
    %2448 = vsyncpa %s2447, 1
    %2449 = vsyncpa [#allocation10], 1
    %2450 = vsyncpa [#allocation13], 1
    %2451 = vsyncpa [#allocation16], 1
    %2452 = vsyncpa [#allocation19], 1
    %2453 = vsyncpa [#allocation22], 1
    %2454 = vsyncpa [#allocation25], 1
    %2455 = vsyncpa [#allocation5], 1
    %s2456 = scalar_lea.sflag [#allocation5], 1
    %2457 = vsyncpa %s2456, 1

</llo_original>
